<compile_context>
chip_gen: v7x
topology: tpu7x:2x2x1
jax: 0.10.0
libtpu: 0.0.40
codegen_flags: <defaults>
</compile_context>

<pallas_src>
import functools

import jax
import jax.numpy as jnp
import numpy as np
from jax.experimental import pallas as pl
from jax.experimental.pallas import tpu as pltpu

EPS = 1e-5
NEG_SLOPE = 0.1
LANE = 128


def _round_up(n, m):
    return ((n + m - 1) // m) * m


def _leaky_relu(x):
    return jnp.where(x >= 0, x, NEG_SLOPE * x)


def _batchnorm(x, gamma, beta):
    """Training-mode BN over axis 0 (= N*H*W), biased variance.

    Single-pass statistics (sum and sum-of-squares in one traversal) followed
    by one normalize pass.  var = E[x^2] - mu^2 is clamped at 0 to guard
    against cancellation; validated against the centered f32 reference.
    """
    inv_m = 1.0 / x.shape[0]
    mu = jnp.sum(x, axis=0, keepdims=True) * inv_m
    ex2 = jnp.sum(x * x, axis=0, keepdims=True) * inv_m
    var = jnp.maximum(ex2 - mu * mu, 0.0)
    scale = jax.lax.rsqrt(var + EPS) * gamma
    return x * scale + (beta - mu * scale)


def resblocks_kernel(x_hbm, w1_ref, g1_ref, b1_ref, w2_ref, g2_ref, b2_ref,
                     o_ref, pad_ref):
    """One grid step == one ResidualBlock applied to the resident activation."""
    k = pl.program_id(0)

    @pl.when(k == 0)
    def _():
        # Seed the VMEM-resident output block straight from HBM; x is a
        # memory_space=pl.ANY input so no full-size (double-buffered) input
        # block is allocated in VMEM for the whole grid.
        pltpu.sync_copy(x_hbm, o_ref)
        # Zero the padded conv buffer once; only the halo must stay zero and
        # it is never written again -- the interior is overwritten each block.
        pad_ref[...] = jnp.zeros(pad_ref.shape, pad_ref.dtype)

    N, H, W, C = o_ref.shape
    Cr = w1_ref.shape[-1]
    M = N * H * W

    # ---- conv1: 1x1 conv == one matmul (bf16 operands, f32 accumulation) ---
    # Read the activation only for this matmul; the residual re-reads o_ref at
    # the end, so no full (M, C) f32 value stays live across conv2 / the BNs.
    t = jnp.dot(o_ref[...].reshape(M, C).astype(jnp.bfloat16), w1_ref[0],
                preferred_element_type=jnp.float32)            # (M, Cr) f32
    t = _leaky_relu(_batchnorm(t, g1_ref[0], b1_ref[0]))

    # ---- conv2: 3x3 conv, padding=1 -----------------------------------------
    # Interior store only; halo rows/cols keep their k==0 zeros.
    pad_ref[:, 1:H + 1, 1:W + 1, :] = t.reshape(N, H, W, Cr)

    # Width-only im2col: concatenate the kw = 0/1/2 shifts along channels so
    # the 3x3 conv becomes 3 matmuls with K = 3*Cr.  Each slice is cast to
    # bf16 *before* the concat, so the im2col temp is bf16 only.
    wide = jnp.concatenate(
        [pad_ref[:, :, 0:W, :].astype(jnp.bfloat16),
         pad_ref[:, :, 1:W + 1, :].astype(jnp.bfloat16),
         pad_ref[:, :, 2:W + 2, :].astype(jnp.bfloat16)],
        axis=-1)                                               # (N, H+2, W, 3*Cr)

    acc = jnp.dot(wide[:, 0:H].reshape(M, 3 * Cr), w2_ref[0, 0],
                  preferred_element_type=jnp.float32)
    acc = acc + jnp.dot(wide[:, 1:H + 1].reshape(M, 3 * Cr), w2_ref[0, 1],
                        preferred_element_type=jnp.float32)
    acc = acc + jnp.dot(wide[:, 2:H + 2].reshape(M, 3 * Cr), w2_ref[0, 2],
                        preferred_element_type=jnp.float32)

    out = _leaky_relu(_batchnorm(acc, g2_ref[0], b2_ref[0]))

    # ---- residual add; result stays resident in o_ref for the next block ---
    o_ref[...] = o_ref[...] + out.reshape(N, H, W, C)


def _vmem_limit_bytes():
    """Per-generation VMEM budget: ~3/4 of physical, capped at 100 MiB.
    v7x (64 MiB/core) -> ~48 MiB; v5e/v6e (128 MiB) -> ~96 MiB."""
    try:
        cap = int(pltpu.get_tpu_info().vmem_capacity_bytes)
    except Exception:
        cap = 64 * 1024 * 1024          # conservative fallback (v7x per-core)
    return int(min(cap - cap // 4, 100 * 1024 * 1024))


def residual_blocks_forward(x_nchw, params):
    """x_nchw: (N, C, H, W) float32.  params: stacked per-block weights (f32)."""
    x = jnp.transpose(x_nchw, (0, 2, 3, 1)).astype(jnp.float32)   # -> NHWC
    N, H, W, C = x.shape
    L, _, Cr = params["w1"].shape

    # Lane-dense channel padding: pad C and Cr up to a multiple of 128.  The
    # padded weight rows/cols and BN params are zero, so padded channels stay
    # exactly 0, never influence the real channels, and are sliced off below.
    Cp = _round_up(C, LANE)
    Crp = _round_up(Cr, LANE)

    x_p = jnp.pad(x, ((0, 0), (0, 0), (0, 0), (0, Cp - C)))

    # bf16 matmul operands: MXU-native on v5e/v6e/v7x, half the weight DMA.
    # conv1 weight: (L, C, Cr) -> (L, Cp, Crp)
    w1 = jnp.pad(params["w1"],
                 ((0, 0), (0, Cp - C), (0, Crp - Cr))).astype(jnp.bfloat16)
    # conv2 weight: (L, 9 = kh*3+kw, Cr, C) -> (L, 3 = kh, 3*Crp (kw-major), Cp),
    # matching the kernel's width-im2col channel order j = kw*Crp + r.
    w2 = jnp.pad(params["w2"],
                 ((0, 0), (0, 0), (0, Crp - Cr), (0, Cp - C)))
    w2 = w2.astype(jnp.bfloat16).reshape(L, 3, 3, Crp, Cp).reshape(
        L, 3, 3 * Crp, Cp)
    g1 = jnp.pad(params["g1"], ((0, 0), (0, 0), (0, Crp - Cr)))
    b1 = jnp.pad(params["b1"], ((0, 0), (0, 0), (0, Crp - Cr)))
    g2 = jnp.pad(params["g2"], ((0, 0), (0, 0), (0, Cp - C)))
    b2 = jnp.pad(params["b2"], ((0, 0), (0, 0), (0, Cp - C)))

    out_nhwc = pl.pallas_call(
        resblocks_kernel,
        out_shape=jax.ShapeDtypeStruct((N, H, W, Cp), jnp.float32),
        grid_spec=pltpu.PrefetchScalarGridSpec(
            num_scalar_prefetch=0,
            grid=(L,),
            in_specs=[
                pl.BlockSpec(memory_space=pl.ANY),                          # x (HBM)
                pl.BlockSpec((1, Cp, Crp), lambda k: (k, 0, 0)),            # w1
                pl.BlockSpec((1, 1, Crp), lambda k: (k, 0, 0)),             # gamma1
                pl.BlockSpec((1, 1, Crp), lambda k: (k, 0, 0)),             # beta1
                pl.BlockSpec((1, 3, 3 * Crp, Cp), lambda k: (k, 0, 0, 0)),  # w2
                pl.BlockSpec((1, 1, Cp), lambda k: (k, 0, 0)),              # gamma2
                pl.BlockSpec((1, 1, Cp), lambda k: (k, 0, 0)),              # beta2
            ],
            # Constant index_map: the output block stays VMEM-resident across
            # the sequential grid and is written back to HBM once at the end.
            out_specs=pl.BlockSpec((N, H, W, Cp), lambda k: (0, 0, 0, 0)),
            scratch_shapes=[
                pltpu.VMEM((N, H + 2, W + 2, Crp), jnp.float32),  # padded conv1 out
            ],
        ),
        compiler_params=pltpu.CompilerParams(
            dimension_semantics=("arbitrary",),
            vmem_limit_bytes=_vmem_limit_bytes()),
    )(x_p, w1, g1, b1, w2, g2, b2)

    return jnp.transpose(out_nhwc[..., :C], (0, 3, 1, 2))        # -> NCHW


# ----------------------- pure-JAX reference (for checking) ------------------
def reference_forward(x_nchw, params, matmul_dtype=jnp.float32):
    """matmul_dtype=f32  -> faithful f32 (PyTorch-like) forward.
       matmul_dtype=bf16 -> same bf16 operand rounding as the kernel."""
    hi = jax.lax.Precision.HIGHEST
    y = jnp.transpose(x_nchw, (0, 2, 3, 1)).astype(jnp.float32)
    L, _, Cr = params["w1"].shape

    def bn(v, g, b):
        mu = v.mean(axis=(0, 1, 2))
        var = ((v - mu) ** 2).mean(axis=(0, 1, 2))
        return (v - mu) * jax.lax.rsqrt(var + EPS) * g + b

    for l in range(L):
        N, H, W, C = y.shape
        w1 = params["w1"][l].astype(matmul_dtype)
        w2 = params["w2"][l].astype(matmul_dtype)
        t = jnp.einsum("nhwc,cr->nhwr", y.astype(matmul_dtype), w1,
                       precision=hi, preferred_element_type=jnp.float32)
        t = _leaky_relu(bn(t, params["g1"][l, 0], params["b1"][l, 0]))
        tp = jnp.pad(t, ((0, 0), (1, 1), (1, 1), (0, 0))).astype(matmul_dtype)
        acc = jnp.zeros((N, H, W, C), jnp.float32)
        for kh in range(3):
            for kw in range(3):
                acc = acc + jnp.einsum("nhwr,rc->nhwc",
                                       tp[:, kh:kh + H, kw:kw + W, :],
                                       w2[kh * 3 + kw], precision=hi,
                                       preferred_element_type=jnp.float32)
        o = _leaky_relu(bn(acc, params["g2"][l, 0], params["b2"][l, 0]))
        y = y + o
    return jnp.transpose(y, (0, 3, 1, 2))


def init_params(key, in_channel, num_blocks):
    C = in_channel
    Cr = max(1, C // 2)
    L = num_blocks
    ks = jax.random.split(key, 6)
    return {
        # conv1 weight: torch (Cr, C, 1, 1) -> stored as (C, Cr) matmul weight
        "w1": jax.random.normal(ks[0], (L, C, Cr), jnp.float32) * 0.3,
        # conv2 weight: torch (C, Cr, 3, 3) -> stored as (9=kh*3+kw, Cr, C)
        "w2": jax.random.normal(ks[1], (L, 9, Cr, C), jnp.float32) * 0.3,
        "g1": 1.0 + 0.1 * jax.random.normal(ks[2], (L, 1, Cr), jnp.float32),
        "b1": 0.1 * jax.random.normal(ks[3], (L, 1, Cr), jnp.float32),
        "g2": 1.0 + 0.1 * jax.random.normal(ks[4], (L, 1, C), jnp.float32),
        "b2": 0.1 * jax.random.normal(ks[5], (L, 1, C), jnp.float32),
    }


if __name__ == "__main__":
    key = jax.random.PRNGKey(0)
    k_x, k_p = jax.random.split(key)

    N, C, H, W = 2, 4, 16, 16       # small NCHW input, matches module usage
    num_blocks = 2

    x = jax.random.normal(k_x, (N, C, H, W), jnp.float32)
    params = init_params(k_p, C, num_blocks)

    fwd = jax.jit(functools.partial(residual_blocks_forward, params=params))
    y = fwd(x)
    jax.block_until_ready(y)
    assert y.shape == x.shape, (y.shape, x.shape)

    # Structural check: reference with the same bf16 matmul-operand rounding.
    y_ref_bf16 = reference_forward(x, params, matmul_dtype=jnp.bfloat16)
    np.testing.assert_allclose(np.asarray(y), np.asarray(y_ref_bf16),
                               rtol=2e-3, atol=2e-3)

    # Semantic sanity check against the full-f32 (PyTorch-like) forward.
    y_ref_f32 = reference_forward(x, params, matmul_dtype=jnp.float32)
    np.testing.assert_allclose(np.asarray(y), np.asarray(y_ref_f32),
                               rtol=5e-2, atol=5e-2)

    print("KERNEL_OK")
</pallas_src>

<mosaic_0001>
module attributes {stable_mosaic.version = 11 : i64} {
  func.func @resblocks_kernel(%arg0: i32, %arg1: memref<2x16x16x128xf32, #tpu.memory_space<any>>, %arg2: memref<1x128x128xbf16, #tpu.memory_space<vmem>>, %arg3: memref<1x1x128xf32, #tpu.memory_space<vmem>>, %arg4: memref<1x1x128xf32, #tpu.memory_space<vmem>>, %arg5: memref<1x3x384x128xbf16, #tpu.memory_space<vmem>>, %arg6: memref<1x1x128xf32, #tpu.memory_space<vmem>>, %arg7: memref<1x1x128xf32, #tpu.memory_space<vmem>>, %arg8: memref<2x16x16x128xf32, #tpu.memory_space<vmem>>, %arg9: memref<2x18x18x128xf32, #tpu.memory_space<vmem>>) attributes {dimension_semantics = [#tpu.dimension_semantics<arbitrary>], iteration_bounds = array<i64: 2>, scalar_prefetch = 0 : i64, scratch_operands = 1 : i64, tpu.core_type = #tpu.core_type<tc>, window_params = [{}, {transform_indices = @transform_1, window_bounds = array<i64: 1, 128, 128>}, {transform_indices = @transform_2, window_bounds = array<i64: 1, 1, 128>}, {transform_indices = @transform_3, window_bounds = array<i64: 1, 1, 128>}, {transform_indices = @transform_4, window_bounds = array<i64: 1, 3, 384, 128>}, {transform_indices = @transform_5, window_bounds = array<i64: 1, 1, 128>}, {transform_indices = @transform_6, window_bounds = array<i64: 1, 1, 128>}, {pipeline_mode = #tpu.pipeline_mode<synchronous>, transform_indices = @transform_7, window_bounds = array<i64: 2, 16, 16, 128>}]} {
    %c0_i32 = arith.constant 0 : i32
    %0 = arith.cmpi eq, %arg0, %c0_i32 : i32
    %1 = arith.extui %0 : i1 to i32
    %c0_i32_0 = arith.constant 0 : i32
    %2 = arith.cmpi ne, %1, %c0_i32_0 : i32
    scf.if %2 {
      "tpu.region"() ({
        %105 = tpu.sem_alloc : memref<!tpu.dma_semaphore, #tpu.memory_space<semaphore_mem>>
        tpu.enqueue_dma source(%arg1 : memref<2x16x16x128xf32, #tpu.memory_space<any>>) target(%arg8 : memref<2x16x16x128xf32, #tpu.memory_space<vmem>>) target_semaphore(%105 : memref<!tpu.dma_semaphore, #tpu.memory_space<semaphore_mem>>)
        tpu.wait_dma2 semaphore(%105 : memref<!tpu.dma_semaphore, #tpu.memory_space<semaphore_mem>>) src(%arg1 : memref<2x16x16x128xf32, #tpu.memory_space<any>>) dst(%arg8 : memref<2x16x16x128xf32, #tpu.memory_space<vmem>>)
        tpu.yield
      }) : () -> ()
      %cst_72 = arith.constant 0.000000e+00 : f32
      %103 = vector.broadcast %cst_72 : f32 to vector<2x18x18x128xf32>
      %c0_73 = arith.constant 0 : index
      %c0_74 = arith.constant 0 : index
      %c0_75 = arith.constant 0 : index
      %c0_76 = arith.constant 0 : index
      %104 = vector.load %arg9[%c0_73, %c0_74, %c0_75, %c0_76] : memref<2x18x18x128xf32, #tpu.memory_space<vmem>>, vector<2x18x18x128xf32>
      tpu.vector_store %arg9[%c0_73, %c0_74, %c0_75, %c0_76], %103 {strides = array<i32>} : memref<2x18x18x128xf32, #tpu.memory_space<vmem>>, vector<2x18x18x128xf32>,
    } else {
    }
    %c0 = arith.constant 0 : index
    %c0_1 = arith.constant 0 : index
    %c0_2 = arith.constant 0 : index
    %c0_3 = arith.constant 0 : index
    %3 = vector.load %arg8[%c0, %c0_1, %c0_2, %c0_3] : memref<2x16x16x128xf32, #tpu.memory_space<vmem>>, vector<2x16x16x128xf32>
    %4 = vector.shape_cast %3 : vector<2x16x16x128xf32> to vector<512x128xf32>
    %5 = arith.truncf %4 : vector<512x128xf32> to vector<512x128xbf16>
    %c0_4 = arith.constant 0 : index
    %c0_5 = arith.constant 0 : index
    %c0_6 = arith.constant 0 : index
    %6 = vector.load %arg2[%c0_4, %c0_5, %c0_6] : memref<1x128x128xbf16, #tpu.memory_space<vmem>>, vector<1x128x128xbf16>
    %7 = vector.shape_cast %6 : vector<1x128x128xbf16> to vector<128x128xbf16>
    %cst = arith.constant dense<0.000000e+00> : vector<512x128xf32>
    %8 = tpu.matmul %5, %7, %cst {dimension_numbers = #tpu.dot_dimension_numbers<[1], [0], [0], [1], [0, 0, 1, 1], [], []>} : vector<512x128xbf16>, vector<128x128xbf16>, vector<512x128xf32> -> vector<512x128xf32>
    %c0_7 = arith.constant 0 : index
    %c0_8 = arith.constant 0 : index
    %c0_9 = arith.constant 0 : index
    %9 = vector.load %arg3[%c0_7, %c0_8, %c0_9] : memref<1x1x128xf32, #tpu.memory_space<vmem>>, vector<1x1x128xf32>
    %10 = vector.shape_cast %9 : vector<1x1x128xf32> to vector<1x128xf32>
    %c0_10 = arith.constant 0 : index
    %c0_11 = arith.constant 0 : index
    %c0_12 = arith.constant 0 : index
    %11 = vector.load %arg4[%c0_10, %c0_11, %c0_12] : memref<1x1x128xf32, #tpu.memory_space<vmem>>, vector<1x1x128xf32>
    %12 = vector.shape_cast %11 : vector<1x1x128xf32> to vector<1x128xf32>
    %cst_13 = arith.constant dense<0.000000e+00> : vector<128xf32>
    %13 = vector.multi_reduction <add>, %8, %cst_13 [0] : vector<512x128xf32> to vector<128xf32>
    %14 = vector.shape_cast %13 : vector<128xf32> to vector<1x128xf32>
    %cst_14 = arith.constant 0.001953125 : f32
    %15 = vector.broadcast %cst_14 : f32 to vector<1x128xf32>
    %16 = arith.mulf %14, %15 : vector<1x128xf32>
    %17 = arith.mulf %8, %8 : vector<512x128xf32>
    %cst_15 = arith.constant dense<0.000000e+00> : vector<128xf32>
    %18 = vector.multi_reduction <add>, %17, %cst_15 [0] : vector<512x128xf32> to vector<128xf32>
    %19 = vector.shape_cast %18 : vector<128xf32> to vector<1x128xf32>
    %cst_16 = arith.constant 0.001953125 : f32
    %20 = vector.broadcast %cst_16 : f32 to vector<1x128xf32>
    %21 = arith.mulf %19, %20 : vector<1x128xf32>
    %22 = arith.mulf %16, %16 : vector<1x128xf32>
    %23 = arith.subf %21, %22 : vector<1x128xf32>
    %cst_17 = arith.constant 0.000000e+00 : f32
    %24 = vector.broadcast %cst_17 : f32 to vector<1x128xf32>
    %25 = arith.maximumf %23, %24 : vector<1x128xf32>
    %cst_18 = arith.constant 9.99999974E-6 : f32
    %26 = vector.broadcast %cst_18 : f32 to vector<1x128xf32>
    %27 = arith.addf %25, %26 : vector<1x128xf32>
    %28 = math.rsqrt %27 : vector<1x128xf32>
    %29 = arith.mulf %28, %10 : vector<1x128xf32>
    %30 = vector.broadcast %29 : vector<1x128xf32> to vector<512x128xf32>
    %31 = arith.mulf %8, %30 : vector<512x128xf32>
    %32 = arith.mulf %16, %29 : vector<1x128xf32>
    %33 = arith.subf %12, %32 : vector<1x128xf32>
    %34 = vector.broadcast %33 : vector<1x128xf32> to vector<512x128xf32>
    %35 = arith.addf %31, %34 : vector<512x128xf32>
    %cst_19 = arith.constant 0.000000e+00 : f32
    %36 = vector.broadcast %cst_19 : f32 to vector<512x128xf32>
    %37 = arith.cmpf oge, %35, %36 : vector<512x128xf32>
    %cst_20 = arith.constant 1.000000e-01 : f32
    %38 = vector.broadcast %cst_20 : f32 to vector<512x128xf32>
    %39 = arith.mulf %38, %35 : vector<512x128xf32>
    %40 = arith.select %37, %35, %39 : vector<512x128xi1>, vector<512x128xf32>
    %41 = vector.shape_cast %40 : vector<512x128xf32> to vector<2x16x16x128xf32>
    %c0_21 = arith.constant 0 : index
    %c1 = arith.constant 1 : index
    %c1_22 = arith.constant 1 : index
    %c0_23 = arith.constant 0 : index
    %42 = vector.load %arg9[%c0_21, %c1, %c1_22, %c0_23] : memref<2x18x18x128xf32, #tpu.memory_space<vmem>>, vector<2x16x16x128xf32>
    tpu.vector_store %arg9[%c0_21, %c1, %c1_22, %c0_23], %41 {strides = array<i32>} : memref<2x18x18x128xf32, #tpu.memory_space<vmem>>, vector<2x16x16x128xf32>,
    %c0_24 = arith.constant 0 : index
    %c0_25 = arith.constant 0 : index
    %c0_26 = arith.constant 0 : index
    %c0_27 = arith.constant 0 : index
    %43 = vector.load %arg9[%c0_24, %c0_25, %c0_26, %c0_27] : memref<2x18x18x128xf32, #tpu.memory_space<vmem>>, vector<2x18x16x128xf32>
    %44 = arith.truncf %43 : vector<2x18x16x128xf32> to vector<2x18x16x128xbf16>
    %c0_28 = arith.constant 0 : index
    %c0_29 = arith.constant 0 : index
    %c1_30 = arith.constant 1 : index
    %c0_31 = arith.constant 0 : index
    %45 = vector.load %arg9[%c0_28, %c0_29, %c1_30, %c0_31] : memref<2x18x18x128xf32, #tpu.memory_space<vmem>>, vector<2x18x16x128xf32>
    %46 = arith.truncf %45 : vector<2x18x16x128xf32> to vector<2x18x16x128xbf16>
    %c0_32 = arith.constant 0 : index
    %c0_33 = arith.constant 0 : index
    %c2 = arith.constant 2 : index
    %c0_34 = arith.constant 0 : index
    %47 = vector.load %arg9[%c0_32, %c0_33, %c2, %c0_34] : memref<2x18x18x128xf32, #tpu.memory_space<vmem>>, vector<2x18x16x128xf32>
    %48 = arith.truncf %47 : vector<2x18x16x128xf32> to vector<2x18x16x128xbf16>
    %49 = tpu.concatenate %44, %46, %48 in 3 : vector<2x18x16x128xbf16>, vector<2x18x16x128xbf16>, vector<2x18x16x128xbf16> -> vector<2x18x16x384xbf16>
    %50 = vector.extract_strided_slice %49 {offsets = [0, 0, 0, 0], sizes = [2, 16, 16, 384], strides = [1, 1, 1, 1]} : vector<2x18x16x384xbf16> to vector<2x16x16x384xbf16>
    %51 = vector.shape_cast %50 : vector<2x16x16x384xbf16> to vector<512x384xbf16>
    %c0_35 = arith.constant 0 : index
    %c0_36 = arith.constant 0 : index
    %c0_37 = arith.constant 0 : index
    %c0_38 = arith.constant 0 : index
    %52 = vector.load %arg5[%c0_35, %c0_36, %c0_37, %c0_38] : memref<1x3x384x128xbf16, #tpu.memory_space<vmem>>, vector<1x1x384x128xbf16>
    %53 = vector.shape_cast %52 : vector<1x1x384x128xbf16> to vector<384x128xbf16>
    %cst_39 = arith.constant dense<0.000000e+00> : vector<512x128xf32>
    %54 = tpu.matmul %51, %53, %cst_39 {dimension_numbers = #tpu.dot_dimension_numbers<[1], [0], [0], [1], [0, 0, 1, 1], [], []>} : vector<512x384xbf16>, vector<384x128xbf16>, vector<512x128xf32> -> vector<512x128xf32>
    %55 = vector.extract_strided_slice %49 {offsets = [0, 1, 0, 0], sizes = [2, 16, 16, 384], strides = [1, 1, 1, 1]} : vector<2x18x16x384xbf16> to vector<2x16x16x384xbf16>
    %56 = vector.shape_cast %55 : vector<2x16x16x384xbf16> to vector<512x384xbf16>
    %c0_40 = arith.constant 0 : index
    %c1_41 = arith.constant 1 : index
    %c0_42 = arith.constant 0 : index
    %c0_43 = arith.constant 0 : index
    %57 = vector.load %arg5[%c0_40, %c1_41, %c0_42, %c0_43] : memref<1x3x384x128xbf16, #tpu.memory_space<vmem>>, vector<1x1x384x128xbf16>
    %58 = vector.shape_cast %57 : vector<1x1x384x128xbf16> to vector<384x128xbf16>
    %cst_44 = arith.constant dense<0.000000e+00> : vector<512x128xf32>
    %59 = tpu.matmul %56, %58, %cst_44 {dimension_numbers = #tpu.dot_dimension_numbers<[1], [0], [0], [1], [0, 0, 1, 1], [], []>} : vector<512x384xbf16>, vector<384x128xbf16>, vector<512x128xf32> -> vector<512x128xf32>
    %60 = arith.addf %54, %59 : vector<512x128xf32>
    %61 = vector.extract_strided_slice %49 {offsets = [0, 2, 0, 0], sizes = [2, 16, 16, 384], strides = [1, 1, 1, 1]} : vector<2x18x16x384xbf16> to vector<2x16x16x384xbf16>
    %62 = vector.shape_cast %61 : vector<2x16x16x384xbf16> to vector<512x384xbf16>
    %c0_45 = arith.constant 0 : index
    %c2_46 = arith.constant 2 : index
    %c0_47 = arith.constant 0 : index
    %c0_48 = arith.constant 0 : index
    %63 = vector.load %arg5[%c0_45, %c2_46, %c0_47, %c0_48] : memref<1x3x384x128xbf16, #tpu.memory_space<vmem>>, vector<1x1x384x128xbf16>
    %64 = vector.shape_cast %63 : vector<1x1x384x128xbf16> to vector<384x128xbf16>
    %cst_49 = arith.constant dense<0.000000e+00> : vector<512x128xf32>
    %65 = tpu.matmul %62, %64, %cst_49 {dimension_numbers = #tpu.dot_dimension_numbers<[1], [0], [0], [1], [0, 0, 1, 1], [], []>} : vector<512x384xbf16>, vector<384x128xbf16>, vector<512x128xf32> -> vector<512x128xf32>
    %66 = arith.addf %60, %65 : vector<512x128xf32>
    %c0_50 = arith.constant 0 : index
    %c0_51 = arith.constant 0 : index
    %c0_52 = arith.constant 0 : index
    %67 = vector.load %arg6[%c0_50, %c0_51, %c0_52] : memref<1x1x128xf32, #tpu.memory_space<vmem>>, vector<1x1x128xf32>
    %68 = vector.shape_cast %67 : vector<1x1x128xf32> to vector<1x128xf32>
    %c0_53 = arith.constant 0 : index
    %c0_54 = arith.constant 0 : index
    %c0_55 = arith.constant 0 : index
    %69 = vector.load %arg7[%c0_53, %c0_54, %c0_55] : memref<1x1x128xf32, #tpu.memory_space<vmem>>, vector<1x1x128xf32>
    %70 = vector.shape_cast %69 : vector<1x1x128xf32> to vector<1x128xf32>
    %cst_56 = arith.constant dense<0.000000e+00> : vector<128xf32>
    %71 = vector.multi_reduction <add>, %66, %cst_56 [0] : vector<512x128xf32> to vector<128xf32>
    %72 = vector.shape_cast %71 : vector<128xf32> to vector<1x128xf32>
    %cst_57 = arith.constant 0.001953125 : f32
    %73 = vector.broadcast %cst_57 : f32 to vector<1x128xf32>
    %74 = arith.mulf %72, %73 : vector<1x128xf32>
    %75 = arith.mulf %66, %66 : vector<512x128xf32>
    %cst_58 = arith.constant dense<0.000000e+00> : vector<128xf32>
    %76 = vector.multi_reduction <add>, %75, %cst_58 [0] : vector<512x128xf32> to vector<128xf32>
    %77 = vector.shape_cast %76 : vector<128xf32> to vector<1x128xf32>
    %cst_59 = arith.constant 0.001953125 : f32
    %78 = vector.broadcast %cst_59 : f32 to vector<1x128xf32>
    %79 = arith.mulf %77, %78 : vector<1x128xf32>
    %80 = arith.mulf %74, %74 : vector<1x128xf32>
    %81 = arith.subf %79, %80 : vector<1x128xf32>
    %cst_60 = arith.constant 0.000000e+00 : f32
    %82 = vector.broadcast %cst_60 : f32 to vector<1x128xf32>
    %83 = arith.maximumf %81, %82 : vector<1x128xf32>
    %cst_61 = arith.constant 9.99999974E-6 : f32
    %84 = vector.broadcast %cst_61 : f32 to vector<1x128xf32>
    %85 = arith.addf %83, %84 : vector<1x128xf32>
    %86 = math.rsqrt %85 : vector<1x128xf32>
    %87 = arith.mulf %86, %68 : vector<1x128xf32>
    %88 = vector.broadcast %87 : vector<1x128xf32> to vector<512x128xf32>
    %89 = arith.mulf %66, %88 : vector<512x128xf32>
    %90 = arith.mulf %74, %87 : vector<1x128xf32>
    %91 = arith.subf %70, %90 : vector<1x128xf32>
    %92 = vector.broadcast %91 : vector<1x128xf32> to vector<512x128xf32>
    %93 = arith.addf %89, %92 : vector<512x128xf32>
    %cst_62 = arith.constant 0.000000e+00 : f32
    %94 = vector.broadcast %cst_62 : f32 to vector<512x128xf32>
    %95 = arith.cmpf oge, %93, %94 : vector<512x128xf32>
    %cst_63 = arith.constant 1.000000e-01 : f32
    %96 = vector.broadcast %cst_63 : f32 to vector<512x128xf32>
    %97 = arith.mulf %96, %93 : vector<512x128xf32>
    %98 = arith.select %95, %93, %97 : vector<512x128xi1>, vector<512x128xf32>
    %c0_64 = arith.constant 0 : index
    %c0_65 = arith.constant 0 : index
    %c0_66 = arith.constant 0 : index
    %c0_67 = arith.constant 0 : index
    %99 = vector.load %arg8[%c0_64, %c0_65, %c0_66, %c0_67] : memref<2x16x16x128xf32, #tpu.memory_space<vmem>>, vector<2x16x16x128xf32>
    %100 = vector.shape_cast %98 : vector<512x128xf32> to vector<2x16x16x128xf32>
    %101 = arith.addf %99, %100 : vector<2x16x16x128xf32>
    %c0_68 = arith.constant 0 : index
    %c0_69 = arith.constant 0 : index
    %c0_70 = arith.constant 0 : index
    %c0_71 = arith.constant 0 : index
    %102 = vector.load %arg8[%c0_68, %c0_69, %c0_70, %c0_71] : memref<2x16x16x128xf32, #tpu.memory_space<vmem>>, vector<2x16x16x128xf32>
    tpu.vector_store %arg8[%c0_68, %c0_69, %c0_70, %c0_71], %101 {strides = array<i32>} : memref<2x16x16x128xf32, #tpu.memory_space<vmem>>, vector<2x16x16x128xf32>,
    return
  }
  func.func @transform_1(%arg0: i32) -> (i32, i32, i32) {
    %c0_i32 = arith.constant 0 : i32
    %c0_i32_0 = arith.constant 0 : i32
    %c0_i32_1 = arith.constant 0 : i32
    return %arg0, %c0_i32, %c0_i32_0 : i32, i32, i32
  }
  func.func @transform_2(%arg0: i32) -> (i32, i32, i32) {
    %c0_i32 = arith.constant 0 : i32
    %c0_i32_0 = arith.constant 0 : i32
    %c0_i32_1 = arith.constant 0 : i32
    return %arg0, %c0_i32, %c0_i32_0 : i32, i32, i32
  }
  func.func @transform_3(%arg0: i32) -> (i32, i32, i32) {
    %c0_i32 = arith.constant 0 : i32
    %c0_i32_0 = arith.constant 0 : i32
    %c0_i32_1 = arith.constant 0 : i32
    return %arg0, %c0_i32, %c0_i32_0 : i32, i32, i32
  }
  func.func @transform_4(%arg0: i32) -> (i32, i32, i32, i32) {
    %c0_i32 = arith.constant 0 : i32
    %c0_i32_0 = arith.constant 0 : i32
    %c0_i32_1 = arith.constant 0 : i32
    %c0_i32_2 = arith.constant 0 : i32
    return %arg0, %c0_i32, %c0_i32_0, %c0_i32_1 : i32, i32, i32, i32
  }
  func.func @transform_5(%arg0: i32) -> (i32, i32, i32) {
    %c0_i32 = arith.constant 0 : i32
    %c0_i32_0 = arith.constant 0 : i32
    %c0_i32_1 = arith.constant 0 : i32
    return %arg0, %c0_i32, %c0_i32_0 : i32, i32, i32
  }
  func.func @transform_6(%arg0: i32) -> (i32, i32, i32) {
    %c0_i32 = arith.constant 0 : i32
    %c0_i32_0 = arith.constant 0 : i32
    %c0_i32_1 = arith.constant 0 : i32
    return %arg0, %c0_i32, %c0_i32_0 : i32, i32, i32
  }
  func.func @transform_7(%arg0: i32) -> (i32, i32, i32, i32) {
    %c0_i32 = arith.constant 0 : i32
    %c0_i32_0 = arith.constant 0 : i32
    %c0_i32_1 = arith.constant 0 : i32
    %c0_i32_2 = arith.constant 0 : i32
    %c0_i32_3 = arith.constant 0 : i32
    return %c0_i32, %c0_i32_0, %c0_i32_1, %c0_i32_2 : i32, i32, i32, i32
  }
}

</mosaic_0001>

<llo_original>
// kernel: residual_blocks_forward.1
$region0: #{residual_blocks_forward.1}
  #allocation0 [shape = 'u32[]', space=smem, size = 0x4, offset = 0x4, fixed_abs, tag = 'smem constant byte address 0x4 - core index']
  #allocation1 [shape = 'u32[144,128]{1,0:T(1,128)}', space=vmem, size = 0x12000, scoped, tag = 'internal scratch']
  #allocation2 [shape = 'f32[2,18,18,128]{3,2,1,0:T(8,128)}', space=vmem, size = 0x6c000, scoped, tag = 'scratch operand']
  #allocation4 [shape = 's32[]', space=sflag, size = 0x4, offset = 0, fixed_abs, tag = 'sflag constant byte address 0x0 - dummy sync flag']
  %s0 = inlined_call_operand.vmem [shape: f32[2,16,16,128], index: 0, kind: input, shape index: {}]
  %s1 = inlined_call_operand.vmem [shape: bf16[2,128,128], index: 1, kind: input, shape index: {}]
  %s2 = inlined_call_operand.vmem [shape: f32[2,1,128], index: 2, kind: input, shape index: {}]
  %s3 = inlined_call_operand.vmem [shape: f32[2,1,128], index: 3, kind: input, shape index: {}]
  %s4 = inlined_call_operand.vmem [shape: bf16[2,3,384,128], index: 4, kind: input, shape index: {}]
  %s5 = inlined_call_operand.vmem [shape: f32[2,1,128], index: 5, kind: input, shape index: {}]
  %s6 = inlined_call_operand.vmem [shape: f32[2,1,128], index: 6, kind: input, shape index: {}]
  %s7 = inlined_call_operand.vmem [shape: f32[2,16,16,128], index: 7, kind: output, shape index: {}]
  %s8 = sld [smem:[#allocation0]]
  $region96: #{residual_blocks_forward.1} parent=0
    _
  %s10 = ssub.s32 1, %s8
  %s11 = scalar_select 0, %s10, %s8
  loop: start=0, step=1, limit=4
  $region2: #{residual_blocks_forward.1} parent=0 // loop_pre_header
    _
  $region3: #{residual_blocks_forward.1} parent=0 // loop_header
    %s13 = sphi 0, %s17
    %p14 = scmp.ge.s32.totalorder %s13, 4
    %s23 = sphi 0, %s25
    %s26 = sphi 0, %s23
    %s27 = sphi 0, %s26
    %s43 = sphi 0, %s27
    %s49 = sphi 0, %s51
    %s52 = sphi 0, %s49
    %s53 = sphi 0, %s52
    %s69 = sphi 0, %s53
    %s75 = sphi 0, %s77
    %s78 = sphi 0, %s75
    %s79 = sphi 0, %s78
    %s95 = sphi 0, %s79
    %s101 = sphi 0, %s103
    %s104 = sphi 0, %s101
    %s105 = sphi 0, %s104
    %s121 = sphi 0, %s105
    %s127 = sphi 0, %s129
    %s130 = sphi 0, %s127
    %s131 = sphi 0, %s130
    %s147 = sphi 0, %s131
    %s153 = sphi 0, %s155
    %s156 = sphi 0, %s153
    %s157 = sphi 0, %s156
    %s173 = sphi 0, %s157
    %s177 = sphi 0, %s177
    %s179 = sphi 0, %s177
    %s180 = sphi 0, %s179
    %s194 = sphi 0, %s180
  $region4: #{residual_blocks_forward.1} parent=0 // loop_header_branch
    %16 = sbr.rel (%p14) target = $region8
  $region5: #{residual_blocks_forward.1} parent=0 // loop_body
    %s18 = ssub.s32 %s13, 1
    %s19 = ssub.s32 %s13, 2
    %s20 = sadd.s32 %s13, 1
    %s21 = ssub.s32 %s13, %s20
    %p22 = scmp.eq.s32.totalorder %s21, 0
    %s24 = sadd.s32 %s23, 1
    %s25 = scalar_select %p22, %s23, %s24
    %p28 = pneg %p22
    %p29 = scmp.eq.s32.totalorder %s13, 1
    %p30 = por %p28, %p29
    %p31 = scmp.ne.s32.totalorder %s23, %s26
    %p32 = scmp.eq.s32.totalorder %s13, 0
    %p33 = por %p31, %p32
    %p34 = scmp.ne.s32.totalorder %s23, %s26
    %p35 = scmp.eq.s32.totalorder %s18, 1
    %p36 = por %p34, %p35
    %p37 = scmp.ne.s32.totalorder %s26, %s27
    %p38 = scmp.eq.s32.totalorder %s18, 0
    %p39 = por %p37, %p38
    %p40 = scmp.ne.s32.totalorder %s26, %s27
    %p41 = scmp.eq.s32.totalorder %s19, 1
    %p42 = por %p40, %p41
    %p44 = scmp.ne.s32.totalorder %s27, %s43
    %p45 = scmp.eq.s32.totalorder %s19, 0
    %p46 = por %p44, %p45
    %s47 = ssub.s32 %s13, %s20
    %p48 = scmp.eq.s32.totalorder %s47, 0
    %s50 = sadd.s32 %s49, 1
    %s51 = scalar_select %p48, %s49, %s50
    %p54 = pneg %p48
    %p55 = scmp.eq.s32.totalorder %s13, 1
    %p56 = por %p54, %p55
    %p57 = scmp.ne.s32.totalorder %s49, %s52
    %p58 = scmp.eq.s32.totalorder %s13, 0
    %p59 = por %p57, %p58
    %p60 = scmp.ne.s32.totalorder %s49, %s52
    %p61 = scmp.eq.s32.totalorder %s18, 1
    %p62 = por %p60, %p61
    %p63 = scmp.ne.s32.totalorder %s52, %s53
    %p64 = scmp.eq.s32.totalorder %s18, 0
    %p65 = por %p63, %p64
    %p66 = scmp.ne.s32.totalorder %s52, %s53
    %p67 = scmp.eq.s32.totalorder %s19, 1
    %p68 = por %p66, %p67
    %p70 = scmp.ne.s32.totalorder %s53, %s69
    %p71 = scmp.eq.s32.totalorder %s19, 0
    %p72 = por %p70, %p71
    %s73 = ssub.s32 %s13, %s20
    %p74 = scmp.eq.s32.totalorder %s73, 0
    %s76 = sadd.s32 %s75, 1
    %s77 = scalar_select %p74, %s75, %s76
    %p80 = pneg %p74
    %p81 = scmp.eq.s32.totalorder %s13, 1
    %p82 = por %p80, %p81
    %p83 = scmp.ne.s32.totalorder %s75, %s78
    %p84 = scmp.eq.s32.totalorder %s13, 0
    %p85 = por %p83, %p84
    %p86 = scmp.ne.s32.totalorder %s75, %s78
    %p87 = scmp.eq.s32.totalorder %s18, 1
    %p88 = por %p86, %p87
    %p89 = scmp.ne.s32.totalorder %s78, %s79
    %p90 = scmp.eq.s32.totalorder %s18, 0
    %p91 = por %p89, %p90
    %p92 = scmp.ne.s32.totalorder %s78, %s79
    %p93 = scmp.eq.s32.totalorder %s19, 1
    %p94 = por %p92, %p93
    %p96 = scmp.ne.s32.totalorder %s79, %s95
    %p97 = scmp.eq.s32.totalorder %s19, 0
    %p98 = por %p96, %p97
    %s99 = ssub.s32 %s13, %s20
    %p100 = scmp.eq.s32.totalorder %s99, 0
    %s102 = sadd.s32 %s101, 1
    %s103 = scalar_select %p100, %s101, %s102
    %p106 = pneg %p100
    %p107 = scmp.eq.s32.totalorder %s13, 1
    %p108 = por %p106, %p107
    %p109 = scmp.ne.s32.totalorder %s101, %s104
    %p110 = scmp.eq.s32.totalorder %s13, 0
    %p111 = por %p109, %p110
    %p112 = scmp.ne.s32.totalorder %s101, %s104
    %p113 = scmp.eq.s32.totalorder %s18, 1
    %p114 = por %p112, %p113
    %p115 = scmp.ne.s32.totalorder %s104, %s105
    %p116 = scmp.eq.s32.totalorder %s18, 0
    %p117 = por %p115, %p116
    %p118 = scmp.ne.s32.totalorder %s104, %s105
    %p119 = scmp.eq.s32.totalorder %s19, 1
    %p120 = por %p118, %p119
    %p122 = scmp.ne.s32.totalorder %s105, %s121
    %p123 = scmp.eq.s32.totalorder %s19, 0
    %p124 = por %p122, %p123
    %s125 = ssub.s32 %s13, %s20
    %p126 = scmp.eq.s32.totalorder %s125, 0
    %s128 = sadd.s32 %s127, 1
    %s129 = scalar_select %p126, %s127, %s128
    %p132 = pneg %p126
    %p133 = scmp.eq.s32.totalorder %s13, 1
    %p134 = por %p132, %p133
    %p135 = scmp.ne.s32.totalorder %s127, %s130
    %p136 = scmp.eq.s32.totalorder %s13, 0
    %p137 = por %p135, %p136
    %p138 = scmp.ne.s32.totalorder %s127, %s130
    %p139 = scmp.eq.s32.totalorder %s18, 1
    %p140 = por %p138, %p139
    %p141 = scmp.ne.s32.totalorder %s130, %s131
    %p142 = scmp.eq.s32.totalorder %s18, 0
    %p143 = por %p141, %p142
    %p144 = scmp.ne.s32.totalorder %s130, %s131
    %p145 = scmp.eq.s32.totalorder %s19, 1
    %p146 = por %p144, %p145
    %p148 = scmp.ne.s32.totalorder %s131, %s147
    %p149 = scmp.eq.s32.totalorder %s19, 0
    %p150 = por %p148, %p149
    %s151 = ssub.s32 %s13, %s20
    %p152 = scmp.eq.s32.totalorder %s151, 0
    %s154 = sadd.s32 %s153, 1
    %s155 = scalar_select %p152, %s153, %s154
    %p158 = pneg %p152
    %p159 = scmp.eq.s32.totalorder %s13, 1
    %p160 = por %p158, %p159
    %p161 = scmp.ne.s32.totalorder %s153, %s156
    %p162 = scmp.eq.s32.totalorder %s13, 0
    %p163 = por %p161, %p162
    %p164 = scmp.ne.s32.totalorder %s153, %s156
    %p165 = scmp.eq.s32.totalorder %s18, 1
    %p166 = por %p164, %p165
    %p167 = scmp.ne.s32.totalorder %s156, %s157
    %p168 = scmp.eq.s32.totalorder %s18, 0
    %p169 = por %p167, %p168
    %p170 = scmp.ne.s32.totalorder %s156, %s157
    %p171 = scmp.eq.s32.totalorder %s19, 1
    %p172 = por %p170, %p171
    %p174 = scmp.ne.s32.totalorder %s157, %s173
    %p175 = scmp.eq.s32.totalorder %s19, 0
    %p176 = por %p174, %p175
    %s178 = sadd.s32 %s177, 1
    %p181 = scmp.eq.s32.totalorder %s13, 1
    %p182 = scmp.ne.s32.totalorder %s177, %s179
    %p183 = scmp.eq.s32.totalorder %s13, 0
    %p184 = por %p182, %p183
    %p185 = scmp.ne.s32.totalorder %s177, %s179
    %p186 = scmp.eq.s32.totalorder %s18, 1
    %p187 = por %p185, %p186
    %p188 = scmp.ne.s32.totalorder %s179, %s180
    %p189 = scmp.eq.s32.totalorder %s18, 0
    %p190 = por %p188, %p189
    %p191 = scmp.ne.s32.totalorder %s179, %s180
    %p192 = scmp.eq.s32.totalorder %s19, 1
    %p193 = por %p191, %p192
    %p195 = scmp.ne.s32.totalorder %s180, %s194
    %p196 = scmp.eq.s32.totalorder %s19, 0
    %p197 = por %p195, %p196
    %p198 = scmp.le.s32.totalorder 1, %s13
    %p199 = scmp.lt.s32.totalorder %s13, 3
    %p200 = pnand %p198, %p199
    %p201 = pneg %p200
    // Predicated region
    $region9: #{residual_blocks_forward.1} parent=5 // pred_check
      _
    $region10: #{residual_blocks_forward.1} parent=5 // pred_check_branch
      %203 = sbr.rel (%p200) target = $region12
    $region11: #{residual_blocks_forward.1} parent=5 // pred_region
      %s204 = ssub.s32 %s13, 1
    $region12: #{residual_blocks_forward.1} parent=5 // pred_fallthru
      _
    %p205 = scmp.lt.s32.totalorder %s13, 2
    // Predicated region
    $region13: #{residual_blocks_forward.1} parent=5 // pred_check
      %p206 = pneg %p205
    $region14: #{residual_blocks_forward.1} parent=5 // pred_check_branch
      %208 = sbr.rel (%p206) target = $region16
    $region15: #{residual_blocks_forward.1} parent=5 // pred_region
      // Predicated region
      $region17: #{residual_blocks_forward.1} parent=15 // pred_check
        %p209 = pneg %p33
      $region18: #{residual_blocks_forward.1} parent=15 // pred_check_branch
        %211 = sbr.rel (%p209) target = $region20
      $region19: #{residual_blocks_forward.1} parent=15 // pred_region
        %p212 = scmp.lt.s32.totalorder %s13, 1
        %s213 = scalar_select %p212, %s13, 1
        %s214 = smul.addr %s213, 16
        %s215 = smul.addr %s214, 4
        %s216 = scalar_lea.vmem %s1, %s215
      $region20: #{residual_blocks_forward.1} parent=15 // pred_fallthru
        _
      // Predicated region
      $region21: #{residual_blocks_forward.1} parent=15 // pred_check
        %p217 = pneg %p59
      $region22: #{residual_blocks_forward.1} parent=15 // pred_check_branch
        %219 = sbr.rel (%p217) target = $region24
      $region23: #{residual_blocks_forward.1} parent=15 // pred_region
        %p220 = scmp.lt.s32.totalorder %s13, 1
        %s221 = scalar_select %p220, %s13, 1
        %s222 = scalar_lea.vmem %s2, %s221
      $region24: #{residual_blocks_forward.1} parent=15 // pred_fallthru
        _
      // Predicated region
      $region25: #{residual_blocks_forward.1} parent=15 // pred_check
        %p223 = pneg %p85
      $region26: #{residual_blocks_forward.1} parent=15 // pred_check_branch
        %225 = sbr.rel (%p223) target = $region28
      $region27: #{residual_blocks_forward.1} parent=15 // pred_region
        %p226 = scmp.lt.s32.totalorder %s13, 1
        %s227 = scalar_select %p226, %s13, 1
        %s228 = scalar_lea.vmem %s3, %s227
      $region28: #{residual_blocks_forward.1} parent=15 // pred_fallthru
        _
      // Predicated region
      $region29: #{residual_blocks_forward.1} parent=15 // pred_check
        %p229 = pneg %p111
      $region30: #{residual_blocks_forward.1} parent=15 // pred_check_branch
        %231 = sbr.rel (%p229) target = $region32
      $region31: #{residual_blocks_forward.1} parent=15 // pred_region
        %p232 = scmp.lt.s32.totalorder %s13, 1
        %s233 = scalar_select %p232, %s13, 1
        %s234 = smul.addr %s233, 144
        %s235 = smul.addr %s234, 4
        %s236 = scalar_lea.vmem %s4, %s235
      $region32: #{residual_blocks_forward.1} parent=15 // pred_fallthru
        _
      // Predicated region
      $region33: #{residual_blocks_forward.1} parent=15 // pred_check
        %p237 = pneg %p137
      $region34: #{residual_blocks_forward.1} parent=15 // pred_check_branch
        %239 = sbr.rel (%p237) target = $region36
      $region35: #{residual_blocks_forward.1} parent=15 // pred_region
        %p240 = scmp.lt.s32.totalorder %s13, 1
        %s241 = scalar_select %p240, %s13, 1
        %s242 = scalar_lea.vmem %s5, %s241
      $region36: #{residual_blocks_forward.1} parent=15 // pred_fallthru
        _
      // Predicated region
      $region37: #{residual_blocks_forward.1} parent=15 // pred_check
        %p243 = pneg %p163
      $region38: #{residual_blocks_forward.1} parent=15 // pred_check_branch
        %245 = sbr.rel (%p243) target = $region40
      $region39: #{residual_blocks_forward.1} parent=15 // pred_region
        %p246 = scmp.lt.s32.totalorder %s13, 1
        %s247 = scalar_select %p246, %s13, 1
        %s248 = scalar_lea.vmem %s6, %s247
      $region40: #{residual_blocks_forward.1} parent=15 // pred_fallthru
        _
    $region16: #{residual_blocks_forward.1} parent=5 // pred_fallthru
      _
    %p249 = scmp.le.s32.totalorder 1, %s13
    %p250 = scmp.lt.s32.totalorder %s13, 3
    %p251 = pnand %p249, %p250
    %p252 = pneg %p251
    // Predicated region
    $region41: #{residual_blocks_forward.1} parent=5 // pred_check
      _
    $region42: #{residual_blocks_forward.1} parent=5 // pred_check_branch
      %254 = sbr.rel (%p251) target = $region44
    $region43: #{residual_blocks_forward.1} parent=5 // pred_region
      %s255 = ssub.s32 %s13, 1
      %p256 = scmp.lt.s32.totalorder %s18, 1
      %s257 = scalar_select %p256, %s18, 1
      %s258 = smul.addr %s257, 16
      %s259 = smul.addr %s258, 4
      %s260 = scalar_lea.vmem %s1, %s259
      %p261 = pneg %p39
      %p262 = pneg %p36
      %p263 = scmp.lt.s32.totalorder %s18, 1
      %s264 = scalar_select %p263, %s18, 1
      %s265 = scalar_lea.vmem %s2, %s264
      %p266 = pneg %p65
      %p267 = pneg %p62
      %p268 = scmp.lt.s32.totalorder %s18, 1
      %s269 = scalar_select %p268, %s18, 1
      %s270 = scalar_lea.vmem %s3, %s269
      %p271 = pneg %p91
      %p272 = pneg %p88
      %p273 = scmp.lt.s32.totalorder %s18, 1
      %s274 = scalar_select %p273, %s18, 1
      %s275 = smul.addr %s274, 144
      %s276 = smul.addr %s275, 4
      %s277 = scalar_lea.vmem %s4, %s276
      %p278 = pneg %p117
      %p279 = pneg %p114
      %p280 = scmp.lt.s32.totalorder %s18, 1
      %s281 = scalar_select %p280, %s18, 1
      %s282 = scalar_lea.vmem %s5, %s281
      %p283 = pneg %p143
      %p284 = pneg %p140
      %p285 = scmp.lt.s32.totalorder %s18, 1
      %s286 = scalar_select %p285, %s18, 1
      %s287 = scalar_lea.vmem %s6, %s286
      %p288 = pneg %p169
      %p289 = pneg %p166
      %p290 = pneg %p190
      %p291 = pneg %p187
      %p292 = scmp.lt.s32.totalorder %s18, 1
      %s293 = scalar_select %p292, %s18, 1
      %s294 = smul.addr %s293, 16
      %s295 = smul.addr %s294, 4
      %s296 = scalar_lea.vmem %s1, %s295
      %p297 = scmp.lt.s32.totalorder %s18, 1
      %s298 = scalar_select %p297, %s18, 1
      %s299 = scalar_lea.vmem %s2, %s298
      %p300 = scmp.lt.s32.totalorder %s18, 1
      %s301 = scalar_select %p300, %s18, 1
      %s302 = scalar_lea.vmem %s3, %s301
      %p303 = scmp.lt.s32.totalorder %s18, 1
      %s304 = scalar_select %p303, %s18, 1
      %s305 = smul.addr %s304, 144
      %s306 = smul.addr %s305, 4
      %s307 = scalar_lea.vmem %s4, %s306
      %p308 = scmp.lt.s32.totalorder %s18, 1
      %s309 = scalar_select %p308, %s18, 1
      %s310 = scalar_lea.vmem %s5, %s309
      %p311 = scmp.lt.s32.totalorder %s18, 1
      %s312 = scalar_select %p311, %s18, 1
      %s313 = scalar_lea.vmem %s6, %s312
      %p315 = scmp.eq.s32.totalorder %s18, 0
      // Predicated region
      $region45: #{residual_blocks_forward.1} parent=43 // pred_check
        %p316 = pneg %p315
      $region46: #{residual_blocks_forward.1} parent=43 // pred_check_branch
        %318 = sbr.rel (%p316) target = $region48
      $region47: #{residual_blocks_forward.1} parent=43 // pred_region
        $region49: #{residual_blocks_forward.1} parent=47
          #allocation3 [shape = 's32[1]{0}', space=sflag, size = 0x4, scoped, tag = 'scoped memory for residual_blocks_forward.1']
          %p320 = scmp.lt.u32.totalorder 512, 8
          %p321 = pneg %p320
          // Predicated region
          $region50: #{residual_blocks_forward.1} parent=49 // pred_check
            _
          $region51: #{residual_blocks_forward.1} parent=49 // pred_check_branch
            %323 = sbr.rel (%p320) target = $region53
          $region52: #{residual_blocks_forward.1} parent=49 // pred_region
            %s338 = sand.u32 512, 7
            %p339 = scmp.eq.s32.totalorder %s338, 0
            // Predicated region
            $region65: #{residual_blocks_forward.1} parent=52 // pred_check
              %p340 = pneg %p339
            $region66: #{residual_blocks_forward.1} parent=52 // pred_check_branch
              %342 = sbr.rel (%p340) target = $region68
            $region67: #{residual_blocks_forward.1} parent=52 // pred_region
              loop: start=0, step=1, limit=1
              $region69: #{residual_blocks_forward.1} parent=67 // loop_pre_header
                _
              $region70: #{residual_blocks_forward.1} parent=67 // loop_header
                %s344 = sphi 0, %s348
                %p345 = scmp.ge.s32.totalorder %s344, 1
                %s349 = sphi %s0, %s0
                %s350 = sphi %s7, %s7
              $region71: #{residual_blocks_forward.1} parent=67 // loop_header_branch
                %347 = sbr.rel (%p345) target = $region75
              $region72: #{residual_blocks_forward.1} parent=67 // loop_body
                %v351 = vld [vmem:[%s349] sm:$0xff]
                %352 = vst [vmem:[%s350] sm:$0xff] %v351
                %v353 = vld [vmem:[%s349 + $0x8] sm:$0xff]
                %354 = vst [vmem:[%s350 + $0x8] sm:$0xff] %v353
                %v355 = vld [vmem:[%s349 + $0x10] sm:$0xff]
                %356 = vst [vmem:[%s350 + $0x10] sm:$0xff] %v355
                %v357 = vld [vmem:[%s349 + $0x18] sm:$0xff]
                %358 = vst [vmem:[%s350 + $0x18] sm:$0xff] %v357
                %v359 = vld [vmem:[%s349 + $0x20] sm:$0xff]
                %360 = vst [vmem:[%s350 + $0x20] sm:$0xff] %v359
                %v361 = vld [vmem:[%s349 + $0x28] sm:$0xff]
                %362 = vst [vmem:[%s350 + $0x28] sm:$0xff] %v361
                %v363 = vld [vmem:[%s349 + $0x30] sm:$0xff]
                %364 = vst [vmem:[%s350 + $0x30] sm:$0xff] %v363
                %v365 = vld [vmem:[%s349 + $0x38] sm:$0xff]
                %366 = vst [vmem:[%s350 + $0x38] sm:$0xff] %v365
                %v367 = vld [vmem:[%s349 + $0x40] sm:$0xff]
                %368 = vst [vmem:[%s350 + $0x40] sm:$0xff] %v367
                %v369 = vld [vmem:[%s349 + $0x48] sm:$0xff]
                %370 = vst [vmem:[%s350 + $0x48] sm:$0xff] %v369
                %v371 = vld [vmem:[%s349 + $0x50] sm:$0xff]
                %372 = vst [vmem:[%s350 + $0x50] sm:$0xff] %v371
                %v373 = vld [vmem:[%s349 + $0x58] sm:$0xff]
                %374 = vst [vmem:[%s350 + $0x58] sm:$0xff] %v373
                %v375 = vld [vmem:[%s349 + $0x60] sm:$0xff]
                %376 = vst [vmem:[%s350 + $0x60] sm:$0xff] %v375
                %v377 = vld [vmem:[%s349 + $0x68] sm:$0xff]
                %378 = vst [vmem:[%s350 + $0x68] sm:$0xff] %v377
                %v379 = vld [vmem:[%s349 + $0x70] sm:$0xff]
                %380 = vst [vmem:[%s350 + $0x70] sm:$0xff] %v379
                %v381 = vld [vmem:[%s349 + $0x78] sm:$0xff]
                %382 = vst [vmem:[%s350 + $0x78] sm:$0xff] %v381
                %v383 = vld [vmem:[%s349 + $0x80] sm:$0xff]
                %384 = vst [vmem:[%s350 + $0x80] sm:$0xff] %v383
                %v385 = vld [vmem:[%s349 + $0x88] sm:$0xff]
                %386 = vst [vmem:[%s350 + $0x88] sm:$0xff] %v385
                %v387 = vld [vmem:[%s349 + $0x90] sm:$0xff]
                %388 = vst [vmem:[%s350 + $0x90] sm:$0xff] %v387
                %v389 = vld [vmem:[%s349 + $0x98] sm:$0xff]
                %390 = vst [vmem:[%s350 + $0x98] sm:$0xff] %v389
                %v391 = vld [vmem:[%s349 + $0xa0] sm:$0xff]
                %392 = vst [vmem:[%s350 + $0xa0] sm:$0xff] %v391
                %v393 = vld [vmem:[%s349 + $0xa8] sm:$0xff]
                %394 = vst [vmem:[%s350 + $0xa8] sm:$0xff] %v393
                %v395 = vld [vmem:[%s349 + $0xb0] sm:$0xff]
                %396 = vst [vmem:[%s350 + $0xb0] sm:$0xff] %v395
                %v397 = vld [vmem:[%s349 + $0xb8] sm:$0xff]
                %398 = vst [vmem:[%s350 + $0xb8] sm:$0xff] %v397
                %v399 = vld [vmem:[%s349 + $0xc0] sm:$0xff]
                %400 = vst [vmem:[%s350 + $0xc0] sm:$0xff] %v399
                %v401 = vld [vmem:[%s349 + $0xc8] sm:$0xff]
                %402 = vst [vmem:[%s350 + $0xc8] sm:$0xff] %v401
                %v403 = vld [vmem:[%s349 + $0xd0] sm:$0xff]
                %404 = vst [vmem:[%s350 + $0xd0] sm:$0xff] %v403
                %v405 = vld [vmem:[%s349 + $0xd8] sm:$0xff]
                %406 = vst [vmem:[%s350 + $0xd8] sm:$0xff] %v405
                %v407 = vld [vmem:[%s349 + $0xe0] sm:$0xff]
                %408 = vst [vmem:[%s350 + $0xe0] sm:$0xff] %v407
                %v409 = vld [vmem:[%s349 + $0xe8] sm:$0xff]
                %410 = vst [vmem:[%s350 + $0xe8] sm:$0xff] %v409
                %v411 = vld [vmem:[%s349 + $0xf0] sm:$0xff]
                %412 = vst [vmem:[%s350 + $0xf0] sm:$0xff] %v411
                %v413 = vld [vmem:[%s349 + $0xf8] sm:$0xff]
                %414 = vst [vmem:[%s350 + $0xf8] sm:$0xff] %v413
                %v415 = vld [vmem:[%s349 + $0x100] sm:$0xff]
                %416 = vst [vmem:[%s350 + $0x100] sm:$0xff] %v415
                %v417 = vld [vmem:[%s349 + $0x108] sm:$0xff]
                %418 = vst [vmem:[%s350 + $0x108] sm:$0xff] %v417
                %v419 = vld [vmem:[%s349 + $0x110] sm:$0xff]
                %420 = vst [vmem:[%s350 + $0x110] sm:$0xff] %v419
                %v421 = vld [vmem:[%s349 + $0x118] sm:$0xff]
                %422 = vst [vmem:[%s350 + $0x118] sm:$0xff] %v421
                %v423 = vld [vmem:[%s349 + $0x120] sm:$0xff]
                %424 = vst [vmem:[%s350 + $0x120] sm:$0xff] %v423
                %v425 = vld [vmem:[%s349 + $0x128] sm:$0xff]
                %426 = vst [vmem:[%s350 + $0x128] sm:$0xff] %v425
                %v427 = vld [vmem:[%s349 + $0x130] sm:$0xff]
                %428 = vst [vmem:[%s350 + $0x130] sm:$0xff] %v427
                %v429 = vld [vmem:[%s349 + $0x138] sm:$0xff]
                %430 = vst [vmem:[%s350 + $0x138] sm:$0xff] %v429
                %v431 = vld [vmem:[%s349 + $0x140] sm:$0xff]
                %432 = vst [vmem:[%s350 + $0x140] sm:$0xff] %v431
                %v433 = vld [vmem:[%s349 + $0x148] sm:$0xff]
                %434 = vst [vmem:[%s350 + $0x148] sm:$0xff] %v433
                %v435 = vld [vmem:[%s349 + $0x150] sm:$0xff]
                %436 = vst [vmem:[%s350 + $0x150] sm:$0xff] %v435
                %v437 = vld [vmem:[%s349 + $0x158] sm:$0xff]
                %438 = vst [vmem:[%s350 + $0x158] sm:$0xff] %v437
                %v439 = vld [vmem:[%s349 + $0x160] sm:$0xff]
                %440 = vst [vmem:[%s350 + $0x160] sm:$0xff] %v439
                %v441 = vld [vmem:[%s349 + $0x168] sm:$0xff]
                %442 = vst [vmem:[%s350 + $0x168] sm:$0xff] %v441
                %v443 = vld [vmem:[%s349 + $0x170] sm:$0xff]
                %444 = vst [vmem:[%s350 + $0x170] sm:$0xff] %v443
                %v445 = vld [vmem:[%s349 + $0x178] sm:$0xff]
                %446 = vst [vmem:[%s350 + $0x178] sm:$0xff] %v445
                %v447 = vld [vmem:[%s349 + $0x180] sm:$0xff]
                %448 = vst [vmem:[%s350 + $0x180] sm:$0xff] %v447
                %v449 = vld [vmem:[%s349 + $0x188] sm:$0xff]
                %450 = vst [vmem:[%s350 + $0x188] sm:$0xff] %v449
                %v451 = vld [vmem:[%s349 + $0x190] sm:$0xff]
                %452 = vst [vmem:[%s350 + $0x190] sm:$0xff] %v451
                %v453 = vld [vmem:[%s349 + $0x198] sm:$0xff]
                %454 = vst [vmem:[%s350 + $0x198] sm:$0xff] %v453
                %v455 = vld [vmem:[%s349 + $0x1a0] sm:$0xff]
                %456 = vst [vmem:[%s350 + $0x1a0] sm:$0xff] %v455
                %v457 = vld [vmem:[%s349 + $0x1a8] sm:$0xff]
                %458 = vst [vmem:[%s350 + $0x1a8] sm:$0xff] %v457
                %v459 = vld [vmem:[%s349 + $0x1b0] sm:$0xff]
                %460 = vst [vmem:[%s350 + $0x1b0] sm:$0xff] %v459
                %v461 = vld [vmem:[%s349 + $0x1b8] sm:$0xff]
                %462 = vst [vmem:[%s350 + $0x1b8] sm:$0xff] %v461
                %v463 = vld [vmem:[%s349 + $0x1c0] sm:$0xff]
                %464 = vst [vmem:[%s350 + $0x1c0] sm:$0xff] %v463
                %v465 = vld [vmem:[%s349 + $0x1c8] sm:$0xff]
                %466 = vst [vmem:[%s350 + $0x1c8] sm:$0xff] %v465
                %v467 = vld [vmem:[%s349 + $0x1d0] sm:$0xff]
                %468 = vst [vmem:[%s350 + $0x1d0] sm:$0xff] %v467
                %v469 = vld [vmem:[%s349 + $0x1d8] sm:$0xff]
                %470 = vst [vmem:[%s350 + $0x1d8] sm:$0xff] %v469
                %v471 = vld [vmem:[%s349 + $0x1e0] sm:$0xff]
                %472 = vst [vmem:[%s350 + $0x1e0] sm:$0xff] %v471
                %v473 = vld [vmem:[%s349 + $0x1e8] sm:$0xff]
                %474 = vst [vmem:[%s350 + $0x1e8] sm:$0xff] %v473
                %v475 = vld [vmem:[%s349 + $0x1f0] sm:$0xff]
                %476 = vst [vmem:[%s350 + $0x1f0] sm:$0xff] %v475
                %v477 = vld [vmem:[%s349 + $0x1f8] sm:$0xff]
                %478 = vst [vmem:[%s350 + $0x1f8] sm:$0xff] %v477
              $region73: #{residual_blocks_forward.1} parent=67 // loop_footer
                %s348 = sadd.s32 1, %s344
              $region74: #{residual_blocks_forward.1} parent=67 // loop_footer_branch
                %343 = sbr.rel target = $region70
              $region75: #{residual_blocks_forward.1} parent=67 // loop_exit
                _
            $region68: #{residual_blocks_forward.1} parent=52 // pred_fallthru
              _
            %p479 = pneg %p339
            // Predicated region
            $region76: #{residual_blocks_forward.1} parent=52 // pred_check
              _
            $region77: #{residual_blocks_forward.1} parent=52 // pred_check_branch
              %481 = sbr.rel (%p339) target = $region79
            $region78: #{residual_blocks_forward.1} parent=52 // pred_region
              %s482 = sand.u32 512, 7
            $region79: #{residual_blocks_forward.1} parent=52 // pred_fallthru
              _
          $region53: #{residual_blocks_forward.1} parent=49 // pred_fallthru
            _
          // Predicated region
          $region54: #{residual_blocks_forward.1} parent=49 // pred_check
            %p324 = pneg %p320
          $region55: #{residual_blocks_forward.1} parent=49 // pred_check_branch
            %326 = sbr.rel (%p324) target = $region57
          $region56: #{residual_blocks_forward.1} parent=49 // pred_region
            %s327 = sshllo.u32 0, 512
            loop: start=0, step=1, limit=1
            $region58: #{residual_blocks_forward.1} parent=56 // loop_pre_header
              _
            $region59: #{residual_blocks_forward.1} parent=56 // loop_header
              %s329 = sphi 0, %s333
              %p330 = scmp.ge.s32.totalorder %s329, 1
              %s334 = sphi %s0, %s0
              %s335 = sphi %s7, %s7
            $region60: #{residual_blocks_forward.1} parent=56 // loop_header_branch
              %332 = sbr.rel (%p330) target = $region64
            $region61: #{residual_blocks_forward.1} parent=56 // loop_body
              %v336 = vld [vmem:[%s334] sm:%s327]
              %337 = vst [vmem:[%s335] sm:%s327] %v336
            $region62: #{residual_blocks_forward.1} parent=56 // loop_footer
              %s333 = sadd.s32 1, %s329
            $region63: #{residual_blocks_forward.1} parent=56 // loop_footer_branch
              %328 = sbr.rel target = $region59
            $region64: #{residual_blocks_forward.1} parent=56 // loop_exit
              _
          $region57: #{residual_blocks_forward.1} parent=49 // pred_fallthru
            _
          // Predicated region
          $region80: #{residual_blocks_forward.1} parent=49 // pred_check
            _
          $region81: #{residual_blocks_forward.1} parent=49 // pred_check_branch
            %485 = sbr.rel (0) target = $region83
          $region82: #{residual_blocks_forward.1} parent=49 // pred_region
            %486 = vsyncadd [#allocation3], 8192
          $region83: #{residual_blocks_forward.1} parent=49 // pred_fallthru
            _
          %s487 = smul.u32 2, 16
          %s488 = smul.u32 %s487, 16
          %s489 = smul.u32 %s488, 1
          %s490 = sshll.u32 %s489, 4
          %491 = dma.done [#allocation3], %s490
        %492 = vst [vmem:[#allocation2] sm:$0xff] 0.0
        %493 = vst [vmem:[#allocation2 + $0x8] sm:$0xff] 0.0
        %494 = vst [vmem:[#allocation2 + $0x10] sm:$0x3] 0.0
        %495 = vst [vmem:[#allocation2 + $0x18] sm:$0xff] 0.0
        %496 = vst [vmem:[#allocation2 + $0x20] sm:$0xff] 0.0
        %497 = vst [vmem:[#allocation2 + $0x28] sm:$0x3] 0.0
        %498 = vst [vmem:[#allocation2 + $0x30] sm:$0xff] 0.0
        %499 = vst [vmem:[#allocation2 + $0x38] sm:$0xff] 0.0
        %500 = vst [vmem:[#allocation2 + $0x40] sm:$0x3] 0.0
        %501 = vst [vmem:[#allocation2 + $0x48] sm:$0xff] 0.0
        %502 = vst [vmem:[#allocation2 + $0x50] sm:$0xff] 0.0
        %503 = vst [vmem:[#allocation2 + $0x58] sm:$0x3] 0.0
        %504 = vst [vmem:[#allocation2 + $0x60] sm:$0xff] 0.0
        %505 = vst [vmem:[#allocation2 + $0x68] sm:$0xff] 0.0
        %506 = vst [vmem:[#allocation2 + $0x70] sm:$0x3] 0.0
        %507 = vst [vmem:[#allocation2 + $0x78] sm:$0xff] 0.0
        %508 = vst [vmem:[#allocation2 + $0x80] sm:$0xff] 0.0
        %509 = vst [vmem:[#allocation2 + $0x88] sm:$0x3] 0.0
        %510 = vst [vmem:[#allocation2 + $0x90] sm:$0xff] 0.0
        %511 = vst [vmem:[#allocation2 + $0x98] sm:$0xff] 0.0
        %512 = vst [vmem:[#allocation2 + $0xa0] sm:$0x3] 0.0
        %513 = vst [vmem:[#allocation2 + $0xa8] sm:$0xff] 0.0
        %514 = vst [vmem:[#allocation2 + $0xb0] sm:$0xff] 0.0
        %515 = vst [vmem:[#allocation2 + $0xb8] sm:$0x3] 0.0
        %516 = vst [vmem:[#allocation2 + $0xc0] sm:$0xff] 0.0
        %517 = vst [vmem:[#allocation2 + $0xc8] sm:$0xff] 0.0
        %518 = vst [vmem:[#allocation2 + $0xd0] sm:$0x3] 0.0
        %519 = vst [vmem:[#allocation2 + $0xd8] sm:$0xff] 0.0
        %520 = vst [vmem:[#allocation2 + $0xe0] sm:$0xff] 0.0
        %521 = vst [vmem:[#allocation2 + $0xe8] sm:$0x3] 0.0
        %522 = vst [vmem:[#allocation2 + $0xf0] sm:$0xff] 0.0
        %523 = vst [vmem:[#allocation2 + $0xf8] sm:$0xff] 0.0
        %524 = vst [vmem:[#allocation2 + $0x100] sm:$0x3] 0.0
        %525 = vst [vmem:[#allocation2 + $0x108] sm:$0xff] 0.0
        %526 = vst [vmem:[#allocation2 + $0x110] sm:$0xff] 0.0
        %527 = vst [vmem:[#allocation2 + $0x118] sm:$0x3] 0.0
        %528 = vst [vmem:[#allocation2 + $0x120] sm:$0xff] 0.0
        %529 = vst [vmem:[#allocation2 + $0x128] sm:$0xff] 0.0
        %530 = vst [vmem:[#allocation2 + $0x130] sm:$0x3] 0.0
        %531 = vst [vmem:[#allocation2 + $0x138] sm:$0xff] 0.0
        %532 = vst [vmem:[#allocation2 + $0x140] sm:$0xff] 0.0
        %533 = vst [vmem:[#allocation2 + $0x148] sm:$0x3] 0.0
        %534 = vst [vmem:[#allocation2 + $0x150] sm:$0xff] 0.0
        %535 = vst [vmem:[#allocation2 + $0x158] sm:$0xff] 0.0
        %536 = vst [vmem:[#allocation2 + $0x160] sm:$0x3] 0.0
        %537 = vst [vmem:[#allocation2 + $0x168] sm:$0xff] 0.0
        %538 = vst [vmem:[#allocation2 + $0x170] sm:$0xff] 0.0
        %539 = vst [vmem:[#allocation2 + $0x178] sm:$0x3] 0.0
        %540 = vst [vmem:[#allocation2 + $0x180] sm:$0xff] 0.0
        %541 = vst [vmem:[#allocation2 + $0x188] sm:$0xff] 0.0
        %542 = vst [vmem:[#allocation2 + $0x190] sm:$0x3] 0.0
        %543 = vst [vmem:[#allocation2 + $0x198] sm:$0xff] 0.0
        %544 = vst [vmem:[#allocation2 + $0x1a0] sm:$0xff] 0.0
        %545 = vst [vmem:[#allocation2 + $0x1a8] sm:$0x3] 0.0
        %546 = vst [vmem:[#allocation2 + $0x1b0] sm:$0xff] 0.0
        %547 = vst [vmem:[#allocation2 + $0x1b8] sm:$0xff] 0.0
        %548 = vst [vmem:[#allocation2 + $0x1c0] sm:$0x3] 0.0
        %549 = vst [vmem:[#allocation2 + $0x1c8] sm:$0xff] 0.0
        %550 = vst [vmem:[#allocation2 + $0x1d0] sm:$0xff] 0.0
        %551 = vst [vmem:[#allocation2 + $0x1d8] sm:$0x3] 0.0
        %552 = vst [vmem:[#allocation2 + $0x1e0] sm:$0xff] 0.0
        %553 = vst [vmem:[#allocation2 + $0x1e8] sm:$0xff] 0.0
        %554 = vst [vmem:[#allocation2 + $0x1f0] sm:$0x3] 0.0
        %555 = vst [vmem:[#allocation2 + $0x1f8] sm:$0xff] 0.0
        %556 = vst [vmem:[#allocation2 + $0x200] sm:$0xff] 0.0
        %557 = vst [vmem:[#allocation2 + $0x208] sm:$0x3] 0.0
        %558 = vst [vmem:[#allocation2 + $0x210] sm:$0xff] 0.0
        %559 = vst [vmem:[#allocation2 + $0x218] sm:$0xff] 0.0
        %560 = vst [vmem:[#allocation2 + $0x220] sm:$0x3] 0.0
        %561 = vst [vmem:[#allocation2 + $0x228] sm:$0xff] 0.0
        %562 = vst [vmem:[#allocation2 + $0x230] sm:$0xff] 0.0
        %563 = vst [vmem:[#allocation2 + $0x238] sm:$0x3] 0.0
        %564 = vst [vmem:[#allocation2 + $0x240] sm:$0xff] 0.0
        %565 = vst [vmem:[#allocation2 + $0x248] sm:$0xff] 0.0
        %566 = vst [vmem:[#allocation2 + $0x250] sm:$0x3] 0.0
        %567 = vst [vmem:[#allocation2 + $0x258] sm:$0xff] 0.0
        %568 = vst [vmem:[#allocation2 + $0x260] sm:$0xff] 0.0
        %569 = vst [vmem:[#allocation2 + $0x268] sm:$0x3] 0.0
        %570 = vst [vmem:[#allocation2 + $0x270] sm:$0xff] 0.0
        %571 = vst [vmem:[#allocation2 + $0x278] sm:$0xff] 0.0
        %572 = vst [vmem:[#allocation2 + $0x280] sm:$0x3] 0.0
        %573 = vst [vmem:[#allocation2 + $0x288] sm:$0xff] 0.0
        %574 = vst [vmem:[#allocation2 + $0x290] sm:$0xff] 0.0
        %575 = vst [vmem:[#allocation2 + $0x298] sm:$0x3] 0.0
        %576 = vst [vmem:[#allocation2 + $0x2a0] sm:$0xff] 0.0
        %577 = vst [vmem:[#allocation2 + $0x2a8] sm:$0xff] 0.0
        %578 = vst [vmem:[#allocation2 + $0x2b0] sm:$0x3] 0.0
        %579 = vst [vmem:[#allocation2 + $0x2b8] sm:$0xff] 0.0
        %580 = vst [vmem:[#allocation2 + $0x2c0] sm:$0xff] 0.0
        %581 = vst [vmem:[#allocation2 + $0x2c8] sm:$0x3] 0.0
        %582 = vst [vmem:[#allocation2 + $0x2d0] sm:$0xff] 0.0
        %583 = vst [vmem:[#allocation2 + $0x2d8] sm:$0xff] 0.0
        %584 = vst [vmem:[#allocation2 + $0x2e0] sm:$0x3] 0.0
        %585 = vst [vmem:[#allocation2 + $0x2e8] sm:$0xff] 0.0
        %586 = vst [vmem:[#allocation2 + $0x2f0] sm:$0xff] 0.0
        %587 = vst [vmem:[#allocation2 + $0x2f8] sm:$0x3] 0.0
        %588 = vst [vmem:[#allocation2 + $0x300] sm:$0xff] 0.0
        %589 = vst [vmem:[#allocation2 + $0x308] sm:$0xff] 0.0
        %590 = vst [vmem:[#allocation2 + $0x310] sm:$0x3] 0.0
        %591 = vst [vmem:[#allocation2 + $0x318] sm:$0xff] 0.0
        %592 = vst [vmem:[#allocation2 + $0x320] sm:$0xff] 0.0
        %593 = vst [vmem:[#allocation2 + $0x328] sm:$0x3] 0.0
        %594 = vst [vmem:[#allocation2 + $0x330] sm:$0xff] 0.0
        %595 = vst [vmem:[#allocation2 + $0x338] sm:$0xff] 0.0
        %596 = vst [vmem:[#allocation2 + $0x340] sm:$0x3] 0.0
        %597 = vst [vmem:[#allocation2 + $0x348] sm:$0xff] 0.0
        %598 = vst [vmem:[#allocation2 + $0x350] sm:$0xff] 0.0
        %599 = vst [vmem:[#allocation2 + $0x358] sm:$0x3] 0.0
      $region48: #{residual_blocks_forward.1} parent=43 // pred_fallthru
        _
      %v600 = vld [vmem:[%s7] sm:$0xff]
      %v601 = vld [vmem:[%s7 + $0x8] sm:$0xff]
      %v602 = vld [vmem:[%s7 + $0x10] sm:$0xff]
      %v603 = vld [vmem:[%s7 + $0x18] sm:$0xff]
      %v604 = vld [vmem:[%s7 + $0x20] sm:$0xff]
      %v605 = vld [vmem:[%s7 + $0x28] sm:$0xff]
      %v606 = vld [vmem:[%s7 + $0x30] sm:$0xff]
      %v607 = vld [vmem:[%s7 + $0x38] sm:$0xff]
      %v608 = vld [vmem:[%s7 + $0x40] sm:$0xff]
      %v609 = vld [vmem:[%s7 + $0x48] sm:$0xff]
      %v610 = vld [vmem:[%s7 + $0x50] sm:$0xff]
      %v611 = vld [vmem:[%s7 + $0x58] sm:$0xff]
      %v612 = vld [vmem:[%s7 + $0x60] sm:$0xff]
      %v613 = vld [vmem:[%s7 + $0x68] sm:$0xff]
      %v614 = vld [vmem:[%s7 + $0x70] sm:$0xff]
      %v615 = vld [vmem:[%s7 + $0x78] sm:$0xff]
      %v616 = vld [vmem:[%s7 + $0x80] sm:$0xff]
      %v617 = vld [vmem:[%s7 + $0x88] sm:$0xff]
      %v618 = vld [vmem:[%s7 + $0x90] sm:$0xff]
      %v619 = vld [vmem:[%s7 + $0x98] sm:$0xff]
      %v620 = vld [vmem:[%s7 + $0xa0] sm:$0xff]
      %v621 = vld [vmem:[%s7 + $0xa8] sm:$0xff]
      %v622 = vld [vmem:[%s7 + $0xb0] sm:$0xff]
      %v623 = vld [vmem:[%s7 + $0xb8] sm:$0xff]
      %v624 = vld [vmem:[%s7 + $0xc0] sm:$0xff]
      %v625 = vld [vmem:[%s7 + $0xc8] sm:$0xff]
      %v626 = vld [vmem:[%s7 + $0xd0] sm:$0xff]
      %v627 = vld [vmem:[%s7 + $0xd8] sm:$0xff]
      %v628 = vld [vmem:[%s7 + $0xe0] sm:$0xff]
      %v629 = vld [vmem:[%s7 + $0xe8] sm:$0xff]
      %v630 = vld [vmem:[%s7 + $0xf0] sm:$0xff]
      %v631 = vld [vmem:[%s7 + $0xf8] sm:$0xff]
      %v632 = vld [vmem:[%s7 + $0x100] sm:$0xff]
      %v633 = vld [vmem:[%s7 + $0x108] sm:$0xff]
      %v634 = vld [vmem:[%s7 + $0x110] sm:$0xff]
      %v635 = vld [vmem:[%s7 + $0x118] sm:$0xff]
      %v636 = vld [vmem:[%s7 + $0x120] sm:$0xff]
      %v637 = vld [vmem:[%s7 + $0x128] sm:$0xff]
      %v638 = vld [vmem:[%s7 + $0x130] sm:$0xff]
      %v639 = vld [vmem:[%s7 + $0x138] sm:$0xff]
      %v640 = vld [vmem:[%s7 + $0x140] sm:$0xff]
      %v641 = vld [vmem:[%s7 + $0x148] sm:$0xff]
      %v642 = vld [vmem:[%s7 + $0x150] sm:$0xff]
      %v643 = vld [vmem:[%s7 + $0x158] sm:$0xff]
      %v644 = vld [vmem:[%s7 + $0x160] sm:$0xff]
      %v645 = vld [vmem:[%s7 + $0x168] sm:$0xff]
      %v646 = vld [vmem:[%s7 + $0x170] sm:$0xff]
      %v647 = vld [vmem:[%s7 + $0x178] sm:$0xff]
      %v648 = vld [vmem:[%s7 + $0x180] sm:$0xff]
      %v649 = vld [vmem:[%s7 + $0x188] sm:$0xff]
      %v650 = vld [vmem:[%s7 + $0x190] sm:$0xff]
      %v651 = vld [vmem:[%s7 + $0x198] sm:$0xff]
      %v652 = vld [vmem:[%s7 + $0x1a0] sm:$0xff]
      %v653 = vld [vmem:[%s7 + $0x1a8] sm:$0xff]
      %v654 = vld [vmem:[%s7 + $0x1b0] sm:$0xff]
      %v655 = vld [vmem:[%s7 + $0x1b8] sm:$0xff]
      %v656 = vld [vmem:[%s7 + $0x1c0] sm:$0xff]
      %v657 = vld [vmem:[%s7 + $0x1c8] sm:$0xff]
      %v658 = vld [vmem:[%s7 + $0x1d0] sm:$0xff]
      %v659 = vld [vmem:[%s7 + $0x1d8] sm:$0xff]
      %v660 = vld [vmem:[%s7 + $0x1e0] sm:$0xff]
      %v661 = vld [vmem:[%s7 + $0x1e8] sm:$0xff]
      %v662 = vld [vmem:[%s7 + $0x1f0] sm:$0xff]
      %v663 = vld [vmem:[%s7 + $0x1f8] sm:$0xff]
      %v664 = vpack.c.bf16 %v601, %v600
      %v665 = vpack.c.bf16 %v603, %v602
      %v666 = vpack.c.bf16 %v605, %v604
      %v667 = vpack.c.bf16 %v607, %v606
      %v668 = vpack.c.bf16 %v609, %v608
      %v669 = vpack.c.bf16 %v611, %v610
      %v670 = vpack.c.bf16 %v613, %v612
      %v671 = vpack.c.bf16 %v615, %v614
      %v672 = vpack.c.bf16 %v617, %v616
      %v673 = vpack.c.bf16 %v619, %v618
      %v674 = vpack.c.bf16 %v621, %v620
      %v675 = vpack.c.bf16 %v623, %v622
      %v676 = vpack.c.bf16 %v625, %v624
      %v677 = vpack.c.bf16 %v627, %v626
      %v678 = vpack.c.bf16 %v629, %v628
      %v679 = vpack.c.bf16 %v631, %v630
      %v680 = vpack.c.bf16 %v633, %v632
      %v681 = vpack.c.bf16 %v635, %v634
      %v682 = vpack.c.bf16 %v637, %v636
      %v683 = vpack.c.bf16 %v639, %v638
      %v684 = vpack.c.bf16 %v641, %v640
      %v685 = vpack.c.bf16 %v643, %v642
      %v686 = vpack.c.bf16 %v645, %v644
      %v687 = vpack.c.bf16 %v647, %v646
      %v688 = vpack.c.bf16 %v649, %v648
      %v689 = vpack.c.bf16 %v651, %v650
      %v690 = vpack.c.bf16 %v653, %v652
      %v691 = vpack.c.bf16 %v655, %v654
      %v692 = vpack.c.bf16 %v657, %v656
      %v693 = vpack.c.bf16 %v659, %v658
      %v694 = vpack.c.bf16 %v661, %v660
      %v695 = vpack.c.bf16 %v663, %v662
      %v696 = vld [vmem:[%s296] sm:$0xf]
      %v697 = vld [vmem:[%s296 + $0x4] sm:$0xf]
      %v698 = vld [vmem:[%s296 + $0x8] sm:$0xf]
      %v699 = vld [vmem:[%s296 + $0xc] sm:$0xf]
      %v700 = vld [vmem:[%s296 + $0x10] sm:$0xf]
      %v701 = vld [vmem:[%s296 + $0x14] sm:$0xf]
      %v702 = vld [vmem:[%s296 + $0x18] sm:$0xf]
      %v703 = vld [vmem:[%s296 + $0x1c] sm:$0xf]
      %v704 = vld [vmem:[%s296 + $0x20] sm:$0xf]
      %v705 = vld [vmem:[%s296 + $0x24] sm:$0xf]
      %v706 = vld [vmem:[%s296 + $0x28] sm:$0xf]
      %v707 = vld [vmem:[%s296 + $0x2c] sm:$0xf]
      %v708 = vld [vmem:[%s296 + $0x30] sm:$0xf]
      %v709 = vld [vmem:[%s296 + $0x34] sm:$0xf]
      %v710 = vld [vmem:[%s296 + $0x38] sm:$0xf]
      %v711 = vld [vmem:[%s296 + $0x3c] sm:$0xf]
      %v728 = vunpack.c.l.b16 %v696
      %v729 = vunpack.c.l.b16 %v697
      %v730 = vunpack.c.l.b16 %v698
      %v731 = vunpack.c.l.b16 %v699
      %v732 = vunpack.c.l.b16 %v700
      %v733 = vunpack.c.l.b16 %v701
      %v734 = vunpack.c.l.b16 %v702
      %v735 = vunpack.c.l.b16 %v703
      %v736 = vunpack.c.l.b16 %v704
      %v737 = vunpack.c.l.b16 %v705
      %v738 = vunpack.c.l.b16 %v706
      %v739 = vunpack.c.l.b16 %v707
      %v740 = vunpack.c.l.b16 %v708
      %v741 = vunpack.c.l.b16 %v709
      %v742 = vunpack.c.l.b16 %v710
      %v743 = vunpack.c.l.b16 %v711
      %v744 = vpack.c.b16 %v729, %v728
      %v745 = vpack.c.b16 %v731, %v730
      %v746 = vpack.c.b16 %v733, %v732
      %v747 = vpack.c.b16 %v735, %v734
      %v748 = vpack.c.b16 %v737, %v736
      %v749 = vpack.c.b16 %v739, %v738
      %v750 = vpack.c.b16 %v741, %v740
      %v751 = vpack.c.b16 %v743, %v742
      %760 = vmatprep.subr.bf16.mxu0 0
      %761 = vmatpush1.bf16.msra.mxu0 %v744
      %762 = vmatprep.subr.bf16.mxu0 0
      %763 = vmatpush1.bf16.msra.mxu0 %v745
      %764 = vmatprep.subr.bf16.mxu0 0
      %765 = vmatpush1.bf16.msra.mxu0 %v746
      %766 = vmatprep.subr.bf16.mxu0 0
      %767 = vmatpush1.bf16.msra.mxu0 %v747
      %768 = vmatprep.subr.bf16.mxu0 0
      %769 = vmatpush1.bf16.msra.mxu0 %v748
      %770 = vmatprep.subr.bf16.mxu0 0
      %771 = vmatpush1.bf16.msra.mxu0 %v749
      %772 = vmatprep.subr.bf16.mxu0 0
      %773 = vmatpush1.bf16.msra.mxu0 %v750
      %774 = vmatprep.subr.bf16.mxu0 0
      %775 = vmatpush1.bf16.msra.mxu0 %v751
      %776 = vmatprep.subr.bf16.mxu0 0
      %777 = vmatpush1.bf16.msra.mxu0 0
      %778 = vmatprep.subr.bf16.mxu0 0
      %779 = vmatpush1.bf16.msra.mxu0 0
      %780 = vmatprep.subr.bf16.mxu0 0
      %781 = vmatpush1.bf16.msra.mxu0 0
      %782 = vmatprep.subr.bf16.mxu0 0
      %783 = vmatpush1.bf16.msra.mxu0 0
      %784 = vmatprep.subr.bf16.mxu0 0
      %785 = vmatpush1.bf16.msra.mxu0 0
      %786 = vmatprep.subr.bf16.mxu0 0
      %787 = vmatpush1.bf16.msra.mxu0 0
      %788 = vmatprep.subr.bf16.mxu0 0
      %789 = vmatpush1.bf16.msra.mxu0 0
      %790 = vmatprep.subr.bf16.mxu0 0
      %791 = vmatpush1.bf16.msra.mxu0 0
      %792 = vmatprep.mubr.bf16.mxu0 0
      %793 = vmatmul.mubr.bf16.gmra.mrb[0].mxu0 %v664
      %v794 = vpop.f32.mrb[0].mxu0
      %v795 = vadd.f32 0.0, %v794
      %v796 = vpop.f32.mrb[0].mxu0
      %v797 = vpop.f32.mrb[0].mxu0
      %v798 = vadd.f32 0.0, %v797
      %v799 = vpop.f32.mrb[0].mxu0
      %800 = vmatprep.mubr.bf16.mxu0 0
      %801 = vmatmul.mubr.bf16.gmra.mrb[0].mxu0 %v665
      %v802 = vpop.f32.mrb[0].mxu0
      %v803 = vadd.f32 0.0, %v802
      %v804 = vpop.f32.mrb[0].mxu0
      %v805 = vpop.f32.mrb[0].mxu0
      %v806 = vadd.f32 0.0, %v805
      %v807 = vpop.f32.mrb[0].mxu0
      %808 = vmatprep.mubr.bf16.mxu0 0
      %809 = vmatmul.mubr.bf16.gmra.mrb[0].mxu0 %v666
      %v810 = vpop.f32.mrb[0].mxu0
      %v811 = vadd.f32 0.0, %v810
      %v812 = vpop.f32.mrb[0].mxu0
      %v813 = vpop.f32.mrb[0].mxu0
      %v814 = vadd.f32 0.0, %v813
      %v815 = vpop.f32.mrb[0].mxu0
      %816 = vmatprep.mubr.bf16.mxu0 0
      %817 = vmatmul.mubr.bf16.gmra.mrb[0].mxu0 %v667
      %v818 = vpop.f32.mrb[0].mxu0
      %v819 = vadd.f32 0.0, %v818
      %v820 = vpop.f32.mrb[0].mxu0
      %v821 = vpop.f32.mrb[0].mxu0
      %v822 = vadd.f32 0.0, %v821
      %v823 = vpop.f32.mrb[0].mxu0
      %824 = vmatprep.mubr.bf16.mxu0 0
      %825 = vmatmul.mubr.bf16.gmra.mrb[0].mxu0 %v668
      %v826 = vpop.f32.mrb[0].mxu0
      %v827 = vadd.f32 0.0, %v826
      %v828 = vpop.f32.mrb[0].mxu0
      %v829 = vpop.f32.mrb[0].mxu0
      %v830 = vadd.f32 0.0, %v829
      %v831 = vpop.f32.mrb[0].mxu0
      %832 = vmatprep.mubr.bf16.mxu0 0
      %833 = vmatmul.mubr.bf16.gmra.mrb[0].mxu0 %v669
      %v834 = vpop.f32.mrb[0].mxu0
      %v835 = vadd.f32 0.0, %v834
      %v836 = vpop.f32.mrb[0].mxu0
      %v837 = vpop.f32.mrb[0].mxu0
      %v838 = vadd.f32 0.0, %v837
      %v839 = vpop.f32.mrb[0].mxu0
      %840 = vmatprep.mubr.bf16.mxu0 0
      %841 = vmatmul.mubr.bf16.gmra.mrb[0].mxu0 %v670
      %v842 = vpop.f32.mrb[0].mxu0
      %v843 = vadd.f32 0.0, %v842
      %v844 = vpop.f32.mrb[0].mxu0
      %v845 = vpop.f32.mrb[0].mxu0
      %v846 = vadd.f32 0.0, %v845
      %v847 = vpop.f32.mrb[0].mxu0
      %848 = vmatprep.mubr.bf16.mxu0 0
      %849 = vmatmul.mubr.bf16.gmra.mrb[0].mxu0 %v671
      %v850 = vpop.f32.mrb[0].mxu0
      %v851 = vadd.f32 0.0, %v850
      %v852 = vpop.f32.mrb[0].mxu0
      %v853 = vpop.f32.mrb[0].mxu0
      %v854 = vadd.f32 0.0, %v853
      %v855 = vpop.f32.mrb[0].mxu0
      %856 = vmatprep.mubr.bf16.mxu0 0
      %857 = vmatmul.mubr.bf16.gmra.mrb[0].mxu0 %v672
      %v858 = vpop.f32.mrb[0].mxu0
      %v859 = vadd.f32 0.0, %v858
      %v860 = vpop.f32.mrb[0].mxu0
      %v861 = vpop.f32.mrb[0].mxu0
      %v862 = vadd.f32 0.0, %v861
      %v863 = vpop.f32.mrb[0].mxu0
      %864 = vmatprep.mubr.bf16.mxu0 0
      %865 = vmatmul.mubr.bf16.gmra.mrb[0].mxu0 %v673
      %v866 = vpop.f32.mrb[0].mxu0
      %v867 = vadd.f32 0.0, %v866
      %v868 = vpop.f32.mrb[0].mxu0
      %v869 = vpop.f32.mrb[0].mxu0
      %v870 = vadd.f32 0.0, %v869
      %v871 = vpop.f32.mrb[0].mxu0
      %872 = vmatprep.mubr.bf16.mxu0 0
      %873 = vmatmul.mubr.bf16.gmra.mrb[0].mxu0 %v674
      %v874 = vpop.f32.mrb[0].mxu0
      %v875 = vadd.f32 0.0, %v874
      %v876 = vpop.f32.mrb[0].mxu0
      %v877 = vpop.f32.mrb[0].mxu0
      %v878 = vadd.f32 0.0, %v877
      %v879 = vpop.f32.mrb[0].mxu0
      %880 = vmatprep.mubr.bf16.mxu0 0
      %881 = vmatmul.mubr.bf16.gmra.mrb[0].mxu0 %v675
      %v882 = vpop.f32.mrb[0].mxu0
      %v883 = vadd.f32 0.0, %v882
      %v884 = vpop.f32.mrb[0].mxu0
      %v885 = vpop.f32.mrb[0].mxu0
      %v886 = vadd.f32 0.0, %v885
      %v887 = vpop.f32.mrb[0].mxu0
      %888 = vmatprep.mubr.bf16.mxu0 0
      %889 = vmatmul.mubr.bf16.gmra.mrb[0].mxu0 %v676
      %v890 = vpop.f32.mrb[0].mxu0
      %v891 = vadd.f32 0.0, %v890
      %v892 = vpop.f32.mrb[0].mxu0
      %v893 = vpop.f32.mrb[0].mxu0
      %v894 = vadd.f32 0.0, %v893
      %v895 = vpop.f32.mrb[0].mxu0
      %896 = vmatprep.mubr.bf16.mxu0 0
      %897 = vmatmul.mubr.bf16.gmra.mrb[0].mxu0 %v677
      %v898 = vpop.f32.mrb[0].mxu0
      %v899 = vadd.f32 0.0, %v898
      %v900 = vpop.f32.mrb[0].mxu0
      %v901 = vpop.f32.mrb[0].mxu0
      %v902 = vadd.f32 0.0, %v901
      %v903 = vpop.f32.mrb[0].mxu0
      %904 = vmatprep.mubr.bf16.mxu0 0
      %905 = vmatmul.mubr.bf16.gmra.mrb[0].mxu0 %v678
      %v906 = vpop.f32.mrb[0].mxu0
      %v907 = vadd.f32 0.0, %v906
      %v908 = vpop.f32.mrb[0].mxu0
      %v909 = vpop.f32.mrb[0].mxu0
      %v910 = vadd.f32 0.0, %v909
      %v911 = vpop.f32.mrb[0].mxu0
      %912 = vmatprep.mubr.bf16.mxu0 0
      %913 = vmatmul.mubr.bf16.gmra.mrb[0].mxu0 %v679
      %v914 = vpop.f32.mrb[0].mxu0
      %v915 = vadd.f32 0.0, %v914
      %v916 = vpop.f32.mrb[0].mxu0
      %v917 = vpop.f32.mrb[0].mxu0
      %v918 = vadd.f32 0.0, %v917
      %v919 = vpop.f32.mrb[0].mxu0
      %920 = vmatprep.mubr.bf16.mxu0 0
      %921 = vmatmul.mubr.bf16.gmra.mrb[0].mxu0 %v680
      %v922 = vpop.f32.mrb[0].mxu0
      %v923 = vadd.f32 0.0, %v922
      %v924 = vpop.f32.mrb[0].mxu0
      %v925 = vpop.f32.mrb[0].mxu0
      %v926 = vadd.f32 0.0, %v925
      %v927 = vpop.f32.mrb[0].mxu0
      %928 = vmatprep.mubr.bf16.mxu0 0
      %929 = vmatmul.mubr.bf16.gmra.mrb[0].mxu0 %v681
      %v930 = vpop.f32.mrb[0].mxu0
      %v931 = vadd.f32 0.0, %v930
      %v932 = vpop.f32.mrb[0].mxu0
      %v933 = vpop.f32.mrb[0].mxu0
      %v934 = vadd.f32 0.0, %v933
      %v935 = vpop.f32.mrb[0].mxu0
      %936 = vmatprep.mubr.bf16.mxu0 0
      %937 = vmatmul.mubr.bf16.gmra.mrb[0].mxu0 %v682
      %v938 = vpop.f32.mrb[0].mxu0
      %v939 = vadd.f32 0.0, %v938
      %v940 = vpop.f32.mrb[0].mxu0
      %v941 = vpop.f32.mrb[0].mxu0
      %v942 = vadd.f32 0.0, %v941
      %v943 = vpop.f32.mrb[0].mxu0
      %944 = vmatprep.mubr.bf16.mxu0 0
      %945 = vmatmul.mubr.bf16.gmra.mrb[0].mxu0 %v683
      %v946 = vpop.f32.mrb[0].mxu0
      %v947 = vadd.f32 0.0, %v946
      %v948 = vpop.f32.mrb[0].mxu0
      %v949 = vpop.f32.mrb[0].mxu0
      %v950 = vadd.f32 0.0, %v949
      %v951 = vpop.f32.mrb[0].mxu0
      %952 = vmatprep.mubr.bf16.mxu0 0
      %953 = vmatmul.mubr.bf16.gmra.mrb[0].mxu0 %v684
      %v954 = vpop.f32.mrb[0].mxu0
      %v955 = vadd.f32 0.0, %v954
      %v956 = vpop.f32.mrb[0].mxu0
      %v957 = vpop.f32.mrb[0].mxu0
      %v958 = vadd.f32 0.0, %v957
      %v959 = vpop.f32.mrb[0].mxu0
      %960 = vmatprep.mubr.bf16.mxu0 0
      %961 = vmatmul.mubr.bf16.gmra.mrb[0].mxu0 %v685
      %v962 = vpop.f32.mrb[0].mxu0
      %v963 = vadd.f32 0.0, %v962
      %v964 = vpop.f32.mrb[0].mxu0
      %v965 = vpop.f32.mrb[0].mxu0
      %v966 = vadd.f32 0.0, %v965
      %v967 = vpop.f32.mrb[0].mxu0
      %968 = vmatprep.mubr.bf16.mxu0 0
      %969 = vmatmul.mubr.bf16.gmra.mrb[0].mxu0 %v686
      %v970 = vpop.f32.mrb[0].mxu0
      %v971 = vadd.f32 0.0, %v970
      %v972 = vpop.f32.mrb[0].mxu0
      %v973 = vpop.f32.mrb[0].mxu0
      %v974 = vadd.f32 0.0, %v973
      %v975 = vpop.f32.mrb[0].mxu0
      %976 = vmatprep.mubr.bf16.mxu0 0
      %977 = vmatmul.mubr.bf16.gmra.mrb[0].mxu0 %v687
      %v978 = vpop.f32.mrb[0].mxu0
      %v979 = vadd.f32 0.0, %v978
      %v980 = vpop.f32.mrb[0].mxu0
      %v981 = vpop.f32.mrb[0].mxu0
      %v982 = vadd.f32 0.0, %v981
      %v983 = vpop.f32.mrb[0].mxu0
      %984 = vmatprep.mubr.bf16.mxu0 0
      %985 = vmatmul.mubr.bf16.gmra.mrb[0].mxu0 %v688
      %v986 = vpop.f32.mrb[0].mxu0
      %v987 = vadd.f32 0.0, %v986
      %v988 = vpop.f32.mrb[0].mxu0
      %v989 = vpop.f32.mrb[0].mxu0
      %v990 = vadd.f32 0.0, %v989
      %v991 = vpop.f32.mrb[0].mxu0
      %992 = vmatprep.mubr.bf16.mxu0 0
      %993 = vmatmul.mubr.bf16.gmra.mrb[0].mxu0 %v689
      %v994 = vpop.f32.mrb[0].mxu0
      %v995 = vadd.f32 0.0, %v994
      %v996 = vpop.f32.mrb[0].mxu0
      %v997 = vpop.f32.mrb[0].mxu0
      %v998 = vadd.f32 0.0, %v997
      %v999 = vpop.f32.mrb[0].mxu0
      %1000 = vmatprep.mubr.bf16.mxu0 0
      %1001 = vmatmul.mubr.bf16.gmra.mrb[0].mxu0 %v690
      %v1002 = vpop.f32.mrb[0].mxu0
      %v1003 = vadd.f32 0.0, %v1002
      %v1004 = vpop.f32.mrb[0].mxu0
      %v1005 = vpop.f32.mrb[0].mxu0
      %v1006 = vadd.f32 0.0, %v1005
      %v1007 = vpop.f32.mrb[0].mxu0
      %1008 = vmatprep.mubr.bf16.mxu0 0
      %1009 = vmatmul.mubr.bf16.gmra.mrb[0].mxu0 %v691
      %v1010 = vpop.f32.mrb[0].mxu0
      %v1011 = vadd.f32 0.0, %v1010
      %v1012 = vpop.f32.mrb[0].mxu0
      %v1013 = vpop.f32.mrb[0].mxu0
      %v1014 = vadd.f32 0.0, %v1013
      %v1015 = vpop.f32.mrb[0].mxu0
      %1016 = vmatprep.mubr.bf16.mxu0 0
      %1017 = vmatmul.mubr.bf16.gmra.mrb[0].mxu0 %v692
      %v1018 = vpop.f32.mrb[0].mxu0
      %v1019 = vadd.f32 0.0, %v1018
      %v1020 = vpop.f32.mrb[0].mxu0
      %v1021 = vpop.f32.mrb[0].mxu0
      %v1022 = vadd.f32 0.0, %v1021
      %v1023 = vpop.f32.mrb[0].mxu0
      %1024 = vmatprep.mubr.bf16.mxu0 0
      %1025 = vmatmul.mubr.bf16.gmra.mrb[0].mxu0 %v693
      %v1026 = vpop.f32.mrb[0].mxu0
      %v1027 = vadd.f32 0.0, %v1026
      %v1028 = vpop.f32.mrb[0].mxu0
      %v1029 = vpop.f32.mrb[0].mxu0
      %v1030 = vadd.f32 0.0, %v1029
      %v1031 = vpop.f32.mrb[0].mxu0
      %1032 = vmatprep.mubr.bf16.mxu0 0
      %1033 = vmatmul.mubr.bf16.gmra.mrb[0].mxu0 %v694
      %v1034 = vpop.f32.mrb[0].mxu0
      %v1035 = vadd.f32 0.0, %v1034
      %v1036 = vpop.f32.mrb[0].mxu0
      %v1037 = vpop.f32.mrb[0].mxu0
      %v1038 = vadd.f32 0.0, %v1037
      %v1039 = vpop.f32.mrb[0].mxu0
      %1040 = vmatprep.mubr.bf16.mxu0 0
      %1041 = vmatmul.mubr.bf16.gmra.mrb[0].mxu0 %v695
      %v1042 = vpop.f32.mrb[0].mxu0
      %v1043 = vadd.f32 0.0, %v1042
      %v1044 = vpop.f32.mrb[0].mxu0
      %v1045 = vpop.f32.mrb[0].mxu0
      %v1046 = vadd.f32 0.0, %v1045
      %v1047 = vpop.f32.mrb[0].mxu0
      %1048 = vdwg.mxu0
      %v1049 = vld [vmem:[%s299] sm:$0x1]
      %v1050 = vld [vmem:[%s302] sm:$0x1]
      %v1051 = vadd.f32 %v795, %v798
      %v1052 = vadd.f32 %v1051, %v803
      %v1053 = vadd.f32 %v1052, %v806
      %v1054 = vadd.f32 %v1053, %v811
      %v1055 = vadd.f32 %v1054, %v814
      %v1056 = vadd.f32 %v1055, %v819
      %v1057 = vadd.f32 %v1056, %v822
      %v1058 = vadd.f32 %v1057, %v827
      %v1059 = vadd.f32 %v1058, %v830
      %v1060 = vadd.f32 %v1059, %v835
      %v1061 = vadd.f32 %v1060, %v838
      %v1062 = vadd.f32 %v1061, %v843
      %v1063 = vadd.f32 %v1062, %v846
      %v1064 = vadd.f32 %v1063, %v851
      %v1065 = vadd.f32 %v1064, %v854
      %v1066 = vadd.f32 %v1065, %v859
      %v1067 = vadd.f32 %v1066, %v862
      %v1068 = vadd.f32 %v1067, %v867
      %v1069 = vadd.f32 %v1068, %v870
      %v1070 = vadd.f32 %v1069, %v875
      %v1071 = vadd.f32 %v1070, %v878
      %v1072 = vadd.f32 %v1071, %v883
      %v1073 = vadd.f32 %v1072, %v886
      %v1074 = vadd.f32 %v1073, %v891
      %v1075 = vadd.f32 %v1074, %v894
      %v1076 = vadd.f32 %v1075, %v899
      %v1077 = vadd.f32 %v1076, %v902
      %v1078 = vadd.f32 %v1077, %v907
      %v1079 = vadd.f32 %v1078, %v910
      %v1080 = vadd.f32 %v1079, %v915
      %v1081 = vadd.f32 %v1080, %v918
      %v1082 = vadd.f32 %v1081, %v923
      %v1083 = vadd.f32 %v1082, %v926
      %v1084 = vadd.f32 %v1083, %v931
      %v1085 = vadd.f32 %v1084, %v934
      %v1086 = vadd.f32 %v1085, %v939
      %v1087 = vadd.f32 %v1086, %v942
      %v1088 = vadd.f32 %v1087, %v947
      %v1089 = vadd.f32 %v1088, %v950
      %v1090 = vadd.f32 %v1089, %v955
      %v1091 = vadd.f32 %v1090, %v958
      %v1092 = vadd.f32 %v1091, %v963
      %v1093 = vadd.f32 %v1092, %v966
      %v1094 = vadd.f32 %v1093, %v971
      %v1095 = vadd.f32 %v1094, %v974
      %v1096 = vadd.f32 %v1095, %v979
      %v1097 = vadd.f32 %v1096, %v982
      %v1098 = vadd.f32 %v1097, %v987
      %v1099 = vadd.f32 %v1098, %v990
      %v1100 = vadd.f32 %v1099, %v995
      %v1101 = vadd.f32 %v1100, %v998
      %v1102 = vadd.f32 %v1101, %v1003
      %v1103 = vadd.f32 %v1102, %v1006
      %v1104 = vadd.f32 %v1103, %v1011
      %v1105 = vadd.f32 %v1104, %v1014
      %v1106 = vadd.f32 %v1105, %v1019
      %v1107 = vadd.f32 %v1106, %v1022
      %v1108 = vadd.f32 %v1107, %v1027
      %v1109 = vadd.f32 %v1108, %v1030
      %v1110 = vadd.f32 %v1109, %v1035
      %v1111 = vadd.f32 %v1110, %v1038
      %v1112 = vadd.f32 %v1111, %v1043
      %v1113 = vadd.f32 %v1112, %v1046
      %v1114 = vrot.slane %v1113, 4
      %v1115 = vadd.f32 %v1113, %v1114
      %v1116 = vrot.slane %v1115, 2
      %v1117 = vadd.f32 %v1115, %v1116
      %v1118 = vrot.slane %v1117, 1
      %v1119 = vadd.f32 %v1117, %v1118
      %v1120 = vmul.f32 %v1119, 0.001953125
      %v1121 = vmul.f32 %v795, %v795
      %v1122 = vmul.f32 %v798, %v798
      %v1123 = vmul.f32 %v803, %v803
      %v1124 = vmul.f32 %v806, %v806
      %v1125 = vmul.f32 %v811, %v811
      %v1126 = vmul.f32 %v814, %v814
      %v1127 = vmul.f32 %v819, %v819
      %v1128 = vmul.f32 %v822, %v822
      %v1129 = vmul.f32 %v827, %v827
      %v1130 = vmul.f32 %v830, %v830
      %v1131 = vmul.f32 %v835, %v835
      %v1132 = vmul.f32 %v838, %v838
      %v1133 = vmul.f32 %v843, %v843
      %v1134 = vmul.f32 %v846, %v846
      %v1135 = vmul.f32 %v851, %v851
      %v1136 = vmul.f32 %v854, %v854
      %v1137 = vmul.f32 %v859, %v859
      %v1138 = vmul.f32 %v862, %v862
      %v1139 = vmul.f32 %v867, %v867
      %v1140 = vmul.f32 %v870, %v870
      %v1141 = vmul.f32 %v875, %v875
      %v1142 = vmul.f32 %v878, %v878
      %v1143 = vmul.f32 %v883, %v883
      %v1144 = vmul.f32 %v886, %v886
      %v1145 = vmul.f32 %v891, %v891
      %v1146 = vmul.f32 %v894, %v894
      %v1147 = vmul.f32 %v899, %v899
      %v1148 = vmul.f32 %v902, %v902
      %v1149 = vmul.f32 %v907, %v907
      %v1150 = vmul.f32 %v910, %v910
      %v1151 = vmul.f32 %v915, %v915
      %v1152 = vmul.f32 %v918, %v918
      %v1153 = vmul.f32 %v923, %v923
      %v1154 = vmul.f32 %v926, %v926
      %v1155 = vmul.f32 %v931, %v931
      %v1156 = vmul.f32 %v934, %v934
      %v1157 = vmul.f32 %v939, %v939
      %v1158 = vmul.f32 %v942, %v942
      %v1159 = vmul.f32 %v947, %v947
      %v1160 = vmul.f32 %v950, %v950
      %v1161 = vmul.f32 %v955, %v955
      %v1162 = vmul.f32 %v958, %v958
      %v1163 = vmul.f32 %v963, %v963
      %v1164 = vmul.f32 %v966, %v966
      %v1165 = vmul.f32 %v971, %v971
      %v1166 = vmul.f32 %v974, %v974
      %v1167 = vmul.f32 %v979, %v979
      %v1168 = vmul.f32 %v982, %v982
      %v1169 = vmul.f32 %v987, %v987
      %v1170 = vmul.f32 %v990, %v990
      %v1171 = vmul.f32 %v995, %v995
      %v1172 = vmul.f32 %v998, %v998
      %v1173 = vmul.f32 %v1003, %v1003
      %v1174 = vmul.f32 %v1006, %v1006
      %v1175 = vmul.f32 %v1011, %v1011
      %v1176 = vmul.f32 %v1014, %v1014
      %v1177 = vmul.f32 %v1019, %v1019
      %v1178 = vmul.f32 %v1022, %v1022
      %v1179 = vmul.f32 %v1027, %v1027
      %v1180 = vmul.f32 %v1030, %v1030
      %v1181 = vmul.f32 %v1035, %v1035
      %v1182 = vmul.f32 %v1038, %v1038
      %v1183 = vmul.f32 %v1043, %v1043
      %v1184 = vmul.f32 %v1046, %v1046
      %v1185 = vadd.f32 %v1121, %v1122
      %v1186 = vadd.f32 %v1185, %v1123
      %v1187 = vadd.f32 %v1186, %v1124
      %v1188 = vadd.f32 %v1187, %v1125
      %v1189 = vadd.f32 %v1188, %v1126
      %v1190 = vadd.f32 %v1189, %v1127
      %v1191 = vadd.f32 %v1190, %v1128
      %v1192 = vadd.f32 %v1191, %v1129
      %v1193 = vadd.f32 %v1192, %v1130
      %v1194 = vadd.f32 %v1193, %v1131
      %v1195 = vadd.f32 %v1194, %v1132
      %v1196 = vadd.f32 %v1195, %v1133
      %v1197 = vadd.f32 %v1196, %v1134
      %v1198 = vadd.f32 %v1197, %v1135
      %v1199 = vadd.f32 %v1198, %v1136
      %v1200 = vadd.f32 %v1199, %v1137
      %v1201 = vadd.f32 %v1200, %v1138
      %v1202 = vadd.f32 %v1201, %v1139
      %v1203 = vadd.f32 %v1202, %v1140
      %v1204 = vadd.f32 %v1203, %v1141
      %v1205 = vadd.f32 %v1204, %v1142
      %v1206 = vadd.f32 %v1205, %v1143
      %v1207 = vadd.f32 %v1206, %v1144
      %v1208 = vadd.f32 %v1207, %v1145
      %v1209 = vadd.f32 %v1208, %v1146
      %v1210 = vadd.f32 %v1209, %v1147
      %v1211 = vadd.f32 %v1210, %v1148
      %v1212 = vadd.f32 %v1211, %v1149
      %v1213 = vadd.f32 %v1212, %v1150
      %v1214 = vadd.f32 %v1213, %v1151
      %v1215 = vadd.f32 %v1214, %v1152
      %v1216 = vadd.f32 %v1215, %v1153
      %v1217 = vadd.f32 %v1216, %v1154
      %v1218 = vadd.f32 %v1217, %v1155
      %v1219 = vadd.f32 %v1218, %v1156
      %v1220 = vadd.f32 %v1219, %v1157
      %v1221 = vadd.f32 %v1220, %v1158
      %v1222 = vadd.f32 %v1221, %v1159
      %v1223 = vadd.f32 %v1222, %v1160
      %v1224 = vadd.f32 %v1223, %v1161
      %v1225 = vadd.f32 %v1224, %v1162
      %v1226 = vadd.f32 %v1225, %v1163
      %v1227 = vadd.f32 %v1226, %v1164
      %v1228 = vadd.f32 %v1227, %v1165
      %v1229 = vadd.f32 %v1228, %v1166
      %v1230 = vadd.f32 %v1229, %v1167
      %v1231 = vadd.f32 %v1230, %v1168
      %v1232 = vadd.f32 %v1231, %v1169
      %v1233 = vadd.f32 %v1232, %v1170
      %v1234 = vadd.f32 %v1233, %v1171
      %v1235 = vadd.f32 %v1234, %v1172
      %v1236 = vadd.f32 %v1235, %v1173
      %v1237 = vadd.f32 %v1236, %v1174
      %v1238 = vadd.f32 %v1237, %v1175
      %v1239 = vadd.f32 %v1238, %v1176
      %v1240 = vadd.f32 %v1239, %v1177
      %v1241 = vadd.f32 %v1240, %v1178
      %v1242 = vadd.f32 %v1241, %v1179
      %v1243 = vadd.f32 %v1242, %v1180
      %v1244 = vadd.f32 %v1243, %v1181
      %v1245 = vadd.f32 %v1244, %v1182
      %v1246 = vadd.f32 %v1245, %v1183
      %v1247 = vadd.f32 %v1246, %v1184
      %v1248 = vrot.slane %v1247, 4
      %v1249 = vadd.f32 %v1247, %v1248
      %v1250 = vrot.slane %v1249, 2
      %v1251 = vadd.f32 %v1249, %v1250
      %v1252 = vrot.slane %v1251, 1
      %v1253 = vadd.f32 %v1251, %v1252
      %v1254 = vmul.f32 %v1253, 0.001953125
      %v1255 = vmul.f32 %v1120, %v1120
      %v1256 = vsub.f32 %v1254, %v1255
      %v1257 = vmax.f32 %v1256, 0.0
      %v1258 = vadd.f32 %v1257, 1e-05
      %v1259 = vrsqrt.pop %v1258
      %v1260 = vmul.f32 %v1259, %v1049
      %v1261 = vlaneseq
      %v1262 = vshrl.u32 %v1261, 7
      %v1263 = vsub.s32 0, %v1262
      %v1264 = vrot.slane %v1260, %v1263
      %v1265 = vmul.f32 %v795, %v1264
      %v1266 = vmul.f32 %v798, %v1264
      %v1267 = vmul.f32 %v803, %v1264
      %v1268 = vmul.f32 %v806, %v1264
      %v1269 = vmul.f32 %v811, %v1264
      %v1270 = vmul.f32 %v814, %v1264
      %v1271 = vmul.f32 %v819, %v1264
      %v1272 = vmul.f32 %v822, %v1264
      %v1273 = vmul.f32 %v827, %v1264
      %v1274 = vmul.f32 %v830, %v1264
      %v1275 = vmul.f32 %v835, %v1264
      %v1276 = vmul.f32 %v838, %v1264
      %v1277 = vmul.f32 %v843, %v1264
      %v1278 = vmul.f32 %v846, %v1264
      %v1279 = vmul.f32 %v851, %v1264
      %v1280 = vmul.f32 %v854, %v1264
      %v1281 = vmul.f32 %v859, %v1264
      %v1282 = vmul.f32 %v862, %v1264
      %v1283 = vmul.f32 %v867, %v1264
      %v1284 = vmul.f32 %v870, %v1264
      %v1285 = vmul.f32 %v875, %v1264
      %v1286 = vmul.f32 %v878, %v1264
      %v1287 = vmul.f32 %v883, %v1264
      %v1288 = vmul.f32 %v886, %v1264
      %v1289 = vmul.f32 %v891, %v1264
      %v1290 = vmul.f32 %v894, %v1264
      %v1291 = vmul.f32 %v899, %v1264
      %v1292 = vmul.f32 %v902, %v1264
      %v1293 = vmul.f32 %v907, %v1264
      %v1294 = vmul.f32 %v910, %v1264
      %v1295 = vmul.f32 %v915, %v1264
      %v1296 = vmul.f32 %v918, %v1264
      %v1297 = vmul.f32 %v923, %v1264
      %v1298 = vmul.f32 %v926, %v1264
      %v1299 = vmul.f32 %v931, %v1264
      %v1300 = vmul.f32 %v934, %v1264
      %v1301 = vmul.f32 %v939, %v1264
      %v1302 = vmul.f32 %v942, %v1264
      %v1303 = vmul.f32 %v947, %v1264
      %v1304 = vmul.f32 %v950, %v1264
      %v1305 = vmul.f32 %v955, %v1264
      %v1306 = vmul.f32 %v958, %v1264
      %v1307 = vmul.f32 %v963, %v1264
      %v1308 = vmul.f32 %v966, %v1264
      %v1309 = vmul.f32 %v971, %v1264
      %v1310 = vmul.f32 %v974, %v1264
      %v1311 = vmul.f32 %v979, %v1264
      %v1312 = vmul.f32 %v982, %v1264
      %v1313 = vmul.f32 %v987, %v1264
      %v1314 = vmul.f32 %v990, %v1264
      %v1315 = vmul.f32 %v995, %v1264
      %v1316 = vmul.f32 %v998, %v1264
      %v1317 = vmul.f32 %v1003, %v1264
      %v1318 = vmul.f32 %v1006, %v1264
      %v1319 = vmul.f32 %v1011, %v1264
      %v1320 = vmul.f32 %v1014, %v1264
      %v1321 = vmul.f32 %v1019, %v1264
      %v1322 = vmul.f32 %v1022, %v1264
      %v1323 = vmul.f32 %v1027, %v1264
      %v1324 = vmul.f32 %v1030, %v1264
      %v1325 = vmul.f32 %v1035, %v1264
      %v1326 = vmul.f32 %v1038, %v1264
      %v1327 = vmul.f32 %v1043, %v1264
      %v1328 = vmul.f32 %v1046, %v1264
      %v1329 = vmul.f32 %v1120, %v1260
      %v1330 = vsub.f32 %v1050, %v1329
      %v1332 = vlaneseq
      %v1333 = vshrl.u32 %v1332, 7
      %v1334 = vsub.s32 0, %v1333
      %v1335 = vrot.slane %v1330, %v1334
      %v1337 = vadd.f32 %v1265, %v1335
      %v1338 = vadd.f32 %v1266, %v1335
      %v1339 = vadd.f32 %v1267, %v1335
      %v1340 = vadd.f32 %v1268, %v1335
      %v1341 = vadd.f32 %v1269, %v1335
      %v1342 = vadd.f32 %v1270, %v1335
      %v1343 = vadd.f32 %v1271, %v1335
      %v1344 = vadd.f32 %v1272, %v1335
      %v1345 = vadd.f32 %v1273, %v1335
      %v1346 = vadd.f32 %v1274, %v1335
      %v1347 = vadd.f32 %v1275, %v1335
      %v1348 = vadd.f32 %v1276, %v1335
      %v1349 = vadd.f32 %v1277, %v1335
      %v1350 = vadd.f32 %v1278, %v1335
      %v1351 = vadd.f32 %v1279, %v1335
      %v1352 = vadd.f32 %v1280, %v1335
      %v1353 = vadd.f32 %v1281, %v1335
      %v1354 = vadd.f32 %v1282, %v1335
      %v1355 = vadd.f32 %v1283, %v1335
      %v1356 = vadd.f32 %v1284, %v1335
      %v1357 = vadd.f32 %v1285, %v1335
      %v1358 = vadd.f32 %v1286, %v1335
      %v1359 = vadd.f32 %v1287, %v1335
      %v1360 = vadd.f32 %v1288, %v1335
      %v1361 = vadd.f32 %v1289, %v1335
      %v1362 = vadd.f32 %v1290, %v1335
      %v1363 = vadd.f32 %v1291, %v1335
      %v1364 = vadd.f32 %v1292, %v1335
      %v1365 = vadd.f32 %v1293, %v1335
      %v1366 = vadd.f32 %v1294, %v1335
      %v1367 = vadd.f32 %v1295, %v1335
      %v1368 = vadd.f32 %v1296, %v1335
      %v1369 = vadd.f32 %v1297, %v1335
      %v1370 = vadd.f32 %v1298, %v1335
      %v1371 = vadd.f32 %v1299, %v1335
      %v1372 = vadd.f32 %v1300, %v1335
      %v1373 = vadd.f32 %v1301, %v1335
      %v1374 = vadd.f32 %v1302, %v1335
      %v1375 = vadd.f32 %v1303, %v1335
      %v1376 = vadd.f32 %v1304, %v1335
      %v1377 = vadd.f32 %v1305, %v1335
      %v1378 = vadd.f32 %v1306, %v1335
      %v1379 = vadd.f32 %v1307, %v1335
      %v1380 = vadd.f32 %v1308, %v1335
      %v1381 = vadd.f32 %v1309, %v1335
      %v1382 = vadd.f32 %v1310, %v1335
      %v1383 = vadd.f32 %v1311, %v1335
      %v1384 = vadd.f32 %v1312, %v1335
      %v1385 = vadd.f32 %v1313, %v1335
      %v1386 = vadd.f32 %v1314, %v1335
      %v1387 = vadd.f32 %v1315, %v1335
      %v1388 = vadd.f32 %v1316, %v1335
      %v1389 = vadd.f32 %v1317, %v1335
      %v1390 = vadd.f32 %v1318, %v1335
      %v1391 = vadd.f32 %v1319, %v1335
      %v1392 = vadd.f32 %v1320, %v1335
      %v1393 = vadd.f32 %v1321, %v1335
      %v1394 = vadd.f32 %v1322, %v1335
      %v1395 = vadd.f32 %v1323, %v1335
      %v1396 = vadd.f32 %v1324, %v1335
      %v1397 = vadd.f32 %v1325, %v1335
      %v1398 = vadd.f32 %v1326, %v1335
      %v1399 = vadd.f32 %v1327, %v1335
      %v1400 = vadd.f32 %v1328, %v1335
      %vm1401 = vcmp.ge.f32.partialorder %v1337, 0.0
      %vm1402 = vcmp.ge.f32.partialorder %v1338, 0.0
      %vm1403 = vcmp.ge.f32.partialorder %v1339, 0.0
      %vm1404 = vcmp.ge.f32.partialorder %v1340, 0.0
      %vm1405 = vcmp.ge.f32.partialorder %v1341, 0.0
      %vm1406 = vcmp.ge.f32.partialorder %v1342, 0.0
      %vm1407 = vcmp.ge.f32.partialorder %v1343, 0.0
      %vm1408 = vcmp.ge.f32.partialorder %v1344, 0.0
      %vm1409 = vcmp.ge.f32.partialorder %v1345, 0.0
      %vm1410 = vcmp.ge.f32.partialorder %v1346, 0.0
      %vm1411 = vcmp.ge.f32.partialorder %v1347, 0.0
      %vm1412 = vcmp.ge.f32.partialorder %v1348, 0.0
      %vm1413 = vcmp.ge.f32.partialorder %v1349, 0.0
      %vm1414 = vcmp.ge.f32.partialorder %v1350, 0.0
      %vm1415 = vcmp.ge.f32.partialorder %v1351, 0.0
      %vm1416 = vcmp.ge.f32.partialorder %v1352, 0.0
      %vm1417 = vcmp.ge.f32.partialorder %v1353, 0.0
      %vm1418 = vcmp.ge.f32.partialorder %v1354, 0.0
      %vm1419 = vcmp.ge.f32.partialorder %v1355, 0.0
      %vm1420 = vcmp.ge.f32.partialorder %v1356, 0.0
      %vm1421 = vcmp.ge.f32.partialorder %v1357, 0.0
      %vm1422 = vcmp.ge.f32.partialorder %v1358, 0.0
      %vm1423 = vcmp.ge.f32.partialorder %v1359, 0.0
      %vm1424 = vcmp.ge.f32.partialorder %v1360, 0.0
      %vm1425 = vcmp.ge.f32.partialorder %v1361, 0.0
      %vm1426 = vcmp.ge.f32.partialorder %v1362, 0.0
      %vm1427 = vcmp.ge.f32.partialorder %v1363, 0.0
      %vm1428 = vcmp.ge.f32.partialorder %v1364, 0.0
      %vm1429 = vcmp.ge.f32.partialorder %v1365, 0.0
      %vm1430 = vcmp.ge.f32.partialorder %v1366, 0.0
      %vm1431 = vcmp.ge.f32.partialorder %v1367, 0.0
      %vm1432 = vcmp.ge.f32.partialorder %v1368, 0.0
      %vm1433 = vcmp.ge.f32.partialorder %v1369, 0.0
      %vm1434 = vcmp.ge.f32.partialorder %v1370, 0.0
      %vm1435 = vcmp.ge.f32.partialorder %v1371, 0.0
      %vm1436 = vcmp.ge.f32.partialorder %v1372, 0.0
      %vm1437 = vcmp.ge.f32.partialorder %v1373, 0.0
      %vm1438 = vcmp.ge.f32.partialorder %v1374, 0.0
      %vm1439 = vcmp.ge.f32.partialorder %v1375, 0.0
      %vm1440 = vcmp.ge.f32.partialorder %v1376, 0.0
      %vm1441 = vcmp.ge.f32.partialorder %v1377, 0.0
      %vm1442 = vcmp.ge.f32.partialorder %v1378, 0.0
      %vm1443 = vcmp.ge.f32.partialorder %v1379, 0.0
      %vm1444 = vcmp.ge.f32.partialorder %v1380, 0.0
      %vm1445 = vcmp.ge.f32.partialorder %v1381, 0.0
      %vm1446 = vcmp.ge.f32.partialorder %v1382, 0.0
      %vm1447 = vcmp.ge.f32.partialorder %v1383, 0.0
      %vm1448 = vcmp.ge.f32.partialorder %v1384, 0.0
      %vm1449 = vcmp.ge.f32.partialorder %v1385, 0.0
      %vm1450 = vcmp.ge.f32.partialorder %v1386, 0.0
      %vm1451 = vcmp.ge.f32.partialorder %v1387, 0.0
      %vm1452 = vcmp.ge.f32.partialorder %v1388, 0.0
      %vm1453 = vcmp.ge.f32.partialorder %v1389, 0.0
      %vm1454 = vcmp.ge.f32.partialorder %v1390, 0.0
      %vm1455 = vcmp.ge.f32.partialorder %v1391, 0.0
      %vm1456 = vcmp.ge.f32.partialorder %v1392, 0.0
      %vm1457 = vcmp.ge.f32.partialorder %v1393, 0.0
      %vm1458 = vcmp.ge.f32.partialorder %v1394, 0.0
      %vm1459 = vcmp.ge.f32.partialorder %v1395, 0.0
      %vm1460 = vcmp.ge.f32.partialorder %v1396, 0.0
      %vm1461 = vcmp.ge.f32.partialorder %v1397, 0.0
      %vm1462 = vcmp.ge.f32.partialorder %v1398, 0.0
      %vm1463 = vcmp.ge.f32.partialorder %v1399, 0.0
      %vm1464 = vcmp.ge.f32.partialorder %v1400, 0.0
      %v1465 = vmul.f32 %v1337, 0.1
      %v1466 = vmul.f32 %v1338, 0.1
      %v1467 = vmul.f32 %v1339, 0.1
      %v1468 = vmul.f32 %v1340, 0.1
      %v1469 = vmul.f32 %v1341, 0.1
      %v1470 = vmul.f32 %v1342, 0.1
      %v1471 = vmul.f32 %v1343, 0.1
      %v1472 = vmul.f32 %v1344, 0.1
      %v1473 = vmul.f32 %v1345, 0.1
      %v1474 = vmul.f32 %v1346, 0.1
      %v1475 = vmul.f32 %v1347, 0.1
      %v1476 = vmul.f32 %v1348, 0.1
      %v1477 = vmul.f32 %v1349, 0.1
      %v1478 = vmul.f32 %v1350, 0.1
      %v1479 = vmul.f32 %v1351, 0.1
      %v1480 = vmul.f32 %v1352, 0.1
      %v1481 = vmul.f32 %v1353, 0.1
      %v1482 = vmul.f32 %v1354, 0.1
      %v1483 = vmul.f32 %v1355, 0.1
      %v1484 = vmul.f32 %v1356, 0.1
      %v1485 = vmul.f32 %v1357, 0.1
      %v1486 = vmul.f32 %v1358, 0.1
      %v1487 = vmul.f32 %v1359, 0.1
      %v1488 = vmul.f32 %v1360, 0.1
      %v1489 = vmul.f32 %v1361, 0.1
      %v1490 = vmul.f32 %v1362, 0.1
      %v1491 = vmul.f32 %v1363, 0.1
      %v1492 = vmul.f32 %v1364, 0.1
      %v1493 = vmul.f32 %v1365, 0.1
      %v1494 = vmul.f32 %v1366, 0.1
      %v1495 = vmul.f32 %v1367, 0.1
      %v1496 = vmul.f32 %v1368, 0.1
      %v1497 = vmul.f32 %v1369, 0.1
      %v1498 = vmul.f32 %v1370, 0.1
      %v1499 = vmul.f32 %v1371, 0.1
      %v1500 = vmul.f32 %v1372, 0.1
      %v1501 = vmul.f32 %v1373, 0.1
      %v1502 = vmul.f32 %v1374, 0.1
      %v1503 = vmul.f32 %v1375, 0.1
      %v1504 = vmul.f32 %v1376, 0.1
      %v1505 = vmul.f32 %v1377, 0.1
      %v1506 = vmul.f32 %v1378, 0.1
      %v1507 = vmul.f32 %v1379, 0.1
      %v1508 = vmul.f32 %v1380, 0.1
      %v1509 = vmul.f32 %v1381, 0.1
      %v1510 = vmul.f32 %v1382, 0.1
      %v1511 = vmul.f32 %v1383, 0.1
      %v1512 = vmul.f32 %v1384, 0.1
      %v1513 = vmul.f32 %v1385, 0.1
      %v1514 = vmul.f32 %v1386, 0.1
      %v1515 = vmul.f32 %v1387, 0.1
      %v1516 = vmul.f32 %v1388, 0.1
      %v1517 = vmul.f32 %v1389, 0.1
      %v1518 = vmul.f32 %v1390, 0.1
      %v1519 = vmul.f32 %v1391, 0.1
      %v1520 = vmul.f32 %v1392, 0.1
      %v1521 = vmul.f32 %v1393, 0.1
      %v1522 = vmul.f32 %v1394, 0.1
      %v1523 = vmul.f32 %v1395, 0.1
      %v1524 = vmul.f32 %v1396, 0.1
      %v1525 = vmul.f32 %v1397, 0.1
      %v1526 = vmul.f32 %v1398, 0.1
      %v1527 = vmul.f32 %v1399, 0.1
      %v1528 = vmul.f32 %v1400, 0.1
      %v1529 = vsel %vm1401, %v1337, %v1465
      %v1530 = vsel %vm1402, %v1338, %v1466
      %v1531 = vsel %vm1403, %v1339, %v1467
      %v1532 = vsel %vm1404, %v1340, %v1468
      %v1533 = vsel %vm1405, %v1341, %v1469
      %v1534 = vsel %vm1406, %v1342, %v1470
      %v1535 = vsel %vm1407, %v1343, %v1471
      %v1536 = vsel %vm1408, %v1344, %v1472
      %v1537 = vsel %vm1409, %v1345, %v1473
      %v1538 = vsel %vm1410, %v1346, %v1474
      %v1539 = vsel %vm1411, %v1347, %v1475
      %v1540 = vsel %vm1412, %v1348, %v1476
      %v1541 = vsel %vm1413, %v1349, %v1477
      %v1542 = vsel %vm1414, %v1350, %v1478
      %v1543 = vsel %vm1415, %v1351, %v1479
      %v1544 = vsel %vm1416, %v1352, %v1480
      %v1545 = vsel %vm1417, %v1353, %v1481
      %v1546 = vsel %vm1418, %v1354, %v1482
      %v1547 = vsel %vm1419, %v1355, %v1483
      %v1548 = vsel %vm1420, %v1356, %v1484
      %v1549 = vsel %vm1421, %v1357, %v1485
      %v1550 = vsel %vm1422, %v1358, %v1486
      %v1551 = vsel %vm1423, %v1359, %v1487
      %v1552 = vsel %vm1424, %v1360, %v1488
      %v1553 = vsel %vm1425, %v1361, %v1489
      %v1554 = vsel %vm1426, %v1362, %v1490
      %v1555 = vsel %vm1427, %v1363, %v1491
      %v1556 = vsel %vm1428, %v1364, %v1492
      %v1557 = vsel %vm1429, %v1365, %v1493
      %v1558 = vsel %vm1430, %v1366, %v1494
      %v1559 = vsel %vm1431, %v1367, %v1495
      %v1560 = vsel %vm1432, %v1368, %v1496
      %v1561 = vsel %vm1433, %v1369, %v1497
      %v1562 = vsel %vm1434, %v1370, %v1498
      %v1563 = vsel %vm1435, %v1371, %v1499
      %v1564 = vsel %vm1436, %v1372, %v1500
      %v1565 = vsel %vm1437, %v1373, %v1501
      %v1566 = vsel %vm1438, %v1374, %v1502
      %v1567 = vsel %vm1439, %v1375, %v1503
      %v1568 = vsel %vm1440, %v1376, %v1504
      %v1569 = vsel %vm1441, %v1377, %v1505
      %v1570 = vsel %vm1442, %v1378, %v1506
      %v1571 = vsel %vm1443, %v1379, %v1507
      %v1572 = vsel %vm1444, %v1380, %v1508
      %v1573 = vsel %vm1445, %v1381, %v1509
      %v1574 = vsel %vm1446, %v1382, %v1510
      %v1575 = vsel %vm1447, %v1383, %v1511
      %v1576 = vsel %vm1448, %v1384, %v1512
      %v1577 = vsel %vm1449, %v1385, %v1513
      %v1578 = vsel %vm1450, %v1386, %v1514
      %v1579 = vsel %vm1451, %v1387, %v1515
      %v1580 = vsel %vm1452, %v1388, %v1516
      %v1581 = vsel %vm1453, %v1389, %v1517
      %v1582 = vsel %vm1454, %v1390, %v1518
      %v1583 = vsel %vm1455, %v1391, %v1519
      %v1584 = vsel %vm1456, %v1392, %v1520
      %v1585 = vsel %vm1457, %v1393, %v1521
      %v1586 = vsel %vm1458, %v1394, %v1522
      %v1587 = vsel %vm1459, %v1395, %v1523
      %v1588 = vsel %vm1460, %v1396, %v1524
      %v1589 = vsel %vm1461, %v1397, %v1525
      %v1590 = vsel %vm1462, %v1398, %v1526
      %v1591 = vsel %vm1463, %v1399, %v1527
      %v1592 = vsel %vm1464, %v1400, %v1528
      %s1593 = scalar_lea.vmem [#allocation2], 24
      %1594 = vst [vmem:[%s1593 + $0x1] sm:$0xff] %v1529
      %1595 = vst [vmem:[%s1593 + $0x9] sm:$0xff] %v1530
      %1596 = vst [vmem:[%s1593 + $0x19] sm:$0xff] %v1531
      %1597 = vst [vmem:[%s1593 + $0x21] sm:$0xff] %v1532
      %1598 = vst [vmem:[%s1593 + $0x31] sm:$0xff] %v1533
      %1599 = vst [vmem:[%s1593 + $0x39] sm:$0xff] %v1534
      %1600 = vst [vmem:[%s1593 + $0x49] sm:$0xff] %v1535
      %1601 = vst [vmem:[%s1593 + $0x51] sm:$0xff] %v1536
      %1602 = vst [vmem:[%s1593 + $0x61] sm:$0xff] %v1537
      %1603 = vst [vmem:[%s1593 + $0x69] sm:$0xff] %v1538
      %1604 = vst [vmem:[%s1593 + $0x79] sm:$0xff] %v1539
      %1605 = vst [vmem:[%s1593 + $0x81] sm:$0xff] %v1540
      %1606 = vst [vmem:[%s1593 + $0x91] sm:$0xff] %v1541
      %1607 = vst [vmem:[%s1593 + $0x99] sm:$0xff] %v1542
      %1608 = vst [vmem:[%s1593 + $0xa9] sm:$0xff] %v1543
      %1609 = vst [vmem:[%s1593 + $0xb1] sm:$0xff] %v1544
      %1610 = vst [vmem:[%s1593 + $0xc1] sm:$0xff] %v1545
      %1611 = vst [vmem:[%s1593 + $0xc9] sm:$0xff] %v1546
      %1612 = vst [vmem:[%s1593 + $0xd9] sm:$0xff] %v1547
      %1613 = vst [vmem:[%s1593 + $0xe1] sm:$0xff] %v1548
      %1614 = vst [vmem:[%s1593 + $0xf1] sm:$0xff] %v1549
      %1615 = vst [vmem:[%s1593 + $0xf9] sm:$0xff] %v1550
      %1616 = vst [vmem:[%s1593 + $0x109] sm:$0xff] %v1551
      %1617 = vst [vmem:[%s1593 + $0x111] sm:$0xff] %v1552
      %1618 = vst [vmem:[%s1593 + $0x121] sm:$0xff] %v1553
      %1619 = vst [vmem:[%s1593 + $0x129] sm:$0xff] %v1554
      %1620 = vst [vmem:[%s1593 + $0x139] sm:$0xff] %v1555
      %1621 = vst [vmem:[%s1593 + $0x141] sm:$0xff] %v1556
      %1622 = vst [vmem:[%s1593 + $0x151] sm:$0xff] %v1557
      %1623 = vst [vmem:[%s1593 + $0x159] sm:$0xff] %v1558
      %1624 = vst [vmem:[%s1593 + $0x169] sm:$0xff] %v1559
      %1625 = vst [vmem:[%s1593 + $0x171] sm:$0xff] %v1560
      %1626 = vst [vmem:[%s1593 + $0x1b1] sm:$0xff] %v1561
      %1627 = vst [vmem:[%s1593 + $0x1b9] sm:$0xff] %v1562
      %1628 = vst [vmem:[%s1593 + $0x1c9] sm:$0xff] %v1563
      %1629 = vst [vmem:[%s1593 + $0x1d1] sm:$0xff] %v1564
      %1630 = vst [vmem:[%s1593 + $0x1e1] sm:$0xff] %v1565
      %1631 = vst [vmem:[%s1593 + $0x1e9] sm:$0xff] %v1566
      %1632 = vst [vmem:[%s1593 + $0x1f9] sm:$0xff] %v1567
      %1633 = vst [vmem:[%s1593 + $0x201] sm:$0xff] %v1568
      %1634 = vst [vmem:[%s1593 + $0x211] sm:$0xff] %v1569
      %1635 = vst [vmem:[%s1593 + $0x219] sm:$0xff] %v1570
      %1636 = vst [vmem:[%s1593 + $0x229] sm:$0xff] %v1571
      %1637 = vst [vmem:[%s1593 + $0x231] sm:$0xff] %v1572
      %1638 = vst [vmem:[%s1593 + $0x241] sm:$0xff] %v1573
      %1639 = vst [vmem:[%s1593 + $0x249] sm:$0xff] %v1574
      %1640 = vst [vmem:[%s1593 + $0x259] sm:$0xff] %v1575
      %1641 = vst [vmem:[%s1593 + $0x261] sm:$0xff] %v1576
      %1642 = vst [vmem:[%s1593 + $0x271] sm:$0xff] %v1577
      %1643 = vst [vmem:[%s1593 + $0x279] sm:$0xff] %v1578
      %1644 = vst [vmem:[%s1593 + $0x289] sm:$0xff] %v1579
      %1645 = vst [vmem:[%s1593 + $0x291] sm:$0xff] %v1580
      %1646 = vst [vmem:[%s1593 + $0x2a1] sm:$0xff] %v1581
      %1647 = vst [vmem:[%s1593 + $0x2a9] sm:$0xff] %v1582
      %1648 = vst [vmem:[%s1593 + $0x2b9] sm:$0xff] %v1583
      %1649 = vst [vmem:[%s1593 + $0x2c1] sm:$0xff] %v1584
      %1650 = vst [vmem:[%s1593 + $0x2d1] sm:$0xff] %v1585
      %1651 = vst [vmem:[%s1593 + $0x2d9] sm:$0xff] %v1586
      %1652 = vst [vmem:[%s1593 + $0x2e9] sm:$0xff] %v1587
      %1653 = vst [vmem:[%s1593 + $0x2f1] sm:$0xff] %v1588
      %1654 = vst [vmem:[%s1593 + $0x301] sm:$0xff] %v1589
      %1655 = vst [vmem:[%s1593 + $0x309] sm:$0xff] %v1590
      %1656 = vst [vmem:[%s1593 + $0x319] sm:$0xff] %v1591
      %1657 = vst [vmem:[%s1593 + $0x321] sm:$0xff] %v1592
      %v1658 = vld [vmem:[#allocation2] sm:$0xff]
      %v1659 = vld [vmem:[#allocation2 + $0x8] sm:$0xff]
      %v1660 = vld [vmem:[#allocation2 + $0x18] sm:$0xff]
      %v1661 = vld [vmem:[#allocation2 + $0x20] sm:$0xff]
      %v1662 = vld [vmem:[#allocation2 + $0x30] sm:$0xff]
      %v1663 = vld [vmem:[#allocation2 + $0x38] sm:$0xff]
      %v1664 = vld [vmem:[#allocation2 + $0x48] sm:$0xff]
      %v1665 = vld [vmem:[#allocation2 + $0x50] sm:$0xff]
      %v1666 = vld [vmem:[#allocation2 + $0x60] sm:$0xff]
      %v1667 = vld [vmem:[#allocation2 + $0x68] sm:$0xff]
      %v1668 = vld [vmem:[#allocation2 + $0x78] sm:$0xff]
      %v1669 = vld [vmem:[#allocation2 + $0x80] sm:$0xff]
      %v1670 = vld [vmem:[#allocation2 + $0x90] sm:$0xff]
      %v1671 = vld [vmem:[#allocation2 + $0x98] sm:$0xff]
      %v1672 = vld [vmem:[#allocation2 + $0xa8] sm:$0xff]
      %v1673 = vld [vmem:[#allocation2 + $0xb0] sm:$0xff]
      %v1674 = vld [vmem:[#allocation2 + $0xc0] sm:$0xff]
      %v1675 = vld [vmem:[#allocation2 + $0xc8] sm:$0xff]
      %v1676 = vld [vmem:[#allocation2 + $0xd8] sm:$0xff]
      %v1677 = vld [vmem:[#allocation2 + $0xe0] sm:$0xff]
      %v1678 = vld [vmem:[#allocation2 + $0xf0] sm:$0xff]
      %v1679 = vld [vmem:[#allocation2 + $0xf8] sm:$0xff]
      %v1680 = vld [vmem:[#allocation2 + $0x108] sm:$0xff]
      %v1681 = vld [vmem:[#allocation2 + $0x110] sm:$0xff]
      %v1682 = vld [vmem:[#allocation2 + $0x120] sm:$0xff]
      %v1683 = vld [vmem:[#allocation2 + $0x128] sm:$0xff]
      %v1684 = vld [vmem:[#allocation2 + $0x138] sm:$0xff]
      %v1685 = vld [vmem:[#allocation2 + $0x140] sm:$0xff]
      %v1686 = vld [vmem:[#allocation2 + $0x150] sm:$0xff]
      %v1687 = vld [vmem:[#allocation2 + $0x158] sm:$0xff]
      %v1688 = vld [vmem:[#allocation2 + $0x168] sm:$0xff]
      %v1689 = vld [vmem:[#allocation2 + $0x170] sm:$0xff]
      %v1690 = vld [vmem:[#allocation2 + $0x180] sm:$0xff]
      %v1691 = vld [vmem:[#allocation2 + $0x188] sm:$0xff]
      %v1692 = vld [vmem:[#allocation2 + $0x198] sm:$0xff]
      %v1693 = vld [vmem:[#allocation2 + $0x1a0] sm:$0xff]
      %v1694 = vld [vmem:[#allocation2 + $0x1b0] sm:$0xff]
      %v1695 = vld [vmem:[#allocation2 + $0x1b8] sm:$0xff]
      %v1696 = vld [vmem:[#allocation2 + $0x1c8] sm:$0xff]
      %v1697 = vld [vmem:[#allocation2 + $0x1d0] sm:$0xff]
      %v1698 = vld [vmem:[#allocation2 + $0x1e0] sm:$0xff]
      %v1699 = vld [vmem:[#allocation2 + $0x1e8] sm:$0xff]
      %v1700 = vld [vmem:[#allocation2 + $0x1f8] sm:$0xff]
      %v1701 = vld [vmem:[#allocation2 + $0x200] sm:$0xff]
      %v1702 = vld [vmem:[#allocation2 + $0x210] sm:$0xff]
      %v1703 = vld [vmem:[#allocation2 + $0x218] sm:$0xff]
      %v1704 = vld [vmem:[#allocation2 + $0x228] sm:$0xff]
      %v1705 = vld [vmem:[#allocation2 + $0x230] sm:$0xff]
      %v1706 = vld [vmem:[#allocation2 + $0x240] sm:$0xff]
      %v1707 = vld [vmem:[#allocation2 + $0x248] sm:$0xff]
      %v1708 = vld [vmem:[#allocation2 + $0x258] sm:$0xff]
      %v1709 = vld [vmem:[#allocation2 + $0x260] sm:$0xff]
      %v1710 = vld [vmem:[#allocation2 + $0x270] sm:$0xff]
      %v1711 = vld [vmem:[#allocation2 + $0x278] sm:$0xff]
      %v1712 = vld [vmem:[#allocation2 + $0x288] sm:$0xff]
      %v1713 = vld [vmem:[#allocation2 + $0x290] sm:$0xff]
      %v1714 = vld [vmem:[#allocation2 + $0x2a0] sm:$0xff]
      %v1715 = vld [vmem:[#allocation2 + $0x2a8] sm:$0xff]
      %v1716 = vld [vmem:[#allocation2 + $0x2b8] sm:$0xff]
      %v1717 = vld [vmem:[#allocation2 + $0x2c0] sm:$0xff]
      %v1718 = vld [vmem:[#allocation2 + $0x2d0] sm:$0xff]
      %v1719 = vld [vmem:[#allocation2 + $0x2d8] sm:$0xff]
      %v1720 = vld [vmem:[#allocation2 + $0x2e8] sm:$0xff]
      %v1721 = vld [vmem:[#allocation2 + $0x2f0] sm:$0xff]
      %v1722 = vld [vmem:[#allocation2 + $0x300] sm:$0xff]
      %v1723 = vld [vmem:[#allocation2 + $0x308] sm:$0xff]
      %v1724 = vld [vmem:[#allocation2 + $0x318] sm:$0xff]
      %v1725 = vld [vmem:[#allocation2 + $0x320] sm:$0xff]
      %v1726 = vld [vmem:[#allocation2 + $0x330] sm:$0xff]
      %v1727 = vld [vmem:[#allocation2 + $0x338] sm:$0xff]
      %v1728 = vld [vmem:[#allocation2 + $0x348] sm:$0xff]
      %v1729 = vld [vmem:[#allocation2 + $0x350] sm:$0xff]
      %v1730 = vpack.c.bf16 %v1659, %v1658
      %v1731 = vpack.c.bf16 %v1661, %v1660
      %v1732 = vpack.c.bf16 %v1663, %v1662
      %v1733 = vpack.c.bf16 %v1665, %v1664
      %v1734 = vpack.c.bf16 %v1667, %v1666
      %v1735 = vpack.c.bf16 %v1669, %v1668
      %v1736 = vpack.c.bf16 %v1671, %v1670
      %v1737 = vpack.c.bf16 %v1673, %v1672
      %v1738 = vpack.c.bf16 %v1675, %v1674
      %v1739 = vpack.c.bf16 %v1677, %v1676
      %v1740 = vpack.c.bf16 %v1679, %v1678
      %v1741 = vpack.c.bf16 %v1681, %v1680
      %v1742 = vpack.c.bf16 %v1683, %v1682
      %v1743 = vpack.c.bf16 %v1685, %v1684
      %v1744 = vpack.c.bf16 %v1687, %v1686
      %v1745 = vpack.c.bf16 %v1689, %v1688
      %v1746 = vpack.c.bf16 %v1691, %v1690
      %v1747 = vpack.c.bf16 %v1693, %v1692
      %v1748 = vpack.c.bf16 %v1695, %v1694
      %v1749 = vpack.c.bf16 %v1697, %v1696
      %v1750 = vpack.c.bf16 %v1699, %v1698
      %v1751 = vpack.c.bf16 %v1701, %v1700
      %v1752 = vpack.c.bf16 %v1703, %v1702
      %v1753 = vpack.c.bf16 %v1705, %v1704
      %v1754 = vpack.c.bf16 %v1707, %v1706
      %v1755 = vpack.c.bf16 %v1709, %v1708
      %v1756 = vpack.c.bf16 %v1711, %v1710
      %v1757 = vpack.c.bf16 %v1713, %v1712
      %v1758 = vpack.c.bf16 %v1715, %v1714
      %v1759 = vpack.c.bf16 %v1717, %v1716
      %v1760 = vpack.c.bf16 %v1719, %v1718
      %v1761 = vpack.c.bf16 %v1721, %v1720
      %v1762 = vpack.c.bf16 %v1723, %v1722
      %v1763 = vpack.c.bf16 %v1725, %v1724
      %v1764 = vpack.c.bf16 %v1727, %v1726
      %v1765 = vpack.c.bf16 %v1729, %v1728
      %v1766 = vld [vmem:[#allocation2 + $0x1] sm:$0xff]
      %v1767 = vld [vmem:[#allocation2 + $0x9] sm:$0xff]
      %v1768 = vld [vmem:[#allocation2 + $0x19] sm:$0xff]
      %v1769 = vld [vmem:[#allocation2 + $0x21] sm:$0xff]
      %v1770 = vld [vmem:[#allocation2 + $0x31] sm:$0xff]
      %v1771 = vld [vmem:[#allocation2 + $0x39] sm:$0xff]
      %v1772 = vld [vmem:[#allocation2 + $0x49] sm:$0xff]
      %v1773 = vld [vmem:[#allocation2 + $0x51] sm:$0xff]
      %v1774 = vld [vmem:[#allocation2 + $0x61] sm:$0xff]
      %v1775 = vld [vmem:[#allocation2 + $0x69] sm:$0xff]
      %v1776 = vld [vmem:[#allocation2 + $0x79] sm:$0xff]
      %v1777 = vld [vmem:[#allocation2 + $0x81] sm:$0xff]
      %v1778 = vld [vmem:[#allocation2 + $0x91] sm:$0xff]
      %v1779 = vld [vmem:[#allocation2 + $0x99] sm:$0xff]
      %v1780 = vld [vmem:[#allocation2 + $0xa9] sm:$0xff]
      %v1781 = vld [vmem:[#allocation2 + $0xb1] sm:$0xff]
      %v1782 = vld [vmem:[#allocation2 + $0xc1] sm:$0xff]
      %v1783 = vld [vmem:[#allocation2 + $0xc9] sm:$0xff]
      %v1784 = vld [vmem:[#allocation2 + $0xd9] sm:$0xff]
      %v1785 = vld [vmem:[#allocation2 + $0xe1] sm:$0xff]
      %v1786 = vld [vmem:[#allocation2 + $0xf1] sm:$0xff]
      %v1787 = vld [vmem:[#allocation2 + $0xf9] sm:$0xff]
      %v1788 = vld [vmem:[#allocation2 + $0x109] sm:$0xff]
      %v1789 = vld [vmem:[#allocation2 + $0x111] sm:$0xff]
      %v1790 = vld [vmem:[#allocation2 + $0x121] sm:$0xff]
      %v1791 = vld [vmem:[#allocation2 + $0x129] sm:$0xff]
      %v1792 = vld [vmem:[#allocation2 + $0x139] sm:$0xff]
      %v1793 = vld [vmem:[#allocation2 + $0x141] sm:$0xff]
      %v1794 = vld [vmem:[#allocation2 + $0x151] sm:$0xff]
      %v1795 = vld [vmem:[#allocation2 + $0x159] sm:$0xff]
      %v1796 = vld [vmem:[#allocation2 + $0x169] sm:$0xff]
      %v1797 = vld [vmem:[#allocation2 + $0x171] sm:$0xff]
      %v1798 = vld [vmem:[#allocation2 + $0x181] sm:$0xff]
      %v1799 = vld [vmem:[#allocation2 + $0x189] sm:$0xff]
      %v1800 = vld [vmem:[#allocation2 + $0x199] sm:$0xff]
      %v1801 = vld [vmem:[#allocation2 + $0x1a1] sm:$0xff]
      %v1802 = vld [vmem:[#allocation2 + $0x1b1] sm:$0xff]
      %v1803 = vld [vmem:[#allocation2 + $0x1b9] sm:$0xff]
      %v1804 = vld [vmem:[#allocation2 + $0x1c9] sm:$0xff]
      %v1805 = vld [vmem:[#allocation2 + $0x1d1] sm:$0xff]
      %v1806 = vld [vmem:[#allocation2 + $0x1e1] sm:$0xff]
      %v1807 = vld [vmem:[#allocation2 + $0x1e9] sm:$0xff]
      %v1808 = vld [vmem:[#allocation2 + $0x1f9] sm:$0xff]
      %v1809 = vld [vmem:[#allocation2 + $0x201] sm:$0xff]
      %v1810 = vld [vmem:[#allocation2 + $0x211] sm:$0xff]
      %v1811 = vld [vmem:[#allocation2 + $0x219] sm:$0xff]
      %v1812 = vld [vmem:[#allocation2 + $0x229] sm:$0xff]
      %v1813 = vld [vmem:[#allocation2 + $0x231] sm:$0xff]
      %v1814 = vld [vmem:[#allocation2 + $0x241] sm:$0xff]
      %v1815 = vld [vmem:[#allocation2 + $0x249] sm:$0xff]
      %v1816 = vld [vmem:[#allocation2 + $0x259] sm:$0xff]
      %v1817 = vld [vmem:[#allocation2 + $0x261] sm:$0xff]
      %v1818 = vld [vmem:[#allocation2 + $0x271] sm:$0xff]
      %v1819 = vld [vmem:[#allocation2 + $0x279] sm:$0xff]
      %v1820 = vld [vmem:[#allocation2 + $0x289] sm:$0xff]
      %v1821 = vld [vmem:[#allocation2 + $0x291] sm:$0xff]
      %v1822 = vld [vmem:[#allocation2 + $0x2a1] sm:$0xff]
      %v1823 = vld [vmem:[#allocation2 + $0x2a9] sm:$0xff]
      %v1824 = vld [vmem:[#allocation2 + $0x2b9] sm:$0xff]
      %v1825 = vld [vmem:[#allocation2 + $0x2c1] sm:$0xff]
      %v1826 = vld [vmem:[#allocation2 + $0x2d1] sm:$0xff]
      %v1827 = vld [vmem:[#allocation2 + $0x2d9] sm:$0xff]
      %v1828 = vld [vmem:[#allocation2 + $0x2e9] sm:$0xff]
      %v1829 = vld [vmem:[#allocation2 + $0x2f1] sm:$0xff]
      %v1830 = vld [vmem:[#allocation2 + $0x301] sm:$0xff]
      %v1831 = vld [vmem:[#allocation2 + $0x309] sm:$0xff]
      %v1832 = vld [vmem:[#allocation2 + $0x319] sm:$0xff]
      %v1833 = vld [vmem:[#allocation2 + $0x321] sm:$0xff]
      %v1834 = vld [vmem:[#allocation2 + $0x331] sm:$0xff]
      %v1835 = vld [vmem:[#allocation2 + $0x339] sm:$0xff]
      %v1836 = vld [vmem:[#allocation2 + $0x349] sm:$0xff]
      %v1837 = vld [vmem:[#allocation2 + $0x351] sm:$0xff]
      %v1838 = vpack.c.bf16 %v1767, %v1766
      %v1839 = vpack.c.bf16 %v1769, %v1768
      %v1840 = vpack.c.bf16 %v1771, %v1770
      %v1841 = vpack.c.bf16 %v1773, %v1772
      %v1842 = vpack.c.bf16 %v1775, %v1774
      %v1843 = vpack.c.bf16 %v1777, %v1776
      %v1844 = vpack.c.bf16 %v1779, %v1778
      %v1845 = vpack.c.bf16 %v1781, %v1780
      %v1846 = vpack.c.bf16 %v1783, %v1782
      %v1847 = vpack.c.bf16 %v1785, %v1784
      %v1848 = vpack.c.bf16 %v1787, %v1786
      %v1849 = vpack.c.bf16 %v1789, %v1788
      %v1850 = vpack.c.bf16 %v1791, %v1790
      %v1851 = vpack.c.bf16 %v1793, %v1792
      %v1852 = vpack.c.bf16 %v1795, %v1794
      %v1853 = vpack.c.bf16 %v1797, %v1796
      %v1854 = vpack.c.bf16 %v1799, %v1798
      %v1855 = vpack.c.bf16 %v1801, %v1800
      %v1856 = vpack.c.bf16 %v1803, %v1802
      %v1857 = vpack.c.bf16 %v1805, %v1804
      %v1858 = vpack.c.bf16 %v1807, %v1806
      %v1859 = vpack.c.bf16 %v1809, %v1808
      %v1860 = vpack.c.bf16 %v1811, %v1810
      %v1861 = vpack.c.bf16 %v1813, %v1812
      %v1862 = vpack.c.bf16 %v1815, %v1814
      %v1863 = vpack.c.bf16 %v1817, %v1816
      %v1864 = vpack.c.bf16 %v1819, %v1818
      %v1865 = vpack.c.bf16 %v1821, %v1820
      %v1866 = vpack.c.bf16 %v1823, %v1822
      %v1867 = vpack.c.bf16 %v1825, %v1824
      %v1868 = vpack.c.bf16 %v1827, %v1826
      %v1869 = vpack.c.bf16 %v1829, %v1828
      %v1870 = vpack.c.bf16 %v1831, %v1830
      %v1871 = vpack.c.bf16 %v1833, %v1832
      %v1872 = vpack.c.bf16 %v1835, %v1834
      %v1873 = vpack.c.bf16 %v1837, %v1836
      %v1874 = vld [vmem:[#allocation2 + $0x2] sm:$0xff]
      %v1875 = vld [vmem:[#allocation2 + $0xa] sm:$0xff]
      %v1876 = vld [vmem:[#allocation2 + $0x1a] sm:$0xff]
      %v1877 = vld [vmem:[#allocation2 + $0x22] sm:$0xff]
      %v1878 = vld [vmem:[#allocation2 + $0x32] sm:$0xff]
      %v1879 = vld [vmem:[#allocation2 + $0x3a] sm:$0xff]
      %v1880 = vld [vmem:[#allocation2 + $0x4a] sm:$0xff]
      %v1881 = vld [vmem:[#allocation2 + $0x52] sm:$0xff]
      %v1882 = vld [vmem:[#allocation2 + $0x62] sm:$0xff]
      %v1883 = vld [vmem:[#allocation2 + $0x6a] sm:$0xff]
      %v1884 = vld [vmem:[#allocation2 + $0x7a] sm:$0xff]
      %v1885 = vld [vmem:[#allocation2 + $0x82] sm:$0xff]
      %v1886 = vld [vmem:[#allocation2 + $0x92] sm:$0xff]
      %v1887 = vld [vmem:[#allocation2 + $0x9a] sm:$0xff]
      %v1888 = vld [vmem:[#allocation2 + $0xaa] sm:$0xff]
      %v1889 = vld [vmem:[#allocation2 + $0xb2] sm:$0xff]
      %v1890 = vld [vmem:[#allocation2 + $0xc2] sm:$0xff]
      %v1891 = vld [vmem:[#allocation2 + $0xca] sm:$0xff]
      %v1892 = vld [vmem:[#allocation2 + $0xda] sm:$0xff]
      %v1893 = vld [vmem:[#allocation2 + $0xe2] sm:$0xff]
      %v1894 = vld [vmem:[#allocation2 + $0xf2] sm:$0xff]
      %v1895 = vld [vmem:[#allocation2 + $0xfa] sm:$0xff]
      %v1896 = vld [vmem:[#allocation2 + $0x10a] sm:$0xff]
      %v1897 = vld [vmem:[#allocation2 + $0x112] sm:$0xff]
      %v1898 = vld [vmem:[#allocation2 + $0x122] sm:$0xff]
      %v1899 = vld [vmem:[#allocation2 + $0x12a] sm:$0xff]
      %v1900 = vld [vmem:[#allocation2 + $0x13a] sm:$0xff]
      %v1901 = vld [vmem:[#allocation2 + $0x142] sm:$0xff]
      %v1902 = vld [vmem:[#allocation2 + $0x152] sm:$0xff]
      %v1903 = vld [vmem:[#allocation2 + $0x15a] sm:$0xff]
      %v1904 = vld [vmem:[#allocation2 + $0x16a] sm:$0xff]
      %v1905 = vld [vmem:[#allocation2 + $0x172] sm:$0xff]
      %v1906 = vld [vmem:[#allocation2 + $0x182] sm:$0xff]
      %v1907 = vld [vmem:[#allocation2 + $0x18a] sm:$0xff]
      %v1908 = vld [vmem:[#allocation2 + $0x19a] sm:$0xff]
      %v1909 = vld [vmem:[#allocation2 + $0x1a2] sm:$0xff]
      %v1910 = vld [vmem:[#allocation2 + $0x1b2] sm:$0xff]
      %v1911 = vld [vmem:[#allocation2 + $0x1ba] sm:$0xff]
      %v1912 = vld [vmem:[#allocation2 + $0x1ca] sm:$0xff]
      %v1913 = vld [vmem:[#allocation2 + $0x1d2] sm:$0xff]
      %v1914 = vld [vmem:[#allocation2 + $0x1e2] sm:$0xff]
      %v1915 = vld [vmem:[#allocation2 + $0x1ea] sm:$0xff]
      %v1916 = vld [vmem:[#allocation2 + $0x1fa] sm:$0xff]
      %v1917 = vld [vmem:[#allocation2 + $0x202] sm:$0xff]
      %v1918 = vld [vmem:[#allocation2 + $0x212] sm:$0xff]
      %v1919 = vld [vmem:[#allocation2 + $0x21a] sm:$0xff]
      %v1920 = vld [vmem:[#allocation2 + $0x22a] sm:$0xff]
      %v1921 = vld [vmem:[#allocation2 + $0x232] sm:$0xff]
      %v1922 = vld [vmem:[#allocation2 + $0x242] sm:$0xff]
      %v1923 = vld [vmem:[#allocation2 + $0x24a] sm:$0xff]
      %v1924 = vld [vmem:[#allocation2 + $0x25a] sm:$0xff]
      %v1925 = vld [vmem:[#allocation2 + $0x262] sm:$0xff]
      %v1926 = vld [vmem:[#allocation2 + $0x272] sm:$0xff]
      %v1927 = vld [vmem:[#allocation2 + $0x27a] sm:$0xff]
      %v1928 = vld [vmem:[#allocation2 + $0x28a] sm:$0xff]
      %v1929 = vld [vmem:[#allocation2 + $0x292] sm:$0xff]
      %v1930 = vld [vmem:[#allocation2 + $0x2a2] sm:$0xff]
      %v1931 = vld [vmem:[#allocation2 + $0x2aa] sm:$0xff]
      %v1932 = vld [vmem:[#allocation2 + $0x2ba] sm:$0xff]
      %v1933 = vld [vmem:[#allocation2 + $0x2c2] sm:$0xff]
      %v1934 = vld [vmem:[#allocation2 + $0x2d2] sm:$0xff]
      %v1935 = vld [vmem:[#allocation2 + $0x2da] sm:$0xff]
      %v1936 = vld [vmem:[#allocation2 + $0x2ea] sm:$0xff]
      %v1937 = vld [vmem:[#allocation2 + $0x2f2] sm:$0xff]
      %v1938 = vld [vmem:[#allocation2 + $0x302] sm:$0xff]
      %v1939 = vld [vmem:[#allocation2 + $0x30a] sm:$0xff]
      %v1940 = vld [vmem:[#allocation2 + $0x31a] sm:$0xff]
      %v1941 = vld [vmem:[#allocation2 + $0x322] sm:$0xff]
      %v1942 = vld [vmem:[#allocation2 + $0x332] sm:$0xff]
      %v1943 = vld [vmem:[#allocation2 + $0x33a] sm:$0xff]
      %v1944 = vld [vmem:[#allocation2 + $0x34a] sm:$0xff]
      %v1945 = vld [vmem:[#allocation2 + $0x352] sm:$0xff]
      %v1946 = vpack.c.bf16 %v1875, %v1874
      %v1947 = vpack.c.bf16 %v1877, %v1876
      %v1948 = vpack.c.bf16 %v1879, %v1878
      %v1949 = vpack.c.bf16 %v1881, %v1880
      %v1950 = vpack.c.bf16 %v1883, %v1882
      %v1951 = vpack.c.bf16 %v1885, %v1884
      %v1952 = vpack.c.bf16 %v1887, %v1886
      %v1953 = vpack.c.bf16 %v1889, %v1888
      %v1954 = vpack.c.bf16 %v1891, %v1890
      %v1955 = vpack.c.bf16 %v1893, %v1892
      %v1956 = vpack.c.bf16 %v1895, %v1894
      %v1957 = vpack.c.bf16 %v1897, %v1896
      %v1958 = vpack.c.bf16 %v1899, %v1898
      %v1959 = vpack.c.bf16 %v1901, %v1900
      %v1960 = vpack.c.bf16 %v1903, %v1902
      %v1961 = vpack.c.bf16 %v1905, %v1904
      %v1962 = vpack.c.bf16 %v1907, %v1906
      %v1963 = vpack.c.bf16 %v1909, %v1908
      %v1964 = vpack.c.bf16 %v1911, %v1910
      %v1965 = vpack.c.bf16 %v1913, %v1912
      %v1966 = vpack.c.bf16 %v1915, %v1914
      %v1967 = vpack.c.bf16 %v1917, %v1916
      %v1968 = vpack.c.bf16 %v1919, %v1918
      %v1969 = vpack.c.bf16 %v1921, %v1920
      %v1970 = vpack.c.bf16 %v1923, %v1922
      %v1971 = vpack.c.bf16 %v1925, %v1924
      %v1972 = vpack.c.bf16 %v1927, %v1926
      %v1973 = vpack.c.bf16 %v1929, %v1928
      %v1974 = vpack.c.bf16 %v1931, %v1930
      %v1975 = vpack.c.bf16 %v1933, %v1932
      %v1976 = vpack.c.bf16 %v1935, %v1934
      %v1977 = vpack.c.bf16 %v1937, %v1936
      %v1978 = vpack.c.bf16 %v1939, %v1938
      %v1979 = vpack.c.bf16 %v1941, %v1940
      %v1980 = vpack.c.bf16 %v1943, %v1942
      %v1981 = vpack.c.bf16 %v1945, %v1944
      %v1982 = vld [vmem:[%s307] sm:$0xf]
      %v1983 = vld [vmem:[%s307 + $0x4] sm:$0xf]
      %v1984 = vld [vmem:[%s307 + $0x8] sm:$0xf]
      %v1985 = vld [vmem:[%s307 + $0xc] sm:$0xf]
      %v1986 = vld [vmem:[%s307 + $0x10] sm:$0xf]
      %v1987 = vld [vmem:[%s307 + $0x14] sm:$0xf]
      %v1988 = vld [vmem:[%s307 + $0x18] sm:$0xf]
      %v1989 = vld [vmem:[%s307 + $0x1c] sm:$0xf]
      %v1990 = vld [vmem:[%s307 + $0x20] sm:$0xf]
      %v1991 = vld [vmem:[%s307 + $0x24] sm:$0xf]
      %v1992 = vld [vmem:[%s307 + $0x28] sm:$0xf]
      %v1993 = vld [vmem:[%s307 + $0x2c] sm:$0xf]
      %v1994 = vld [vmem:[%s307 + $0x30] sm:$0xf]
      %v1995 = vld [vmem:[%s307 + $0x34] sm:$0xf]
      %v1996 = vld [vmem:[%s307 + $0x38] sm:$0xf]
      %v1997 = vld [vmem:[%s307 + $0x3c] sm:$0xf]
      %v1998 = vld [vmem:[%s307 + $0x40] sm:$0xf]
      %v1999 = vld [vmem:[%s307 + $0x44] sm:$0xf]
      %v2000 = vld [vmem:[%s307 + $0x48] sm:$0xf]
      %v2001 = vld [vmem:[%s307 + $0x4c] sm:$0xf]
      %v2002 = vld [vmem:[%s307 + $0x50] sm:$0xf]
      %v2003 = vld [vmem:[%s307 + $0x54] sm:$0xf]
      %v2004 = vld [vmem:[%s307 + $0x58] sm:$0xf]
      %v2005 = vld [vmem:[%s307 + $0x5c] sm:$0xf]
      %v2006 = vld [vmem:[%s307 + $0x60] sm:$0xf]
      %v2007 = vld [vmem:[%s307 + $0x64] sm:$0xf]
      %v2008 = vld [vmem:[%s307 + $0x68] sm:$0xf]
      %v2009 = vld [vmem:[%s307 + $0x6c] sm:$0xf]
      %v2010 = vld [vmem:[%s307 + $0x70] sm:$0xf]
      %v2011 = vld [vmem:[%s307 + $0x74] sm:$0xf]
      %v2012 = vld [vmem:[%s307 + $0x78] sm:$0xf]
      %v2013 = vld [vmem:[%s307 + $0x7c] sm:$0xf]
      %v2014 = vld [vmem:[%s307 + $0x80] sm:$0xf]
      %v2015 = vld [vmem:[%s307 + $0x84] sm:$0xf]
      %v2016 = vld [vmem:[%s307 + $0x88] sm:$0xf]
      %v2017 = vld [vmem:[%s307 + $0x8c] sm:$0xf]
      %v2018 = vld [vmem:[%s307 + $0x90] sm:$0xf]
      %v2019 = vld [vmem:[%s307 + $0x94] sm:$0xf]
      %v2020 = vld [vmem:[%s307 + $0x98] sm:$0xf]
      %v2021 = vld [vmem:[%s307 + $0x9c] sm:$0xf]
      %v2022 = vld [vmem:[%s307 + $0xa0] sm:$0xf]
      %v2023 = vld [vmem:[%s307 + $0xa4] sm:$0xf]
      %v2024 = vld [vmem:[%s307 + $0xa8] sm:$0xf]
      %v2025 = vld [vmem:[%s307 + $0xac] sm:$0xf]
      %v2026 = vld [vmem:[%s307 + $0xb0] sm:$0xf]
      %v2027 = vld [vmem:[%s307 + $0xb4] sm:$0xf]
      %v2028 = vld [vmem:[%s307 + $0xb8] sm:$0xf]
      %v2029 = vld [vmem:[%s307 + $0xbc] sm:$0xf]
      %s2030 = scalar_lea.vmem %s307, 192
      %v2031 = vld [vmem:[%s2030] sm:$0xf]
      %v2032 = vld [vmem:[%s2030 + $0x4] sm:$0xf]
      %v2033 = vld [vmem:[%s2030 + $0x8] sm:$0xf]
      %v2034 = vld [vmem:[%s2030 + $0xc] sm:$0xf]
      %v2035 = vld [vmem:[%s2030 + $0x10] sm:$0xf]
      %v2036 = vld [vmem:[%s2030 + $0x14] sm:$0xf]
      %v2037 = vld [vmem:[%s2030 + $0x18] sm:$0xf]
      %v2038 = vld [vmem:[%s2030 + $0x1c] sm:$0xf]
      %v2039 = vld [vmem:[%s2030 + $0x20] sm:$0xf]
      %v2040 = vld [vmem:[%s2030 + $0x24] sm:$0xf]
      %v2041 = vld [vmem:[%s2030 + $0x28] sm:$0xf]
      %v2042 = vld [vmem:[%s2030 + $0x2c] sm:$0xf]
      %v2043 = vld [vmem:[%s2030 + $0x30] sm:$0xf]
      %v2044 = vld [vmem:[%s2030 + $0x34] sm:$0xf]
      %v2045 = vld [vmem:[%s2030 + $0x38] sm:$0xf]
      %v2046 = vld [vmem:[%s2030 + $0x3c] sm:$0xf]
      %v2047 = vld [vmem:[%s2030 + $0x40] sm:$0xf]
      %v2048 = vld [vmem:[%s2030 + $0x44] sm:$0xf]
      %v2049 = vld [vmem:[%s2030 + $0x48] sm:$0xf]
      %v2050 = vld [vmem:[%s2030 + $0x4c] sm:$0xf]
      %v2051 = vld [vmem:[%s2030 + $0x50] sm:$0xf]
      %v2052 = vld [vmem:[%s2030 + $0x54] sm:$0xf]
      %v2053 = vld [vmem:[%s2030 + $0x58] sm:$0xf]
      %v2054 = vld [vmem:[%s2030 + $0x5c] sm:$0xf]
      %v2055 = vld [vmem:[%s2030 + $0x60] sm:$0xf]
      %v2056 = vld [vmem:[%s2030 + $0x64] sm:$0xf]
      %v2057 = vld [vmem:[%s2030 + $0x68] sm:$0xf]
      %v2058 = vld [vmem:[%s2030 + $0x6c] sm:$0xf]
      %v2059 = vld [vmem:[%s2030 + $0x70] sm:$0xf]
      %v2060 = vld [vmem:[%s2030 + $0x74] sm:$0xf]
      %v2061 = vld [vmem:[%s2030 + $0x78] sm:$0xf]
      %v2062 = vld [vmem:[%s2030 + $0x7c] sm:$0xf]
      %v2063 = vld [vmem:[%s2030 + $0x80] sm:$0xf]
      %v2064 = vld [vmem:[%s2030 + $0x84] sm:$0xf]
      %v2065 = vld [vmem:[%s2030 + $0x88] sm:$0xf]
      %v2066 = vld [vmem:[%s2030 + $0x8c] sm:$0xf]
      %v2067 = vld [vmem:[%s2030 + $0x90] sm:$0xf]
      %v2068 = vld [vmem:[%s2030 + $0x94] sm:$0xf]
      %v2069 = vld [vmem:[%s2030 + $0x98] sm:$0xf]
      %v2070 = vld [vmem:[%s2030 + $0x9c] sm:$0xf]
      %v2071 = vld [vmem:[%s2030 + $0xa0] sm:$0xf]
      %v2072 = vld [vmem:[%s2030 + $0xa4] sm:$0xf]
      %v2073 = vld [vmem:[%s2030 + $0xa8] sm:$0xf]
      %v2074 = vld [vmem:[%s2030 + $0xac] sm:$0xf]
      %v2075 = vld [vmem:[%s2030 + $0xb0] sm:$0xf]
      %v2076 = vld [vmem:[%s2030 + $0xb4] sm:$0xf]
      %v2077 = vld [vmem:[%s2030 + $0xb8] sm:$0xf]
      %v2078 = vld [vmem:[%s2030 + $0xbc] sm:$0xf]
      %v2127 = vunpack.c.l.b16 %v2031
      %v2128 = vunpack.c.l.b16 %v2032
      %v2129 = vunpack.c.l.b16 %v2033
      %v2130 = vunpack.c.l.b16 %v2034
      %v2131 = vunpack.c.l.b16 %v2035
      %v2132 = vunpack.c.l.b16 %v2036
      %v2133 = vunpack.c.l.b16 %v2037
      %v2134 = vunpack.c.l.b16 %v2038
      %v2135 = vunpack.c.l.b16 %v2039
      %v2136 = vunpack.c.l.b16 %v2040
      %v2137 = vunpack.c.l.b16 %v2041
      %v2138 = vunpack.c.l.b16 %v2042
      %v2139 = vunpack.c.l.b16 %v2043
      %v2140 = vunpack.c.l.b16 %v2044
      %v2141 = vunpack.c.l.b16 %v2045
      %v2142 = vunpack.c.l.b16 %v2046
      %v2143 = vunpack.c.l.b16 %v2047
      %v2144 = vunpack.c.l.b16 %v2048
      %v2145 = vunpack.c.l.b16 %v2049
      %v2146 = vunpack.c.l.b16 %v2050
      %v2147 = vunpack.c.l.b16 %v2051
      %v2148 = vunpack.c.l.b16 %v2052
      %v2149 = vunpack.c.l.b16 %v2053
      %v2150 = vunpack.c.l.b16 %v2054
      %v2151 = vunpack.c.l.b16 %v2055
      %v2152 = vunpack.c.l.b16 %v2056
      %v2153 = vunpack.c.l.b16 %v2057
      %v2154 = vunpack.c.l.b16 %v2058
      %v2155 = vunpack.c.l.b16 %v2059
      %v2156 = vunpack.c.l.b16 %v2060
      %v2157 = vunpack.c.l.b16 %v2061
      %v2158 = vunpack.c.l.b16 %v2062
      %v2159 = vunpack.c.l.b16 %v2063
      %v2160 = vunpack.c.l.b16 %v2064
      %v2161 = vunpack.c.l.b16 %v2065
      %v2162 = vunpack.c.l.b16 %v2066
      %v2163 = vunpack.c.l.b16 %v2067
      %v2164 = vunpack.c.l.b16 %v2068
      %v2165 = vunpack.c.l.b16 %v2069
      %v2166 = vunpack.c.l.b16 %v2070
      %v2167 = vunpack.c.l.b16 %v2071
      %v2168 = vunpack.c.l.b16 %v2072
      %v2169 = vunpack.c.l.b16 %v2073
      %v2170 = vunpack.c.l.b16 %v2074
      %v2171 = vunpack.c.l.b16 %v2075
      %v2172 = vunpack.c.l.b16 %v2076
      %v2173 = vunpack.c.l.b16 %v2077
      %v2174 = vunpack.c.l.b16 %v2078
      %v2175 = vpack.c.b16 %v2128, %v2127
      %v2176 = vpack.c.b16 %v2130, %v2129
      %v2177 = vpack.c.b16 %v2132, %v2131
      %v2178 = vpack.c.b16 %v2134, %v2133
      %v2179 = vpack.c.b16 %v2136, %v2135
      %v2180 = vpack.c.b16 %v2138, %v2137
      %v2181 = vpack.c.b16 %v2140, %v2139
      %v2182 = vpack.c.b16 %v2142, %v2141
      %v2183 = vpack.c.b16 %v2144, %v2143
      %v2184 = vpack.c.b16 %v2146, %v2145
      %v2185 = vpack.c.b16 %v2148, %v2147
      %v2186 = vpack.c.b16 %v2150, %v2149
      %v2187 = vpack.c.b16 %v2152, %v2151
      %v2188 = vpack.c.b16 %v2154, %v2153
      %v2189 = vpack.c.b16 %v2156, %v2155
      %v2190 = vpack.c.b16 %v2158, %v2157
      %v2191 = vpack.c.b16 %v2160, %v2159
      %v2192 = vpack.c.b16 %v2162, %v2161
      %v2193 = vpack.c.b16 %v2164, %v2163
      %v2194 = vpack.c.b16 %v2166, %v2165
      %v2195 = vpack.c.b16 %v2168, %v2167
      %v2196 = vpack.c.b16 %v2170, %v2169
      %v2197 = vpack.c.b16 %v2172, %v2171
      %v2198 = vpack.c.b16 %v2174, %v2173
      %2223 = vmatprep.subr.bf16.mxu0 0
      %2224 = vmatpush1.bf16.msra.mxu0 %v2175
      %2225 = vmatprep.subr.bf16.mxu0 0
      %2226 = vmatpush1.bf16.msra.mxu0 %v2176
      %2227 = vmatprep.subr.bf16.mxu0 0
      %2228 = vmatpush1.bf16.msra.mxu0 %v2177
      %2229 = vmatprep.subr.bf16.mxu0 0
      %2230 = vmatpush1.bf16.msra.mxu0 %v2178
      %2231 = vmatprep.subr.bf16.mxu0 0
      %2232 = vmatpush1.bf16.msra.mxu0 %v2179
      %2233 = vmatprep.subr.bf16.mxu0 0
      %2234 = vmatpush1.bf16.msra.mxu0 %v2180
      %2235 = vmatprep.subr.bf16.mxu0 0
      %2236 = vmatpush1.bf16.msra.mxu0 %v2181
      %2237 = vmatprep.subr.bf16.mxu0 0
      %2238 = vmatpush1.bf16.msra.mxu0 %v2182
      %2239 = vmatprep.subr.bf16.mxu0 0
      %2240 = vmatpush1.bf16.msra.mxu0 %v2183
      %2241 = vmatprep.subr.bf16.mxu0 0
      %2242 = vmatpush1.bf16.msra.mxu0 %v2184
      %2243 = vmatprep.subr.bf16.mxu0 0
      %2244 = vmatpush1.bf16.msra.mxu0 %v2185
      %2245 = vmatprep.subr.bf16.mxu0 0
      %2246 = vmatpush1.bf16.msra.mxu0 %v2186
      %2247 = vmatprep.subr.bf16.mxu0 0
      %2248 = vmatpush1.bf16.msra.mxu0 %v2187
      %2249 = vmatprep.subr.bf16.mxu0 0
      %2250 = vmatpush1.bf16.msra.mxu0 %v2188
      %2251 = vmatprep.subr.bf16.mxu0 0
      %2252 = vmatpush1.bf16.msra.mxu0 %v2189
      %2253 = vmatprep.subr.bf16.mxu0 0
      %2254 = vmatpush1.bf16.msra.mxu0 %v2190
      %2255 = vmatprep.mubr.bf16.mxu0 %v1839
      %2256 = vmatmul.mubr.bf16.gmra.mrb[0].mxu0 %v1731
      %v2257 = vpop.f32.mrb[0].mxu0
      %v2258 = vadd.f32 0.0, %v2257
      %v2259 = vpop.f32.mrb[0].mxu0
      %v2260 = vpop.f32.mrb[0].mxu0
      %v2261 = vadd.f32 0.0, %v2260
      %v2262 = vpop.f32.mrb[0].mxu0
      %2263 = vmatprep.mubr.bf16.mxu0 %v1840
      %2264 = vmatmul.mubr.bf16.gmra.mrb[0].mxu0 %v1732
      %v2265 = vpop.f32.mrb[0].mxu0
      %v2266 = vadd.f32 0.0, %v2265
      %v2267 = vpop.f32.mrb[0].mxu0
      %v2268 = vpop.f32.mrb[0].mxu0
      %v2269 = vadd.f32 0.0, %v2268
      %v2270 = vpop.f32.mrb[0].mxu0
      %2271 = vmatprep.mubr.bf16.mxu0 %v1841
      %2272 = vmatmul.mubr.bf16.gmra.mrb[0].mxu0 %v1733
      %v2273 = vpop.f32.mrb[0].mxu0
      %v2274 = vadd.f32 0.0, %v2273
      %v2275 = vpop.f32.mrb[0].mxu0
      %v2276 = vpop.f32.mrb[0].mxu0
      %v2277 = vadd.f32 0.0, %v2276
      %v2278 = vpop.f32.mrb[0].mxu0
      %2279 = vmatprep.mubr.bf16.mxu0 %v1842
      %2280 = vmatmul.mubr.bf16.gmra.mrb[0].mxu0 %v1734
      %v2281 = vpop.f32.mrb[0].mxu0
      %v2282 = vadd.f32 0.0, %v2281
      %v2283 = vpop.f32.mrb[0].mxu0
      %v2284 = vpop.f32.mrb[0].mxu0
      %v2285 = vadd.f32 0.0, %v2284
      %v2286 = vpop.f32.mrb[0].mxu0
      %2287 = vmatprep.mubr.bf16.mxu0 %v1843
      %2288 = vmatmul.mubr.bf16.gmra.mrb[0].mxu0 %v1735
      %v2289 = vpop.f32.mrb[0].mxu0
      %v2290 = vadd.f32 0.0, %v2289
      %v2291 = vpop.f32.mrb[0].mxu0
      %v2292 = vpop.f32.mrb[0].mxu0
      %v2293 = vadd.f32 0.0, %v2292
      %v2294 = vpop.f32.mrb[0].mxu0
      %2295 = vmatprep.mubr.bf16.mxu0 %v1844
      %2296 = vmatmul.mubr.bf16.gmra.mrb[0].mxu0 %v1736
      %v2297 = vpop.f32.mrb[0].mxu0
      %v2298 = vadd.f32 0.0, %v2297
      %v2299 = vpop.f32.mrb[0].mxu0
      %v2300 = vpop.f32.mrb[0].mxu0
      %v2301 = vadd.f32 0.0, %v2300
      %v2302 = vpop.f32.mrb[0].mxu0
      %2303 = vmatprep.mubr.bf16.mxu0 %v1845
      %2304 = vmatmul.mubr.bf16.gmra.mrb[0].mxu0 %v1737
      %v2305 = vpop.f32.mrb[0].mxu0
      %v2306 = vadd.f32 0.0, %v2305
      %v2307 = vpop.f32.mrb[0].mxu0
      %v2308 = vpop.f32.mrb[0].mxu0
      %v2309 = vadd.f32 0.0, %v2308
      %v2310 = vpop.f32.mrb[0].mxu0
      %2311 = vmatprep.mubr.bf16.mxu0 %v1846
      %2312 = vmatmul.mubr.bf16.gmra.mrb[0].mxu0 %v1738
      %v2313 = vpop.f32.mrb[0].mxu0
      %v2314 = vadd.f32 0.0, %v2313
      %v2315 = vpop.f32.mrb[0].mxu0
      %v2316 = vpop.f32.mrb[0].mxu0
      %v2317 = vadd.f32 0.0, %v2316
      %v2318 = vpop.f32.mrb[0].mxu0
      %2319 = vmatprep.mubr.bf16.mxu0 %v1847
      %2320 = vmatmul.mubr.bf16.gmra.mrb[0].mxu0 %v1739
      %v2321 = vpop.f32.mrb[0].mxu0
      %v2322 = vadd.f32 0.0, %v2321
      %v2323 = vpop.f32.mrb[0].mxu0
      %v2324 = vpop.f32.mrb[0].mxu0
      %v2325 = vadd.f32 0.0, %v2324
      %v2326 = vpop.f32.mrb[0].mxu0
      %2327 = vmatprep.mubr.bf16.mxu0 %v1848
      %2328 = vmatmul.mubr.bf16.gmra.mrb[0].mxu0 %v1740
      %v2329 = vpop.f32.mrb[0].mxu0
      %v2330 = vadd.f32 0.0, %v2329
      %v2331 = vpop.f32.mrb[0].mxu0
      %v2332 = vpop.f32.mrb[0].mxu0
      %v2333 = vadd.f32 0.0, %v2332
      %v2334 = vpop.f32.mrb[0].mxu0
      %2335 = vmatprep.mubr.bf16.mxu0 %v1849
      %2336 = vmatmul.mubr.bf16.gmra.mrb[0].mxu0 %v1741
      %v2337 = vpop.f32.mrb[0].mxu0
      %v2338 = vadd.f32 0.0, %v2337
      %v2339 = vpop.f32.mrb[0].mxu0
      %v2340 = vpop.f32.mrb[0].mxu0
      %v2341 = vadd.f32 0.0, %v2340
      %v2342 = vpop.f32.mrb[0].mxu0
      %2343 = vmatprep.mubr.bf16.mxu0 %v1850
      %2344 = vmatmul.mubr.bf16.gmra.mrb[0].mxu0 %v1742
      %v2345 = vpop.f32.mrb[0].mxu0
      %v2346 = vadd.f32 0.0, %v2345
      %v2347 = vpop.f32.mrb[0].mxu0
      %v2348 = vpop.f32.mrb[0].mxu0
      %v2349 = vadd.f32 0.0, %v2348
      %v2350 = vpop.f32.mrb[0].mxu0
      %2351 = vmatprep.mubr.bf16.mxu0 %v1851
      %2352 = vmatmul.mubr.bf16.gmra.mrb[0].mxu0 %v1743
      %v2353 = vpop.f32.mrb[0].mxu0
      %v2354 = vadd.f32 0.0, %v2353
      %v2355 = vpop.f32.mrb[0].mxu0
      %v2356 = vpop.f32.mrb[0].mxu0
      %v2357 = vadd.f32 0.0, %v2356
      %v2358 = vpop.f32.mrb[0].mxu0
      %2359 = vmatprep.mubr.bf16.mxu0 %v1852
      %2360 = vmatmul.mubr.bf16.gmra.mrb[0].mxu0 %v1744
      %v2361 = vpop.f32.mrb[0].mxu0
      %v2362 = vadd.f32 0.0, %v2361
      %v2363 = vpop.f32.mrb[0].mxu0
      %v2364 = vpop.f32.mrb[0].mxu0
      %v2365 = vadd.f32 0.0, %v2364
      %v2366 = vpop.f32.mrb[0].mxu0
      %2367 = vmatprep.mubr.bf16.mxu0 %v1853
      %2368 = vmatmul.mubr.bf16.gmra.mrb[0].mxu0 %v1745
      %v2369 = vpop.f32.mrb[0].mxu0
      %v2370 = vadd.f32 0.0, %v2369
      %v2371 = vpop.f32.mrb[0].mxu0
      %v2372 = vpop.f32.mrb[0].mxu0
      %v2373 = vadd.f32 0.0, %v2372
      %v2374 = vpop.f32.mrb[0].mxu0
      %2375 = vmatprep.mubr.bf16.mxu0 %v1854
      %2376 = vmatmul.mubr.bf16.gmra.mrb[0].mxu0 %v1746
      %v2377 = vpop.f32.mrb[0].mxu0
      %v2378 = vadd.f32 0.0, %v2377
      %v2379 = vpop.f32.mrb[0].mxu0
      %v2380 = vpop.f32.mrb[0].mxu0
      %v2381 = vadd.f32 0.0, %v2380
      %v2382 = vpop.f32.mrb[0].mxu0
      %2383 = vmatprep.mubr.bf16.mxu0 %v1857
      %2384 = vmatmul.mubr.bf16.gmra.mrb[0].mxu0 %v1749
      %v2385 = vpop.f32.mrb[0].mxu0
      %v2386 = vadd.f32 0.0, %v2385
      %v2387 = vpop.f32.mrb[0].mxu0
      %v2388 = vpop.f32.mrb[0].mxu0
      %v2389 = vadd.f32 0.0, %v2388
      %v2390 = vpop.f32.mrb[0].mxu0
      %2391 = vmatprep.mubr.bf16.mxu0 %v1858
      %2392 = vmatmul.mubr.bf16.gmra.mrb[0].mxu0 %v1750
      %v2393 = vpop.f32.mrb[0].mxu0
      %v2394 = vadd.f32 0.0, %v2393
      %v2395 = vpop.f32.mrb[0].mxu0
      %v2396 = vpop.f32.mrb[0].mxu0
      %v2397 = vadd.f32 0.0, %v2396
      %v2398 = vpop.f32.mrb[0].mxu0
      %2399 = vmatprep.mubr.bf16.mxu0 %v1859
      %2400 = vmatmul.mubr.bf16.gmra.mrb[0].mxu0 %v1751
      %v2401 = vpop.f32.mrb[0].mxu0
      %v2402 = vadd.f32 0.0, %v2401
      %v2403 = vpop.f32.mrb[0].mxu0
      %v2404 = vpop.f32.mrb[0].mxu0
      %v2405 = vadd.f32 0.0, %v2404
      %v2406 = vpop.f32.mrb[0].mxu0
      %2407 = vmatprep.mubr.bf16.mxu0 %v1860
      %2408 = vmatmul.mubr.bf16.gmra.mrb[0].mxu0 %v1752
      %v2409 = vpop.f32.mrb[0].mxu0
      %v2410 = vadd.f32 0.0, %v2409
      %v2411 = vpop.f32.mrb[0].mxu0
      %v2412 = vpop.f32.mrb[0].mxu0
      %v2413 = vadd.f32 0.0, %v2412
      %v2414 = vpop.f32.mrb[0].mxu0
      %2415 = vmatprep.mubr.bf16.mxu0 %v1861
      %2416 = vmatmul.mubr.bf16.gmra.mrb[0].mxu0 %v1753
      %v2417 = vpop.f32.mrb[0].mxu0
      %v2418 = vadd.f32 0.0, %v2417
      %v2419 = vpop.f32.mrb[0].mxu0
      %v2420 = vpop.f32.mrb[0].mxu0
      %v2421 = vadd.f32 0.0, %v2420
      %v2422 = vpop.f32.mrb[0].mxu0
      %2423 = vmatprep.mubr.bf16.mxu0 %v1862
      %2424 = vmatmul.mubr.bf16.gmra.mrb[0].mxu0 %v1754
      %v2425 = vpop.f32.mrb[0].mxu0
      %v2426 = vadd.f32 0.0, %v2425
      %v2427 = vpop.f32.mrb[0].mxu0
      %v2428 = vpop.f32.mrb[0].mxu0
      %v2429 = vadd.f32 0.0, %v2428
      %v2430 = vpop.f32.mrb[0].mxu0
      %2431 = vmatprep.mubr.bf16.mxu0 %v1863
      %2432 = vmatmul.mubr.bf16.gmra.mrb[0].mxu0 %v1755
      %v2433 = vpop.f32.mrb[0].mxu0
      %v2434 = vadd.f32 0.0, %v2433
      %v2435 = vpop.f32.mrb[0].mxu0
      %v2436 = vpop.f32.mrb[0].mxu0
      %v2437 = vadd.f32 0.0, %v2436
      %v2438 = vpop.f32.mrb[0].mxu0
      %2439 = vmatprep.mubr.bf16.mxu0 %v1864
      %2440 = vmatmul.mubr.bf16.gmra.mrb[0].mxu0 %v1756
      %v2441 = vpop.f32.mrb[0].mxu0
      %v2442 = vadd.f32 0.0, %v2441
      %v2443 = vpop.f32.mrb[0].mxu0
      %v2444 = vpop.f32.mrb[0].mxu0
      %v2445 = vadd.f32 0.0, %v2444
      %v2446 = vpop.f32.mrb[0].mxu0
      %2447 = vmatprep.mubr.bf16.mxu0 %v1865
      %2448 = vmatmul.mubr.bf16.gmra.mrb[0].mxu0 %v1757
      %v2449 = vpop.f32.mrb[0].mxu0
      %v2450 = vadd.f32 0.0, %v2449
      %v2451 = vpop.f32.mrb[0].mxu0
      %v2452 = vpop.f32.mrb[0].mxu0
      %v2453 = vadd.f32 0.0, %v2452
      %v2454 = vpop.f32.mrb[0].mxu0
      %2455 = vmatprep.mubr.bf16.mxu0 %v1866
      %2456 = vmatmul.mubr.bf16.gmra.mrb[0].mxu0 %v1758
      %v2457 = vpop.f32.mrb[0].mxu0
      %v2458 = vadd.f32 0.0, %v2457
      %v2459 = vpop.f32.mrb[0].mxu0
      %v2460 = vpop.f32.mrb[0].mxu0
      %v2461 = vadd.f32 0.0, %v2460
      %v2462 = vpop.f32.mrb[0].mxu0
      %2463 = vmatprep.mubr.bf16.mxu0 %v1867
      %2464 = vmatmul.mubr.bf16.gmra.mrb[0].mxu0 %v1759
      %v2465 = vpop.f32.mrb[0].mxu0
      %v2466 = vadd.f32 0.0, %v2465
      %v2467 = vpop.f32.mrb[0].mxu0
      %v2468 = vpop.f32.mrb[0].mxu0
      %v2469 = vadd.f32 0.0, %v2468
      %v2470 = vpop.f32.mrb[0].mxu0
      %2471 = vmatprep.mubr.bf16.mxu0 %v1868
      %2472 = vmatmul.mubr.bf16.gmra.mrb[0].mxu0 %v1760
      %v2473 = vpop.f32.mrb[0].mxu0
      %v2474 = vadd.f32 0.0, %v2473
      %v2475 = vpop.f32.mrb[0].mxu0
      %v2476 = vpop.f32.mrb[0].mxu0
      %v2477 = vadd.f32 0.0, %v2476
      %v2478 = vpop.f32.mrb[0].mxu0
      %2479 = vmatprep.mubr.bf16.mxu0 %v1869
      %2480 = vmatmul.mubr.bf16.gmra.mrb[0].mxu0 %v1761
      %v2481 = vpop.f32.mrb[0].mxu0
      %v2482 = vadd.f32 0.0, %v2481
      %v2483 = vpop.f32.mrb[0].mxu0
      %v2484 = vpop.f32.mrb[0].mxu0
      %v2485 = vadd.f32 0.0, %v2484
      %v2486 = vpop.f32.mrb[0].mxu0
      %2487 = vmatprep.mubr.bf16.mxu0 %v1870
      %2488 = vmatmul.mubr.bf16.gmra.mrb[0].mxu0 %v1762
      %v2489 = vpop.f32.mrb[0].mxu0
      %v2490 = vadd.f32 0.0, %v2489
      %v2491 = vpop.f32.mrb[0].mxu0
      %v2492 = vpop.f32.mrb[0].mxu0
      %v2493 = vadd.f32 0.0, %v2492
      %v2494 = vpop.f32.mrb[0].mxu0
      %2495 = vmatprep.mubr.bf16.mxu0 %v1871
      %2496 = vmatmul.mubr.bf16.gmra.mrb[0].mxu0 %v1763
      %v2497 = vpop.f32.mrb[0].mxu0
      %v2498 = vadd.f32 0.0, %v2497
      %v2499 = vpop.f32.mrb[0].mxu0
      %v2500 = vpop.f32.mrb[0].mxu0
      %v2501 = vadd.f32 0.0, %v2500
      %v2502 = vpop.f32.mrb[0].mxu0
      %2503 = vmatprep.mubr.bf16.mxu0 %v1872
      %2504 = vmatmul.mubr.bf16.gmra.mrb[0].mxu0 %v1764
      %v2505 = vpop.f32.mrb[0].mxu0
      %v2506 = vadd.f32 0.0, %v2505
      %v2507 = vpop.f32.mrb[0].mxu0
      %v2508 = vpop.f32.mrb[0].mxu0
      %v2509 = vadd.f32 0.0, %v2508
      %v2510 = vpop.f32.mrb[0].mxu0
      %2511 = vdwg.mxu0
      %2512 = vmatprep.subr.bf16.mxu0 0
      %2513 = vmatpush1.bf16.msra.mxu0 %v2191
      %2514 = vmatprep.subr.bf16.mxu0 0
      %2515 = vmatpush1.bf16.msra.mxu0 %v2192
      %2516 = vmatprep.subr.bf16.mxu0 0
      %2517 = vmatpush1.bf16.msra.mxu0 %v2193
      %2518 = vmatprep.subr.bf16.mxu0 0
      %2519 = vmatpush1.bf16.msra.mxu0 %v2194
      %2520 = vmatprep.subr.bf16.mxu0 0
      %2521 = vmatpush1.bf16.msra.mxu0 %v2195
      %2522 = vmatprep.subr.bf16.mxu0 0
      %2523 = vmatpush1.bf16.msra.mxu0 %v2196
      %2524 = vmatprep.subr.bf16.mxu0 0
      %2525 = vmatpush1.bf16.msra.mxu0 %v2197
      %2526 = vmatprep.subr.bf16.mxu0 0
      %2527 = vmatpush1.bf16.msra.mxu0 %v2198
      %2528 = vmatprep.subr.bf16.mxu0 0
      %2529 = vmatpush1.bf16.msra.mxu0 0
      %2530 = vmatprep.subr.bf16.mxu0 0
      %2531 = vmatpush1.bf16.msra.mxu0 0
      %2532 = vmatprep.subr.bf16.mxu0 0
      %2533 = vmatpush1.bf16.msra.mxu0 0
      %2534 = vmatprep.subr.bf16.mxu0 0
      %2535 = vmatpush1.bf16.msra.mxu0 0
      %2536 = vmatprep.subr.bf16.mxu0 0
      %2537 = vmatpush1.bf16.msra.mxu0 0
      %2538 = vmatprep.subr.bf16.mxu0 0
      %2539 = vmatpush1.bf16.msra.mxu0 0
      %2540 = vmatprep.subr.bf16.mxu0 0
      %2541 = vmatpush1.bf16.msra.mxu0 0
      %2542 = vmatprep.subr.bf16.mxu0 0
      %2543 = vmatpush1.bf16.msra.mxu0 0
      %2544 = vmatprep.mubr.bf16.mxu0 0
      %2545 = vmatmul.mubr.bf16.gmra.mrb[0].mxu0 %v1947
      %v2546 = vpop.f32.mrb[0].mxu0
      %v2547 = vadd.f32 %v2258, %v2546
      %v2548 = vpop.f32.mrb[0].mxu0
      %v2549 = vpop.f32.mrb[0].mxu0
      %v2550 = vadd.f32 %v2261, %v2549
      %v2551 = vpop.f32.mrb[0].mxu0
      %2552 = vmatprep.mubr.bf16.mxu0 0
      %2553 = vmatmul.mubr.bf16.gmra.mrb[0].mxu0 %v1948
      %v2554 = vpop.f32.mrb[0].mxu0
      %v2555 = vadd.f32 %v2266, %v2554
      %v2556 = vpop.f32.mrb[0].mxu0
      %v2557 = vpop.f32.mrb[0].mxu0
      %v2558 = vadd.f32 %v2269, %v2557
      %v2559 = vpop.f32.mrb[0].mxu0
      %2560 = vmatprep.mubr.bf16.mxu0 0
      %2561 = vmatmul.mubr.bf16.gmra.mrb[0].mxu0 %v1949
      %v2562 = vpop.f32.mrb[0].mxu0
      %v2563 = vadd.f32 %v2274, %v2562
      %v2564 = vpop.f32.mrb[0].mxu0
      %v2565 = vpop.f32.mrb[0].mxu0
      %v2566 = vadd.f32 %v2277, %v2565
      %v2567 = vpop.f32.mrb[0].mxu0
      %2568 = vmatprep.mubr.bf16.mxu0 0
      %2569 = vmatmul.mubr.bf16.gmra.mrb[0].mxu0 %v1950
      %v2570 = vpop.f32.mrb[0].mxu0
      %v2571 = vadd.f32 %v2282, %v2570
      %v2572 = vpop.f32.mrb[0].mxu0
      %v2573 = vpop.f32.mrb[0].mxu0
      %v2574 = vadd.f32 %v2285, %v2573
      %v2575 = vpop.f32.mrb[0].mxu0
      %2576 = vmatprep.mubr.bf16.mxu0 0
      %2577 = vmatmul.mubr.bf16.gmra.mrb[0].mxu0 %v1951
      %v2578 = vpop.f32.mrb[0].mxu0
      %v2579 = vadd.f32 %v2290, %v2578
      %v2580 = vpop.f32.mrb[0].mxu0
      %v2581 = vpop.f32.mrb[0].mxu0
      %v2582 = vadd.f32 %v2293, %v2581
      %v2583 = vpop.f32.mrb[0].mxu0
      %2584 = vmatprep.mubr.bf16.mxu0 0
      %2585 = vmatmul.mubr.bf16.gmra.mrb[0].mxu0 %v1952
      %v2586 = vpop.f32.mrb[0].mxu0
      %v2587 = vadd.f32 %v2298, %v2586
      %v2588 = vpop.f32.mrb[0].mxu0
      %v2589 = vpop.f32.mrb[0].mxu0
      %v2590 = vadd.f32 %v2301, %v2589
      %v2591 = vpop.f32.mrb[0].mxu0
      %2592 = vmatprep.mubr.bf16.mxu0 0
      %2593 = vmatmul.mubr.bf16.gmra.mrb[0].mxu0 %v1953
      %v2594 = vpop.f32.mrb[0].mxu0
      %v2595 = vadd.f32 %v2306, %v2594
      %v2596 = vpop.f32.mrb[0].mxu0
      %v2597 = vpop.f32.mrb[0].mxu0
      %v2598 = vadd.f32 %v2309, %v2597
      %v2599 = vpop.f32.mrb[0].mxu0
      %2600 = vmatprep.mubr.bf16.mxu0 0
      %2601 = vmatmul.mubr.bf16.gmra.mrb[0].mxu0 %v1954
      %v2602 = vpop.f32.mrb[0].mxu0
      %v2603 = vadd.f32 %v2314, %v2602
      %v2604 = vpop.f32.mrb[0].mxu0
      %v2605 = vpop.f32.mrb[0].mxu0
      %v2606 = vadd.f32 %v2317, %v2605
      %v2607 = vpop.f32.mrb[0].mxu0
      %2608 = vmatprep.mubr.bf16.mxu0 0
      %2609 = vmatmul.mubr.bf16.gmra.mrb[0].mxu0 %v1955
      %v2610 = vpop.f32.mrb[0].mxu0
      %v2611 = vadd.f32 %v2322, %v2610
      %v2612 = vpop.f32.mrb[0].mxu0
      %v2613 = vpop.f32.mrb[0].mxu0
      %v2614 = vadd.f32 %v2325, %v2613
      %v2615 = vpop.f32.mrb[0].mxu0
      %2616 = vmatprep.mubr.bf16.mxu0 0
      %2617 = vmatmul.mubr.bf16.gmra.mrb[0].mxu0 %v1956
      %v2618 = vpop.f32.mrb[0].mxu0
      %v2619 = vadd.f32 %v2330, %v2618
      %v2620 = vpop.f32.mrb[0].mxu0
      %v2621 = vpop.f32.mrb[0].mxu0
      %v2622 = vadd.f32 %v2333, %v2621
      %v2623 = vpop.f32.mrb[0].mxu0
      %2624 = vmatprep.mubr.bf16.mxu0 0
      %2625 = vmatmul.mubr.bf16.gmra.mrb[0].mxu0 %v1957
      %v2626 = vpop.f32.mrb[0].mxu0
      %v2627 = vadd.f32 %v2338, %v2626
      %v2628 = vpop.f32.mrb[0].mxu0
      %v2629 = vpop.f32.mrb[0].mxu0
      %v2630 = vadd.f32 %v2341, %v2629
      %v2631 = vpop.f32.mrb[0].mxu0
      %2632 = vmatprep.mubr.bf16.mxu0 0
      %2633 = vmatmul.mubr.bf16.gmra.mrb[0].mxu0 %v1958
      %v2634 = vpop.f32.mrb[0].mxu0
      %v2635 = vadd.f32 %v2346, %v2634
      %v2636 = vpop.f32.mrb[0].mxu0
      %v2637 = vpop.f32.mrb[0].mxu0
      %v2638 = vadd.f32 %v2349, %v2637
      %v2639 = vpop.f32.mrb[0].mxu0
      %2640 = vmatprep.mubr.bf16.mxu0 0
      %2641 = vmatmul.mubr.bf16.gmra.mrb[0].mxu0 %v1959
      %v2642 = vpop.f32.mrb[0].mxu0
      %v2643 = vadd.f32 %v2354, %v2642
      %v2644 = vpop.f32.mrb[0].mxu0
      %v2645 = vpop.f32.mrb[0].mxu0
      %v2646 = vadd.f32 %v2357, %v2645
      %v2647 = vpop.f32.mrb[0].mxu0
      %2648 = vmatprep.mubr.bf16.mxu0 0
      %2649 = vmatmul.mubr.bf16.gmra.mrb[0].mxu0 %v1960
      %v2650 = vpop.f32.mrb[0].mxu0
      %v2651 = vadd.f32 %v2362, %v2650
      %v2652 = vpop.f32.mrb[0].mxu0
      %v2653 = vpop.f32.mrb[0].mxu0
      %v2654 = vadd.f32 %v2365, %v2653
      %v2655 = vpop.f32.mrb[0].mxu0
      %2656 = vmatprep.mubr.bf16.mxu0 0
      %2657 = vmatmul.mubr.bf16.gmra.mrb[0].mxu0 %v1961
      %v2658 = vpop.f32.mrb[0].mxu0
      %v2659 = vadd.f32 %v2370, %v2658
      %v2660 = vpop.f32.mrb[0].mxu0
      %v2661 = vpop.f32.mrb[0].mxu0
      %v2662 = vadd.f32 %v2373, %v2661
      %v2663 = vpop.f32.mrb[0].mxu0
      %2664 = vmatprep.mubr.bf16.mxu0 0
      %2665 = vmatmul.mubr.bf16.gmra.mrb[0].mxu0 %v1962
      %v2666 = vpop.f32.mrb[0].mxu0
      %v2667 = vadd.f32 %v2378, %v2666
      %v2668 = vpop.f32.mrb[0].mxu0
      %v2669 = vpop.f32.mrb[0].mxu0
      %v2670 = vadd.f32 %v2381, %v2669
      %v2671 = vpop.f32.mrb[0].mxu0
      %2672 = vmatprep.mubr.bf16.mxu0 0
      %2673 = vmatmul.mubr.bf16.gmra.mrb[0].mxu0 %v1965
      %v2674 = vpop.f32.mrb[0].mxu0
      %v2675 = vadd.f32 %v2386, %v2674
      %v2676 = vpop.f32.mrb[0].mxu0
      %v2677 = vpop.f32.mrb[0].mxu0
      %v2678 = vadd.f32 %v2389, %v2677
      %v2679 = vpop.f32.mrb[0].mxu0
      %2680 = vmatprep.mubr.bf16.mxu0 0
      %2681 = vmatmul.mubr.bf16.gmra.mrb[0].mxu0 %v1966
      %v2682 = vpop.f32.mrb[0].mxu0
      %v2683 = vadd.f32 %v2394, %v2682
      %v2684 = vpop.f32.mrb[0].mxu0
      %v2685 = vpop.f32.mrb[0].mxu0
      %v2686 = vadd.f32 %v2397, %v2685
      %v2687 = vpop.f32.mrb[0].mxu0
      %2688 = vmatprep.mubr.bf16.mxu0 0
      %2689 = vmatmul.mubr.bf16.gmra.mrb[0].mxu0 %v1967
      %v2690 = vpop.f32.mrb[0].mxu0
      %v2691 = vadd.f32 %v2402, %v2690
      %v2692 = vpop.f32.mrb[0].mxu0
      %v2693 = vpop.f32.mrb[0].mxu0
      %v2694 = vadd.f32 %v2405, %v2693
      %v2695 = vpop.f32.mrb[0].mxu0
      %2696 = vmatprep.mubr.bf16.mxu0 0
      %2697 = vmatmul.mubr.bf16.gmra.mrb[0].mxu0 %v1968
      %v2698 = vpop.f32.mrb[0].mxu0
      %v2699 = vadd.f32 %v2410, %v2698
      %v2700 = vpop.f32.mrb[0].mxu0
      %v2701 = vpop.f32.mrb[0].mxu0
      %v2702 = vadd.f32 %v2413, %v2701
      %v2703 = vpop.f32.mrb[0].mxu0
      %2704 = vmatprep.mubr.bf16.mxu0 0
      %2705 = vmatmul.mubr.bf16.gmra.mrb[0].mxu0 %v1969
      %v2706 = vpop.f32.mrb[0].mxu0
      %v2707 = vadd.f32 %v2418, %v2706
      %v2708 = vpop.f32.mrb[0].mxu0
      %v2709 = vpop.f32.mrb[0].mxu0
      %v2710 = vadd.f32 %v2421, %v2709
      %v2711 = vpop.f32.mrb[0].mxu0
      %2712 = vmatprep.mubr.bf16.mxu0 0
      %2713 = vmatmul.mubr.bf16.gmra.mrb[0].mxu0 %v1970
      %v2714 = vpop.f32.mrb[0].mxu0
      %v2715 = vadd.f32 %v2426, %v2714
      %v2716 = vpop.f32.mrb[0].mxu0
      %v2717 = vpop.f32.mrb[0].mxu0
      %v2718 = vadd.f32 %v2429, %v2717
      %v2719 = vpop.f32.mrb[0].mxu0
      %2720 = vmatprep.mubr.bf16.mxu0 0
      %2721 = vmatmul.mubr.bf16.gmra.mrb[0].mxu0 %v1971
      %v2722 = vpop.f32.mrb[0].mxu0
      %v2723 = vadd.f32 %v2434, %v2722
      %v2724 = vpop.f32.mrb[0].mxu0
      %v2725 = vpop.f32.mrb[0].mxu0
      %v2726 = vadd.f32 %v2437, %v2725
      %v2727 = vpop.f32.mrb[0].mxu0
      %2728 = vmatprep.mubr.bf16.mxu0 0
      %2729 = vmatmul.mubr.bf16.gmra.mrb[0].mxu0 %v1972
      %v2730 = vpop.f32.mrb[0].mxu0
      %v2731 = vadd.f32 %v2442, %v2730
      %v2732 = vpop.f32.mrb[0].mxu0
      %v2733 = vpop.f32.mrb[0].mxu0
      %v2734 = vadd.f32 %v2445, %v2733
      %v2735 = vpop.f32.mrb[0].mxu0
      %2736 = vmatprep.mubr.bf16.mxu0 0
      %2737 = vmatmul.mubr.bf16.gmra.mrb[0].mxu0 %v1973
      %v2738 = vpop.f32.mrb[0].mxu0
      %v2739 = vadd.f32 %v2450, %v2738
      %v2740 = vpop.f32.mrb[0].mxu0
      %v2741 = vpop.f32.mrb[0].mxu0
      %v2742 = vadd.f32 %v2453, %v2741
      %v2743 = vpop.f32.mrb[0].mxu0
      %2744 = vmatprep.mubr.bf16.mxu0 0
      %2745 = vmatmul.mubr.bf16.gmra.mrb[0].mxu0 %v1974
      %v2746 = vpop.f32.mrb[0].mxu0
      %v2747 = vadd.f32 %v2458, %v2746
      %v2748 = vpop.f32.mrb[0].mxu0
      %v2749 = vpop.f32.mrb[0].mxu0
      %v2750 = vadd.f32 %v2461, %v2749
      %v2751 = vpop.f32.mrb[0].mxu0
      %2752 = vmatprep.mubr.bf16.mxu0 0
      %2753 = vmatmul.mubr.bf16.gmra.mrb[0].mxu0 %v1975
      %v2754 = vpop.f32.mrb[0].mxu0
      %v2755 = vadd.f32 %v2466, %v2754
      %v2756 = vpop.f32.mrb[0].mxu0
      %v2757 = vpop.f32.mrb[0].mxu0
      %v2758 = vadd.f32 %v2469, %v2757
      %v2759 = vpop.f32.mrb[0].mxu0
      %2760 = vmatprep.mubr.bf16.mxu0 0
      %2761 = vmatmul.mubr.bf16.gmra.mrb[0].mxu0 %v1976
      %v2762 = vpop.f32.mrb[0].mxu0
      %v2763 = vadd.f32 %v2474, %v2762
      %v2764 = vpop.f32.mrb[0].mxu0
      %v2765 = vpop.f32.mrb[0].mxu0
      %v2766 = vadd.f32 %v2477, %v2765
      %v2767 = vpop.f32.mrb[0].mxu0
      %2768 = vmatprep.mubr.bf16.mxu0 0
      %2769 = vmatmul.mubr.bf16.gmra.mrb[0].mxu0 %v1977
      %v2770 = vpop.f32.mrb[0].mxu0
      %v2771 = vadd.f32 %v2482, %v2770
      %v2772 = vpop.f32.mrb[0].mxu0
      %v2773 = vpop.f32.mrb[0].mxu0
      %v2774 = vadd.f32 %v2485, %v2773
      %v2775 = vpop.f32.mrb[0].mxu0
      %2776 = vmatprep.mubr.bf16.mxu0 0
      %2777 = vmatmul.mubr.bf16.gmra.mrb[0].mxu0 %v1978
      %v2778 = vpop.f32.mrb[0].mxu0
      %v2779 = vadd.f32 %v2490, %v2778
      %v2780 = vpop.f32.mrb[0].mxu0
      %v2781 = vpop.f32.mrb[0].mxu0
      %v2782 = vadd.f32 %v2493, %v2781
      %v2783 = vpop.f32.mrb[0].mxu0
      %2784 = vmatprep.mubr.bf16.mxu0 0
      %2785 = vmatmul.mubr.bf16.gmra.mrb[0].mxu0 %v1979
      %v2786 = vpop.f32.mrb[0].mxu0
      %v2787 = vadd.f32 %v2498, %v2786
      %v2788 = vpop.f32.mrb[0].mxu0
      %v2789 = vpop.f32.mrb[0].mxu0
      %v2790 = vadd.f32 %v2501, %v2789
      %v2791 = vpop.f32.mrb[0].mxu0
      %2792 = vmatprep.mubr.bf16.mxu0 0
      %2793 = vmatmul.mubr.bf16.gmra.mrb[0].mxu0 %v1980
      %v2794 = vpop.f32.mrb[0].mxu0
      %v2795 = vadd.f32 %v2506, %v2794
      %v2796 = vpop.f32.mrb[0].mxu0
      %v2797 = vpop.f32.mrb[0].mxu0
      %v2798 = vadd.f32 %v2509, %v2797
      %v2799 = vpop.f32.mrb[0].mxu0
      %2800 = vdwg.mxu0
      %v2849 = vunpack.c.l.b16 %v1982
      %v2850 = vunpack.c.l.b16 %v1983
      %v2851 = vunpack.c.l.b16 %v1984
      %v2852 = vunpack.c.l.b16 %v1985
      %v2853 = vunpack.c.l.b16 %v1986
      %v2854 = vunpack.c.l.b16 %v1987
      %v2855 = vunpack.c.l.b16 %v1988
      %v2856 = vunpack.c.l.b16 %v1989
      %v2857 = vunpack.c.l.b16 %v1990
      %v2858 = vunpack.c.l.b16 %v1991
      %v2859 = vunpack.c.l.b16 %v1992
      %v2860 = vunpack.c.l.b16 %v1993
      %v2861 = vunpack.c.l.b16 %v1994
      %v2862 = vunpack.c.l.b16 %v1995
      %v2863 = vunpack.c.l.b16 %v1996
      %v2864 = vunpack.c.l.b16 %v1997
      %v2865 = vunpack.c.l.b16 %v1998
      %v2866 = vunpack.c.l.b16 %v1999
      %v2867 = vunpack.c.l.b16 %v2000
      %v2868 = vunpack.c.l.b16 %v2001
      %v2869 = vunpack.c.l.b16 %v2002
      %v2870 = vunpack.c.l.b16 %v2003
      %v2871 = vunpack.c.l.b16 %v2004
      %v2872 = vunpack.c.l.b16 %v2005
      %v2873 = vunpack.c.l.b16 %v2006
      %v2874 = vunpack.c.l.b16 %v2007
      %v2875 = vunpack.c.l.b16 %v2008
      %v2876 = vunpack.c.l.b16 %v2009
      %v2877 = vunpack.c.l.b16 %v2010
      %v2878 = vunpack.c.l.b16 %v2011
      %v2879 = vunpack.c.l.b16 %v2012
      %v2880 = vunpack.c.l.b16 %v2013
      %v2881 = vunpack.c.l.b16 %v2014
      %v2882 = vunpack.c.l.b16 %v2015
      %v2883 = vunpack.c.l.b16 %v2016
      %v2884 = vunpack.c.l.b16 %v2017
      %v2885 = vunpack.c.l.b16 %v2018
      %v2886 = vunpack.c.l.b16 %v2019
      %v2887 = vunpack.c.l.b16 %v2020
      %v2888 = vunpack.c.l.b16 %v2021
      %v2889 = vunpack.c.l.b16 %v2022
      %v2890 = vunpack.c.l.b16 %v2023
      %v2891 = vunpack.c.l.b16 %v2024
      %v2892 = vunpack.c.l.b16 %v2025
      %v2893 = vunpack.c.l.b16 %v2026
      %v2894 = vunpack.c.l.b16 %v2027
      %v2895 = vunpack.c.l.b16 %v2028
      %v2896 = vunpack.c.l.b16 %v2029
      %v2897 = vpack.c.b16 %v2850, %v2849
      %v2898 = vpack.c.b16 %v2852, %v2851
      %v2899 = vpack.c.b16 %v2854, %v2853
      %v2900 = vpack.c.b16 %v2856, %v2855
      %v2901 = vpack.c.b16 %v2858, %v2857
      %v2902 = vpack.c.b16 %v2860, %v2859
      %v2903 = vpack.c.b16 %v2862, %v2861
      %v2904 = vpack.c.b16 %v2864, %v2863
      %v2905 = vpack.c.b16 %v2866, %v2865
      %v2906 = vpack.c.b16 %v2868, %v2867
      %v2907 = vpack.c.b16 %v2870, %v2869
      %v2908 = vpack.c.b16 %v2872, %v2871
      %v2909 = vpack.c.b16 %v2874, %v2873
      %v2910 = vpack.c.b16 %v2876, %v2875
      %v2911 = vpack.c.b16 %v2878, %v2877
      %v2912 = vpack.c.b16 %v2880, %v2879
      %v2913 = vpack.c.b16 %v2882, %v2881
      %v2914 = vpack.c.b16 %v2884, %v2883
      %v2915 = vpack.c.b16 %v2886, %v2885
      %v2916 = vpack.c.b16 %v2888, %v2887
      %v2917 = vpack.c.b16 %v2890, %v2889
      %v2918 = vpack.c.b16 %v2892, %v2891
      %v2919 = vpack.c.b16 %v2894, %v2893
      %v2920 = vpack.c.b16 %v2896, %v2895
      %2945 = vmatprep.subr.bf16.mxu0 0
      %2946 = vmatpush1.bf16.msra.mxu0 %v2897
      %2947 = vmatprep.subr.bf16.mxu0 0
      %2948 = vmatpush1.bf16.msra.mxu0 %v2898
      %2949 = vmatprep.subr.bf16.mxu0 0
      %2950 = vmatpush1.bf16.msra.mxu0 %v2899
      %2951 = vmatprep.subr.bf16.mxu0 0
      %2952 = vmatpush1.bf16.msra.mxu0 %v2900
      %2953 = vmatprep.subr.bf16.mxu0 0
      %2954 = vmatpush1.bf16.msra.mxu0 %v2901
      %2955 = vmatprep.subr.bf16.mxu0 0
      %2956 = vmatpush1.bf16.msra.mxu0 %v2902
      %2957 = vmatprep.subr.bf16.mxu0 0
      %2958 = vmatpush1.bf16.msra.mxu0 %v2903
      %2959 = vmatprep.subr.bf16.mxu0 0
      %2960 = vmatpush1.bf16.msra.mxu0 %v2904
      %2961 = vmatprep.subr.bf16.mxu0 0
      %2962 = vmatpush1.bf16.msra.mxu0 %v2905
      %2963 = vmatprep.subr.bf16.mxu0 0
      %2964 = vmatpush1.bf16.msra.mxu0 %v2906
      %2965 = vmatprep.subr.bf16.mxu0 0
      %2966 = vmatpush1.bf16.msra.mxu0 %v2907
      %2967 = vmatprep.subr.bf16.mxu0 0
      %2968 = vmatpush1.bf16.msra.mxu0 %v2908
      %2969 = vmatprep.subr.bf16.mxu0 0
      %2970 = vmatpush1.bf16.msra.mxu0 %v2909
      %2971 = vmatprep.subr.bf16.mxu0 0
      %2972 = vmatpush1.bf16.msra.mxu0 %v2910
      %2973 = vmatprep.subr.bf16.mxu0 0
      %2974 = vmatpush1.bf16.msra.mxu0 %v2911
      %2975 = vmatprep.subr.bf16.mxu0 0
      %2976 = vmatpush1.bf16.msra.mxu0 %v2912
      %2977 = vmatprep.mubr.bf16.mxu0 %v1838
      %2978 = vmatmul.mubr.bf16.gmra.mrb[0].mxu0 %v1730
      %v2979 = vpop.f32.mrb[0].mxu0
      %v2980 = vadd.f32 %v2547, %v2979
      %v2981 = vpop.f32.mrb[0].mxu0
      %v2982 = vpop.f32.mrb[0].mxu0
      %v2983 = vadd.f32 %v2550, %v2982
      %v2984 = vpop.f32.mrb[0].mxu0
      %2985 = vmatprep.mubr.bf16.mxu0 %v1839
      %2986 = vmatmul.mubr.bf16.gmra.mrb[0].mxu0 %v1731
      %v2987 = vpop.f32.mrb[0].mxu0
      %v2988 = vadd.f32 %v2555, %v2987
      %v2989 = vpop.f32.mrb[0].mxu0
      %v2990 = vpop.f32.mrb[0].mxu0
      %v2991 = vadd.f32 %v2558, %v2990
      %v2992 = vpop.f32.mrb[0].mxu0
      %2993 = vmatprep.mubr.bf16.mxu0 %v1840
      %2994 = vmatmul.mubr.bf16.gmra.mrb[0].mxu0 %v1732
      %v2995 = vpop.f32.mrb[0].mxu0
      %v2996 = vadd.f32 %v2563, %v2995
      %v2997 = vpop.f32.mrb[0].mxu0
      %v2998 = vpop.f32.mrb[0].mxu0
      %v2999 = vadd.f32 %v2566, %v2998
      %v3000 = vpop.f32.mrb[0].mxu0
      %3001 = vmatprep.mubr.bf16.mxu0 %v1841
      %3002 = vmatmul.mubr.bf16.gmra.mrb[0].mxu0 %v1733
      %v3003 = vpop.f32.mrb[0].mxu0
      %v3004 = vadd.f32 %v2571, %v3003
      %v3005 = vpop.f32.mrb[0].mxu0
      %v3006 = vpop.f32.mrb[0].mxu0
      %v3007 = vadd.f32 %v2574, %v3006
      %v3008 = vpop.f32.mrb[0].mxu0
      %3009 = vmatprep.mubr.bf16.mxu0 %v1842
      %3010 = vmatmul.mubr.bf16.gmra.mrb[0].mxu0 %v1734
      %v3011 = vpop.f32.mrb[0].mxu0
      %v3012 = vadd.f32 %v2579, %v3011
      %v3013 = vpop.f32.mrb[0].mxu0
      %v3014 = vpop.f32.mrb[0].mxu0
      %v3015 = vadd.f32 %v2582, %v3014
      %v3016 = vpop.f32.mrb[0].mxu0
      %3017 = vmatprep.mubr.bf16.mxu0 %v1843
      %3018 = vmatmul.mubr.bf16.gmra.mrb[0].mxu0 %v1735
      %v3019 = vpop.f32.mrb[0].mxu0
      %v3020 = vadd.f32 %v2587, %v3019
      %v3021 = vpop.f32.mrb[0].mxu0
      %v3022 = vpop.f32.mrb[0].mxu0
      %v3023 = vadd.f32 %v2590, %v3022
      %v3024 = vpop.f32.mrb[0].mxu0
      %3025 = vmatprep.mubr.bf16.mxu0 %v1844
      %3026 = vmatmul.mubr.bf16.gmra.mrb[0].mxu0 %v1736
      %v3027 = vpop.f32.mrb[0].mxu0
      %v3028 = vadd.f32 %v2595, %v3027
      %v3029 = vpop.f32.mrb[0].mxu0
      %v3030 = vpop.f32.mrb[0].mxu0
      %v3031 = vadd.f32 %v2598, %v3030
      %v3032 = vpop.f32.mrb[0].mxu0
      %3033 = vmatprep.mubr.bf16.mxu0 %v1845
      %3034 = vmatmul.mubr.bf16.gmra.mrb[0].mxu0 %v1737
      %v3035 = vpop.f32.mrb[0].mxu0
      %v3036 = vadd.f32 %v2603, %v3035
      %v3037 = vpop.f32.mrb[0].mxu0
      %v3038 = vpop.f32.mrb[0].mxu0
      %v3039 = vadd.f32 %v2606, %v3038
      %v3040 = vpop.f32.mrb[0].mxu0
      %3041 = vmatprep.mubr.bf16.mxu0 %v1846
      %3042 = vmatmul.mubr.bf16.gmra.mrb[0].mxu0 %v1738
      %v3043 = vpop.f32.mrb[0].mxu0
      %v3044 = vadd.f32 %v2611, %v3043
      %v3045 = vpop.f32.mrb[0].mxu0
      %v3046 = vpop.f32.mrb[0].mxu0
      %v3047 = vadd.f32 %v2614, %v3046
      %v3048 = vpop.f32.mrb[0].mxu0
      %3049 = vmatprep.mubr.bf16.mxu0 %v1847
      %3050 = vmatmul.mubr.bf16.gmra.mrb[0].mxu0 %v1739
      %v3051 = vpop.f32.mrb[0].mxu0
      %v3052 = vadd.f32 %v2619, %v3051
      %v3053 = vpop.f32.mrb[0].mxu0
      %v3054 = vpop.f32.mrb[0].mxu0
      %v3055 = vadd.f32 %v2622, %v3054
      %v3056 = vpop.f32.mrb[0].mxu0
      %3057 = vmatprep.mubr.bf16.mxu0 %v1848
      %3058 = vmatmul.mubr.bf16.gmra.mrb[0].mxu0 %v1740
      %v3059 = vpop.f32.mrb[0].mxu0
      %v3060 = vadd.f32 %v2627, %v3059
      %v3061 = vpop.f32.mrb[0].mxu0
      %v3062 = vpop.f32.mrb[0].mxu0
      %v3063 = vadd.f32 %v2630, %v3062
      %v3064 = vpop.f32.mrb[0].mxu0
      %3065 = vmatprep.mubr.bf16.mxu0 %v1849
      %3066 = vmatmul.mubr.bf16.gmra.mrb[0].mxu0 %v1741
      %v3067 = vpop.f32.mrb[0].mxu0
      %v3068 = vadd.f32 %v2635, %v3067
      %v3069 = vpop.f32.mrb[0].mxu0
      %v3070 = vpop.f32.mrb[0].mxu0
      %v3071 = vadd.f32 %v2638, %v3070
      %v3072 = vpop.f32.mrb[0].mxu0
      %3073 = vmatprep.mubr.bf16.mxu0 %v1850
      %3074 = vmatmul.mubr.bf16.gmra.mrb[0].mxu0 %v1742
      %v3075 = vpop.f32.mrb[0].mxu0
      %v3076 = vadd.f32 %v2643, %v3075
      %v3077 = vpop.f32.mrb[0].mxu0
      %v3078 = vpop.f32.mrb[0].mxu0
      %v3079 = vadd.f32 %v2646, %v3078
      %v3080 = vpop.f32.mrb[0].mxu0
      %3081 = vmatprep.mubr.bf16.mxu0 %v1851
      %3082 = vmatmul.mubr.bf16.gmra.mrb[0].mxu0 %v1743
      %v3083 = vpop.f32.mrb[0].mxu0
      %v3084 = vadd.f32 %v2651, %v3083
      %v3085 = vpop.f32.mrb[0].mxu0
      %v3086 = vpop.f32.mrb[0].mxu0
      %v3087 = vadd.f32 %v2654, %v3086
      %v3088 = vpop.f32.mrb[0].mxu0
      %3089 = vmatprep.mubr.bf16.mxu0 %v1852
      %3090 = vmatmul.mubr.bf16.gmra.mrb[0].mxu0 %v1744
      %v3091 = vpop.f32.mrb[0].mxu0
      %v3092 = vadd.f32 %v2659, %v3091
      %v3093 = vpop.f32.mrb[0].mxu0
      %v3094 = vpop.f32.mrb[0].mxu0
      %v3095 = vadd.f32 %v2662, %v3094
      %v3096 = vpop.f32.mrb[0].mxu0
      %3097 = vmatprep.mubr.bf16.mxu0 %v1853
      %3098 = vmatmul.mubr.bf16.gmra.mrb[0].mxu0 %v1745
      %v3099 = vpop.f32.mrb[0].mxu0
      %v3100 = vadd.f32 %v2667, %v3099
      %v3101 = vpop.f32.mrb[0].mxu0
      %v3102 = vpop.f32.mrb[0].mxu0
      %v3103 = vadd.f32 %v2670, %v3102
      %v3104 = vpop.f32.mrb[0].mxu0
      %3105 = vmatprep.mubr.bf16.mxu0 %v1856
      %3106 = vmatmul.mubr.bf16.gmra.mrb[0].mxu0 %v1748
      %v3107 = vpop.f32.mrb[0].mxu0
      %v3108 = vadd.f32 %v2675, %v3107
      %v3109 = vpop.f32.mrb[0].mxu0
      %v3110 = vpop.f32.mrb[0].mxu0
      %v3111 = vadd.f32 %v2678, %v3110
      %v3112 = vpop.f32.mrb[0].mxu0
      %3113 = vmatprep.mubr.bf16.mxu0 %v1857
      %3114 = vmatmul.mubr.bf16.gmra.mrb[0].mxu0 %v1749
      %v3115 = vpop.f32.mrb[0].mxu0
      %v3116 = vadd.f32 %v2683, %v3115
      %v3117 = vpop.f32.mrb[0].mxu0
      %v3118 = vpop.f32.mrb[0].mxu0
      %v3119 = vadd.f32 %v2686, %v3118
      %v3120 = vpop.f32.mrb[0].mxu0
      %3121 = vmatprep.mubr.bf16.mxu0 %v1858
      %3122 = vmatmul.mubr.bf16.gmra.mrb[0].mxu0 %v1750
      %v3123 = vpop.f32.mrb[0].mxu0
      %v3124 = vadd.f32 %v2691, %v3123
      %v3125 = vpop.f32.mrb[0].mxu0
      %v3126 = vpop.f32.mrb[0].mxu0
      %v3127 = vadd.f32 %v2694, %v3126
      %v3128 = vpop.f32.mrb[0].mxu0
      %3129 = vmatprep.mubr.bf16.mxu0 %v1859
      %3130 = vmatmul.mubr.bf16.gmra.mrb[0].mxu0 %v1751
      %v3131 = vpop.f32.mrb[0].mxu0
      %v3132 = vadd.f32 %v2699, %v3131
      %v3133 = vpop.f32.mrb[0].mxu0
      %v3134 = vpop.f32.mrb[0].mxu0
      %v3135 = vadd.f32 %v2702, %v3134
      %v3136 = vpop.f32.mrb[0].mxu0
      %3137 = vmatprep.mubr.bf16.mxu0 %v1860
      %3138 = vmatmul.mubr.bf16.gmra.mrb[0].mxu0 %v1752
      %v3139 = vpop.f32.mrb[0].mxu0
      %v3140 = vadd.f32 %v2707, %v3139
      %v3141 = vpop.f32.mrb[0].mxu0
      %v3142 = vpop.f32.mrb[0].mxu0
      %v3143 = vadd.f32 %v2710, %v3142
      %v3144 = vpop.f32.mrb[0].mxu0
      %3145 = vmatprep.mubr.bf16.mxu0 %v1861
      %3146 = vmatmul.mubr.bf16.gmra.mrb[0].mxu0 %v1753
      %v3147 = vpop.f32.mrb[0].mxu0
      %v3148 = vadd.f32 %v2715, %v3147
      %v3149 = vpop.f32.mrb[0].mxu0
      %v3150 = vpop.f32.mrb[0].mxu0
      %v3151 = vadd.f32 %v2718, %v3150
      %v3152 = vpop.f32.mrb[0].mxu0
      %3153 = vmatprep.mubr.bf16.mxu0 %v1862
      %3154 = vmatmul.mubr.bf16.gmra.mrb[0].mxu0 %v1754
      %v3155 = vpop.f32.mrb[0].mxu0
      %v3156 = vadd.f32 %v2723, %v3155
      %v3157 = vpop.f32.mrb[0].mxu0
      %v3158 = vpop.f32.mrb[0].mxu0
      %v3159 = vadd.f32 %v2726, %v3158
      %v3160 = vpop.f32.mrb[0].mxu0
      %3161 = vmatprep.mubr.bf16.mxu0 %v1863
      %3162 = vmatmul.mubr.bf16.gmra.mrb[0].mxu0 %v1755
      %v3163 = vpop.f32.mrb[0].mxu0
      %v3164 = vadd.f32 %v2731, %v3163
      %v3165 = vpop.f32.mrb[0].mxu0
      %v3166 = vpop.f32.mrb[0].mxu0
      %v3167 = vadd.f32 %v2734, %v3166
      %v3168 = vpop.f32.mrb[0].mxu0
      %3169 = vmatprep.mubr.bf16.mxu0 %v1864
      %3170 = vmatmul.mubr.bf16.gmra.mrb[0].mxu0 %v1756
      %v3171 = vpop.f32.mrb[0].mxu0
      %v3172 = vadd.f32 %v2739, %v3171
      %v3173 = vpop.f32.mrb[0].mxu0
      %v3174 = vpop.f32.mrb[0].mxu0
      %v3175 = vadd.f32 %v2742, %v3174
      %v3176 = vpop.f32.mrb[0].mxu0
      %3177 = vmatprep.mubr.bf16.mxu0 %v1865
      %3178 = vmatmul.mubr.bf16.gmra.mrb[0].mxu0 %v1757
      %v3179 = vpop.f32.mrb[0].mxu0
      %v3180 = vadd.f32 %v2747, %v3179
      %v3181 = vpop.f32.mrb[0].mxu0
      %v3182 = vpop.f32.mrb[0].mxu0
      %v3183 = vadd.f32 %v2750, %v3182
      %v3184 = vpop.f32.mrb[0].mxu0
      %3185 = vmatprep.mubr.bf16.mxu0 %v1866
      %3186 = vmatmul.mubr.bf16.gmra.mrb[0].mxu0 %v1758
      %v3187 = vpop.f32.mrb[0].mxu0
      %v3188 = vadd.f32 %v2755, %v3187
      %v3189 = vpop.f32.mrb[0].mxu0
      %v3190 = vpop.f32.mrb[0].mxu0
      %v3191 = vadd.f32 %v2758, %v3190
      %v3192 = vpop.f32.mrb[0].mxu0
      %3193 = vmatprep.mubr.bf16.mxu0 %v1867
      %3194 = vmatmul.mubr.bf16.gmra.mrb[0].mxu0 %v1759
      %v3195 = vpop.f32.mrb[0].mxu0
      %v3196 = vadd.f32 %v2763, %v3195
      %v3197 = vpop.f32.mrb[0].mxu0
      %v3198 = vpop.f32.mrb[0].mxu0
      %v3199 = vadd.f32 %v2766, %v3198
      %v3200 = vpop.f32.mrb[0].mxu0
      %3201 = vmatprep.mubr.bf16.mxu0 %v1868
      %3202 = vmatmul.mubr.bf16.gmra.mrb[0].mxu0 %v1760
      %v3203 = vpop.f32.mrb[0].mxu0
      %v3204 = vadd.f32 %v2771, %v3203
      %v3205 = vpop.f32.mrb[0].mxu0
      %v3206 = vpop.f32.mrb[0].mxu0
      %v3207 = vadd.f32 %v2774, %v3206
      %v3208 = vpop.f32.mrb[0].mxu0
      %3209 = vmatprep.mubr.bf16.mxu0 %v1869
      %3210 = vmatmul.mubr.bf16.gmra.mrb[0].mxu0 %v1761
      %v3211 = vpop.f32.mrb[0].mxu0
      %v3212 = vadd.f32 %v2779, %v3211
      %v3213 = vpop.f32.mrb[0].mxu0
      %v3214 = vpop.f32.mrb[0].mxu0
      %v3215 = vadd.f32 %v2782, %v3214
      %v3216 = vpop.f32.mrb[0].mxu0
      %3217 = vmatprep.mubr.bf16.mxu0 %v1870
      %3218 = vmatmul.mubr.bf16.gmra.mrb[0].mxu0 %v1762
      %v3219 = vpop.f32.mrb[0].mxu0
      %v3220 = vadd.f32 %v2787, %v3219
      %v3221 = vpop.f32.mrb[0].mxu0
      %v3222 = vpop.f32.mrb[0].mxu0
      %v3223 = vadd.f32 %v2790, %v3222
      %v3224 = vpop.f32.mrb[0].mxu0
      %3225 = vmatprep.mubr.bf16.mxu0 %v1871
      %3226 = vmatmul.mubr.bf16.gmra.mrb[0].mxu0 %v1763
      %v3227 = vpop.f32.mrb[0].mxu0
      %v3228 = vadd.f32 %v2795, %v3227
      %v3229 = vpop.f32.mrb[0].mxu0
      %v3230 = vpop.f32.mrb[0].mxu0
      %v3231 = vadd.f32 %v2798, %v3230
      %v3232 = vpop.f32.mrb[0].mxu0
      %3233 = vdwg.mxu0
      %3234 = vmatprep.subr.bf16.mxu0 0
      %3235 = vmatpush1.bf16.msra.mxu0 %v2913
      %3236 = vmatprep.subr.bf16.mxu0 0
      %3237 = vmatpush1.bf16.msra.mxu0 %v2914
      %3238 = vmatprep.subr.bf16.mxu0 0
      %3239 = vmatpush1.bf16.msra.mxu0 %v2915
      %3240 = vmatprep.subr.bf16.mxu0 0
      %3241 = vmatpush1.bf16.msra.mxu0 %v2916
      %3242 = vmatprep.subr.bf16.mxu0 0
      %3243 = vmatpush1.bf16.msra.mxu0 %v2917
      %3244 = vmatprep.subr.bf16.mxu0 0
      %3245 = vmatpush1.bf16.msra.mxu0 %v2918
      %3246 = vmatprep.subr.bf16.mxu0 0
      %3247 = vmatpush1.bf16.msra.mxu0 %v2919
      %3248 = vmatprep.subr.bf16.mxu0 0
      %3249 = vmatpush1.bf16.msra.mxu0 %v2920
      %3250 = vmatprep.subr.bf16.mxu0 0
      %3251 = vmatpush1.bf16.msra.mxu0 0
      %3252 = vmatprep.subr.bf16.mxu0 0
      %3253 = vmatpush1.bf16.msra.mxu0 0
      %3254 = vmatprep.subr.bf16.mxu0 0
      %3255 = vmatpush1.bf16.msra.mxu0 0
      %3256 = vmatprep.subr.bf16.mxu0 0
      %3257 = vmatpush1.bf16.msra.mxu0 0
      %3258 = vmatprep.subr.bf16.mxu0 0
      %3259 = vmatpush1.bf16.msra.mxu0 0
      %3260 = vmatprep.subr.bf16.mxu0 0
      %3261 = vmatpush1.bf16.msra.mxu0 0
      %3262 = vmatprep.subr.bf16.mxu0 0
      %3263 = vmatpush1.bf16.msra.mxu0 0
      %3264 = vmatprep.subr.bf16.mxu0 0
      %3265 = vmatpush1.bf16.msra.mxu0 0
      %3266 = vmatprep.mubr.bf16.mxu0 0
      %3267 = vmatmul.mubr.bf16.gmra.mrb[0].mxu0 %v1946
      %v3268 = vpop.f32.mrb[0].mxu0
      %v3269 = vadd.f32 %v2980, %v3268
      %v3270 = vpop.f32.mrb[0].mxu0
      %v3271 = vpop.f32.mrb[0].mxu0
      %v3272 = vadd.f32 %v2983, %v3271
      %v3273 = vpop.f32.mrb[0].mxu0
      %3274 = vmatprep.mubr.bf16.mxu0 0
      %3275 = vmatmul.mubr.bf16.gmra.mrb[0].mxu0 %v1947
      %v3276 = vpop.f32.mrb[0].mxu0
      %v3277 = vadd.f32 %v2988, %v3276
      %v3278 = vpop.f32.mrb[0].mxu0
      %v3279 = vpop.f32.mrb[0].mxu0
      %v3280 = vadd.f32 %v2991, %v3279
      %v3281 = vpop.f32.mrb[0].mxu0
      %3282 = vmatprep.mubr.bf16.mxu0 0
      %3283 = vmatmul.mubr.bf16.gmra.mrb[0].mxu0 %v1948
      %v3284 = vpop.f32.mrb[0].mxu0
      %v3285 = vadd.f32 %v2996, %v3284
      %v3286 = vpop.f32.mrb[0].mxu0
      %v3287 = vpop.f32.mrb[0].mxu0
      %v3288 = vadd.f32 %v2999, %v3287
      %v3289 = vpop.f32.mrb[0].mxu0
      %3290 = vmatprep.mubr.bf16.mxu0 0
      %3291 = vmatmul.mubr.bf16.gmra.mrb[0].mxu0 %v1949
      %v3292 = vpop.f32.mrb[0].mxu0
      %v3293 = vadd.f32 %v3004, %v3292
      %v3294 = vpop.f32.mrb[0].mxu0
      %v3295 = vpop.f32.mrb[0].mxu0
      %v3296 = vadd.f32 %v3007, %v3295
      %v3297 = vpop.f32.mrb[0].mxu0
      %3298 = vmatprep.mubr.bf16.mxu0 0
      %3299 = vmatmul.mubr.bf16.gmra.mrb[0].mxu0 %v1950
      %v3300 = vpop.f32.mrb[0].mxu0
      %v3301 = vadd.f32 %v3012, %v3300
      %v3302 = vpop.f32.mrb[0].mxu0
      %v3303 = vpop.f32.mrb[0].mxu0
      %v3304 = vadd.f32 %v3015, %v3303
      %v3305 = vpop.f32.mrb[0].mxu0
      %3306 = vmatprep.mubr.bf16.mxu0 0
      %3307 = vmatmul.mubr.bf16.gmra.mrb[0].mxu0 %v1951
      %v3308 = vpop.f32.mrb[0].mxu0
      %v3309 = vadd.f32 %v3020, %v3308
      %v3310 = vpop.f32.mrb[0].mxu0
      %v3311 = vpop.f32.mrb[0].mxu0
      %v3312 = vadd.f32 %v3023, %v3311
      %v3313 = vpop.f32.mrb[0].mxu0
      %3314 = vmatprep.mubr.bf16.mxu0 0
      %3315 = vmatmul.mubr.bf16.gmra.mrb[0].mxu0 %v1952
      %v3316 = vpop.f32.mrb[0].mxu0
      %v3317 = vadd.f32 %v3028, %v3316
      %v3318 = vpop.f32.mrb[0].mxu0
      %v3319 = vpop.f32.mrb[0].mxu0
      %v3320 = vadd.f32 %v3031, %v3319
      %v3321 = vpop.f32.mrb[0].mxu0
      %3322 = vmatprep.mubr.bf16.mxu0 0
      %3323 = vmatmul.mubr.bf16.gmra.mrb[0].mxu0 %v1953
      %v3324 = vpop.f32.mrb[0].mxu0
      %v3325 = vadd.f32 %v3036, %v3324
      %v3326 = vpop.f32.mrb[0].mxu0
      %v3327 = vpop.f32.mrb[0].mxu0
      %v3328 = vadd.f32 %v3039, %v3327
      %v3329 = vpop.f32.mrb[0].mxu0
      %3330 = vmatprep.mubr.bf16.mxu0 0
      %3331 = vmatmul.mubr.bf16.gmra.mrb[0].mxu0 %v1954
      %v3332 = vpop.f32.mrb[0].mxu0
      %v3333 = vadd.f32 %v3044, %v3332
      %v3334 = vpop.f32.mrb[0].mxu0
      %v3335 = vpop.f32.mrb[0].mxu0
      %v3336 = vadd.f32 %v3047, %v3335
      %v3337 = vpop.f32.mrb[0].mxu0
      %3338 = vmatprep.mubr.bf16.mxu0 0
      %3339 = vmatmul.mubr.bf16.gmra.mrb[0].mxu0 %v1955
      %v3340 = vpop.f32.mrb[0].mxu0
      %v3341 = vadd.f32 %v3052, %v3340
      %v3342 = vpop.f32.mrb[0].mxu0
      %v3343 = vpop.f32.mrb[0].mxu0
      %v3344 = vadd.f32 %v3055, %v3343
      %v3345 = vpop.f32.mrb[0].mxu0
      %3346 = vmatprep.mubr.bf16.mxu0 0
      %3347 = vmatmul.mubr.bf16.gmra.mrb[0].mxu0 %v1956
      %v3348 = vpop.f32.mrb[0].mxu0
      %v3349 = vadd.f32 %v3060, %v3348
      %v3350 = vpop.f32.mrb[0].mxu0
      %v3351 = vpop.f32.mrb[0].mxu0
      %v3352 = vadd.f32 %v3063, %v3351
      %v3353 = vpop.f32.mrb[0].mxu0
      %3354 = vmatprep.mubr.bf16.mxu0 0
      %3355 = vmatmul.mubr.bf16.gmra.mrb[0].mxu0 %v1957
      %v3356 = vpop.f32.mrb[0].mxu0
      %v3357 = vadd.f32 %v3068, %v3356
      %v3358 = vpop.f32.mrb[0].mxu0
      %v3359 = vpop.f32.mrb[0].mxu0
      %v3360 = vadd.f32 %v3071, %v3359
      %v3361 = vpop.f32.mrb[0].mxu0
      %3362 = vmatprep.mubr.bf16.mxu0 0
      %3363 = vmatmul.mubr.bf16.gmra.mrb[0].mxu0 %v1958
      %v3364 = vpop.f32.mrb[0].mxu0
      %v3365 = vadd.f32 %v3076, %v3364
      %v3366 = vpop.f32.mrb[0].mxu0
      %v3367 = vpop.f32.mrb[0].mxu0
      %v3368 = vadd.f32 %v3079, %v3367
      %v3369 = vpop.f32.mrb[0].mxu0
      %3370 = vmatprep.mubr.bf16.mxu0 0
      %3371 = vmatmul.mubr.bf16.gmra.mrb[0].mxu0 %v1959
      %v3372 = vpop.f32.mrb[0].mxu0
      %v3373 = vadd.f32 %v3084, %v3372
      %v3374 = vpop.f32.mrb[0].mxu0
      %v3375 = vpop.f32.mrb[0].mxu0
      %v3376 = vadd.f32 %v3087, %v3375
      %v3377 = vpop.f32.mrb[0].mxu0
      %3378 = vmatprep.mubr.bf16.mxu0 0
      %3379 = vmatmul.mubr.bf16.gmra.mrb[0].mxu0 %v1960
      %v3380 = vpop.f32.mrb[0].mxu0
      %v3381 = vadd.f32 %v3092, %v3380
      %v3382 = vpop.f32.mrb[0].mxu0
      %v3383 = vpop.f32.mrb[0].mxu0
      %v3384 = vadd.f32 %v3095, %v3383
      %v3385 = vpop.f32.mrb[0].mxu0
      %3386 = vmatprep.mubr.bf16.mxu0 0
      %3387 = vmatmul.mubr.bf16.gmra.mrb[0].mxu0 %v1961
      %v3388 = vpop.f32.mrb[0].mxu0
      %v3389 = vadd.f32 %v3100, %v3388
      %v3390 = vpop.f32.mrb[0].mxu0
      %v3391 = vpop.f32.mrb[0].mxu0
      %v3392 = vadd.f32 %v3103, %v3391
      %v3393 = vpop.f32.mrb[0].mxu0
      %3394 = vmatprep.mubr.bf16.mxu0 0
      %3395 = vmatmul.mubr.bf16.gmra.mrb[0].mxu0 %v1964
      %v3396 = vpop.f32.mrb[0].mxu0
      %v3397 = vadd.f32 %v3108, %v3396
      %v3398 = vpop.f32.mrb[0].mxu0
      %v3399 = vpop.f32.mrb[0].mxu0
      %v3400 = vadd.f32 %v3111, %v3399
      %v3401 = vpop.f32.mrb[0].mxu0
      %3402 = vmatprep.mubr.bf16.mxu0 0
      %3403 = vmatmul.mubr.bf16.gmra.mrb[0].mxu0 %v1965
      %v3404 = vpop.f32.mrb[0].mxu0
      %v3405 = vadd.f32 %v3116, %v3404
      %v3406 = vpop.f32.mrb[0].mxu0
      %v3407 = vpop.f32.mrb[0].mxu0
      %v3408 = vadd.f32 %v3119, %v3407
      %v3409 = vpop.f32.mrb[0].mxu0
      %3410 = vmatprep.mubr.bf16.mxu0 0
      %3411 = vmatmul.mubr.bf16.gmra.mrb[0].mxu0 %v1966
      %v3412 = vpop.f32.mrb[0].mxu0
      %v3413 = vadd.f32 %v3124, %v3412
      %v3414 = vpop.f32.mrb[0].mxu0
      %v3415 = vpop.f32.mrb[0].mxu0
      %v3416 = vadd.f32 %v3127, %v3415
      %v3417 = vpop.f32.mrb[0].mxu0
      %3418 = vmatprep.mubr.bf16.mxu0 0
      %3419 = vmatmul.mubr.bf16.gmra.mrb[0].mxu0 %v1967
      %v3420 = vpop.f32.mrb[0].mxu0
      %v3421 = vadd.f32 %v3132, %v3420
      %v3422 = vpop.f32.mrb[0].mxu0
      %v3423 = vpop.f32.mrb[0].mxu0
      %v3424 = vadd.f32 %v3135, %v3423
      %v3425 = vpop.f32.mrb[0].mxu0
      %3426 = vmatprep.mubr.bf16.mxu0 0
      %3427 = vmatmul.mubr.bf16.gmra.mrb[0].mxu0 %v1968
      %v3428 = vpop.f32.mrb[0].mxu0
      %v3429 = vadd.f32 %v3140, %v3428
      %v3430 = vpop.f32.mrb[0].mxu0
      %v3431 = vpop.f32.mrb[0].mxu0
      %v3432 = vadd.f32 %v3143, %v3431
      %v3433 = vpop.f32.mrb[0].mxu0
      %3434 = vmatprep.mubr.bf16.mxu0 0
      %3435 = vmatmul.mubr.bf16.gmra.mrb[0].mxu0 %v1969
      %v3436 = vpop.f32.mrb[0].mxu0
      %v3437 = vadd.f32 %v3148, %v3436
      %v3438 = vpop.f32.mrb[0].mxu0
      %v3439 = vpop.f32.mrb[0].mxu0
      %v3440 = vadd.f32 %v3151, %v3439
      %v3441 = vpop.f32.mrb[0].mxu0
      %3442 = vmatprep.mubr.bf16.mxu0 0
      %3443 = vmatmul.mubr.bf16.gmra.mrb[0].mxu0 %v1970
      %v3444 = vpop.f32.mrb[0].mxu0
      %v3445 = vadd.f32 %v3156, %v3444
      %v3446 = vpop.f32.mrb[0].mxu0
      %v3447 = vpop.f32.mrb[0].mxu0
      %v3448 = vadd.f32 %v3159, %v3447
      %v3449 = vpop.f32.mrb[0].mxu0
      %3450 = vmatprep.mubr.bf16.mxu0 0
      %3451 = vmatmul.mubr.bf16.gmra.mrb[0].mxu0 %v1971
      %v3452 = vpop.f32.mrb[0].mxu0
      %v3453 = vadd.f32 %v3164, %v3452
      %v3454 = vpop.f32.mrb[0].mxu0
      %v3455 = vpop.f32.mrb[0].mxu0
      %v3456 = vadd.f32 %v3167, %v3455
      %v3457 = vpop.f32.mrb[0].mxu0
      %3458 = vmatprep.mubr.bf16.mxu0 0
      %3459 = vmatmul.mubr.bf16.gmra.mrb[0].mxu0 %v1972
      %v3460 = vpop.f32.mrb[0].mxu0
      %v3461 = vadd.f32 %v3172, %v3460
      %v3462 = vpop.f32.mrb[0].mxu0
      %v3463 = vpop.f32.mrb[0].mxu0
      %v3464 = vadd.f32 %v3175, %v3463
      %v3465 = vpop.f32.mrb[0].mxu0
      %3466 = vmatprep.mubr.bf16.mxu0 0
      %3467 = vmatmul.mubr.bf16.gmra.mrb[0].mxu0 %v1973
      %v3468 = vpop.f32.mrb[0].mxu0
      %v3469 = vadd.f32 %v3180, %v3468
      %v3470 = vpop.f32.mrb[0].mxu0
      %v3471 = vpop.f32.mrb[0].mxu0
      %v3472 = vadd.f32 %v3183, %v3471
      %v3473 = vpop.f32.mrb[0].mxu0
      %3474 = vmatprep.mubr.bf16.mxu0 0
      %3475 = vmatmul.mubr.bf16.gmra.mrb[0].mxu0 %v1974
      %v3476 = vpop.f32.mrb[0].mxu0
      %v3477 = vadd.f32 %v3188, %v3476
      %v3478 = vpop.f32.mrb[0].mxu0
      %v3479 = vpop.f32.mrb[0].mxu0
      %v3480 = vadd.f32 %v3191, %v3479
      %v3481 = vpop.f32.mrb[0].mxu0
      %3482 = vmatprep.mubr.bf16.mxu0 0
      %3483 = vmatmul.mubr.bf16.gmra.mrb[0].mxu0 %v1975
      %v3484 = vpop.f32.mrb[0].mxu0
      %v3485 = vadd.f32 %v3196, %v3484
      %v3486 = vpop.f32.mrb[0].mxu0
      %v3487 = vpop.f32.mrb[0].mxu0
      %v3488 = vadd.f32 %v3199, %v3487
      %v3489 = vpop.f32.mrb[0].mxu0
      %3490 = vmatprep.mubr.bf16.mxu0 0
      %3491 = vmatmul.mubr.bf16.gmra.mrb[0].mxu0 %v1976
      %v3492 = vpop.f32.mrb[0].mxu0
      %v3493 = vadd.f32 %v3204, %v3492
      %v3494 = vpop.f32.mrb[0].mxu0
      %v3495 = vpop.f32.mrb[0].mxu0
      %v3496 = vadd.f32 %v3207, %v3495
      %v3497 = vpop.f32.mrb[0].mxu0
      %3498 = vmatprep.mubr.bf16.mxu0 0
      %3499 = vmatmul.mubr.bf16.gmra.mrb[0].mxu0 %v1977
      %v3500 = vpop.f32.mrb[0].mxu0
      %v3501 = vadd.f32 %v3212, %v3500
      %v3502 = vpop.f32.mrb[0].mxu0
      %v3503 = vpop.f32.mrb[0].mxu0
      %v3504 = vadd.f32 %v3215, %v3503
      %v3505 = vpop.f32.mrb[0].mxu0
      %3506 = vmatprep.mubr.bf16.mxu0 0
      %3507 = vmatmul.mubr.bf16.gmra.mrb[0].mxu0 %v1978
      %v3508 = vpop.f32.mrb[0].mxu0
      %v3509 = vadd.f32 %v3220, %v3508
      %v3510 = vpop.f32.mrb[0].mxu0
      %v3511 = vpop.f32.mrb[0].mxu0
      %v3512 = vadd.f32 %v3223, %v3511
      %v3513 = vpop.f32.mrb[0].mxu0
      %3514 = vmatprep.mubr.bf16.mxu0 0
      %3515 = vmatmul.mubr.bf16.gmra.mrb[0].mxu0 %v1979
      %v3516 = vpop.f32.mrb[0].mxu0
      %v3517 = vadd.f32 %v3228, %v3516
      %v3518 = vpop.f32.mrb[0].mxu0
      %v3519 = vpop.f32.mrb[0].mxu0
      %v3520 = vadd.f32 %v3231, %v3519
      %v3521 = vpop.f32.mrb[0].mxu0
      %3522 = vdwg.mxu0
      %s3523 = scalar_lea.vmem %s307, 384
      %v3524 = vld [vmem:[%s3523] sm:$0xf]
      %v3525 = vld [vmem:[%s3523 + $0x4] sm:$0xf]
      %v3526 = vld [vmem:[%s3523 + $0x8] sm:$0xf]
      %v3527 = vld [vmem:[%s3523 + $0xc] sm:$0xf]
      %v3528 = vld [vmem:[%s3523 + $0x10] sm:$0xf]
      %v3529 = vld [vmem:[%s3523 + $0x14] sm:$0xf]
      %v3530 = vld [vmem:[%s3523 + $0x18] sm:$0xf]
      %v3531 = vld [vmem:[%s3523 + $0x1c] sm:$0xf]
      %v3532 = vld [vmem:[%s3523 + $0x20] sm:$0xf]
      %v3533 = vld [vmem:[%s3523 + $0x24] sm:$0xf]
      %v3534 = vld [vmem:[%s3523 + $0x28] sm:$0xf]
      %v3535 = vld [vmem:[%s3523 + $0x2c] sm:$0xf]
      %v3536 = vld [vmem:[%s3523 + $0x30] sm:$0xf]
      %v3537 = vld [vmem:[%s3523 + $0x34] sm:$0xf]
      %v3538 = vld [vmem:[%s3523 + $0x38] sm:$0xf]
      %v3539 = vld [vmem:[%s3523 + $0x3c] sm:$0xf]
      %v3540 = vld [vmem:[%s3523 + $0x40] sm:$0xf]
      %v3541 = vld [vmem:[%s3523 + $0x44] sm:$0xf]
      %v3542 = vld [vmem:[%s3523 + $0x48] sm:$0xf]
      %v3543 = vld [vmem:[%s3523 + $0x4c] sm:$0xf]
      %v3544 = vld [vmem:[%s3523 + $0x50] sm:$0xf]
      %v3545 = vld [vmem:[%s3523 + $0x54] sm:$0xf]
      %v3546 = vld [vmem:[%s3523 + $0x58] sm:$0xf]
      %v3547 = vld [vmem:[%s3523 + $0x5c] sm:$0xf]
      %v3548 = vld [vmem:[%s3523 + $0x60] sm:$0xf]
      %v3549 = vld [vmem:[%s3523 + $0x64] sm:$0xf]
      %v3550 = vld [vmem:[%s3523 + $0x68] sm:$0xf]
      %v3551 = vld [vmem:[%s3523 + $0x6c] sm:$0xf]
      %v3552 = vld [vmem:[%s3523 + $0x70] sm:$0xf]
      %v3553 = vld [vmem:[%s3523 + $0x74] sm:$0xf]
      %v3554 = vld [vmem:[%s3523 + $0x78] sm:$0xf]
      %v3555 = vld [vmem:[%s3523 + $0x7c] sm:$0xf]
      %v3556 = vld [vmem:[%s3523 + $0x80] sm:$0xf]
      %v3557 = vld [vmem:[%s3523 + $0x84] sm:$0xf]
      %v3558 = vld [vmem:[%s3523 + $0x88] sm:$0xf]
      %v3559 = vld [vmem:[%s3523 + $0x8c] sm:$0xf]
      %v3560 = vld [vmem:[%s3523 + $0x90] sm:$0xf]
      %v3561 = vld [vmem:[%s3523 + $0x94] sm:$0xf]
      %v3562 = vld [vmem:[%s3523 + $0x98] sm:$0xf]
      %v3563 = vld [vmem:[%s3523 + $0x9c] sm:$0xf]
      %v3564 = vld [vmem:[%s3523 + $0xa0] sm:$0xf]
      %v3565 = vld [vmem:[%s3523 + $0xa4] sm:$0xf]
      %v3566 = vld [vmem:[%s3523 + $0xa8] sm:$0xf]
      %v3567 = vld [vmem:[%s3523 + $0xac] sm:$0xf]
      %v3568 = vld [vmem:[%s3523 + $0xb0] sm:$0xf]
      %v3569 = vld [vmem:[%s3523 + $0xb4] sm:$0xf]
      %v3570 = vld [vmem:[%s3523 + $0xb8] sm:$0xf]
      %v3571 = vld [vmem:[%s3523 + $0xbc] sm:$0xf]
      %v3620 = vunpack.c.l.b16 %v3524
      %v3621 = vunpack.c.l.b16 %v3525
      %v3622 = vunpack.c.l.b16 %v3526
      %v3623 = vunpack.c.l.b16 %v3527
      %v3624 = vunpack.c.l.b16 %v3528
      %v3625 = vunpack.c.l.b16 %v3529
      %v3626 = vunpack.c.l.b16 %v3530
      %v3627 = vunpack.c.l.b16 %v3531
      %v3628 = vunpack.c.l.b16 %v3532
      %v3629 = vunpack.c.l.b16 %v3533
      %v3630 = vunpack.c.l.b16 %v3534
      %v3631 = vunpack.c.l.b16 %v3535
      %v3632 = vunpack.c.l.b16 %v3536
      %v3633 = vunpack.c.l.b16 %v3537
      %v3634 = vunpack.c.l.b16 %v3538
      %v3635 = vunpack.c.l.b16 %v3539
      %v3636 = vunpack.c.l.b16 %v3540
      %v3637 = vunpack.c.l.b16 %v3541
      %v3638 = vunpack.c.l.b16 %v3542
      %v3639 = vunpack.c.l.b16 %v3543
      %v3640 = vunpack.c.l.b16 %v3544
      %v3641 = vunpack.c.l.b16 %v3545
      %v3642 = vunpack.c.l.b16 %v3546
      %v3643 = vunpack.c.l.b16 %v3547
      %v3644 = vunpack.c.l.b16 %v3548
      %v3645 = vunpack.c.l.b16 %v3549
      %v3646 = vunpack.c.l.b16 %v3550
      %v3647 = vunpack.c.l.b16 %v3551
      %v3648 = vunpack.c.l.b16 %v3552
      %v3649 = vunpack.c.l.b16 %v3553
      %v3650 = vunpack.c.l.b16 %v3554
      %v3651 = vunpack.c.l.b16 %v3555
      %v3652 = vunpack.c.l.b16 %v3556
      %v3653 = vunpack.c.l.b16 %v3557
      %v3654 = vunpack.c.l.b16 %v3558
      %v3655 = vunpack.c.l.b16 %v3559
      %v3656 = vunpack.c.l.b16 %v3560
      %v3657 = vunpack.c.l.b16 %v3561
      %v3658 = vunpack.c.l.b16 %v3562
      %v3659 = vunpack.c.l.b16 %v3563
      %v3660 = vunpack.c.l.b16 %v3564
      %v3661 = vunpack.c.l.b16 %v3565
      %v3662 = vunpack.c.l.b16 %v3566
      %v3663 = vunpack.c.l.b16 %v3567
      %v3664 = vunpack.c.l.b16 %v3568
      %v3665 = vunpack.c.l.b16 %v3569
      %v3666 = vunpack.c.l.b16 %v3570
      %v3667 = vunpack.c.l.b16 %v3571
      %v3668 = vpack.c.b16 %v3621, %v3620
      %v3669 = vpack.c.b16 %v3623, %v3622
      %v3670 = vpack.c.b16 %v3625, %v3624
      %v3671 = vpack.c.b16 %v3627, %v3626
      %v3672 = vpack.c.b16 %v3629, %v3628
      %v3673 = vpack.c.b16 %v3631, %v3630
      %v3674 = vpack.c.b16 %v3633, %v3632
      %v3675 = vpack.c.b16 %v3635, %v3634
      %v3676 = vpack.c.b16 %v3637, %v3636
      %v3677 = vpack.c.b16 %v3639, %v3638
      %v3678 = vpack.c.b16 %v3641, %v3640
      %v3679 = vpack.c.b16 %v3643, %v3642
      %v3680 = vpack.c.b16 %v3645, %v3644
      %v3681 = vpack.c.b16 %v3647, %v3646
      %v3682 = vpack.c.b16 %v3649, %v3648
      %v3683 = vpack.c.b16 %v3651, %v3650
      %v3684 = vpack.c.b16 %v3653, %v3652
      %v3685 = vpack.c.b16 %v3655, %v3654
      %v3686 = vpack.c.b16 %v3657, %v3656
      %v3687 = vpack.c.b16 %v3659, %v3658
      %v3688 = vpack.c.b16 %v3661, %v3660
      %v3689 = vpack.c.b16 %v3663, %v3662
      %v3690 = vpack.c.b16 %v3665, %v3664
      %v3691 = vpack.c.b16 %v3667, %v3666
      %3716 = vmatprep.subr.bf16.mxu0 0
      %3717 = vmatpush1.bf16.msra.mxu0 %v3668
      %3718 = vmatprep.subr.bf16.mxu0 0
      %3719 = vmatpush1.bf16.msra.mxu0 %v3669
      %3720 = vmatprep.subr.bf16.mxu0 0
      %3721 = vmatpush1.bf16.msra.mxu0 %v3670
      %3722 = vmatprep.subr.bf16.mxu0 0
      %3723 = vmatpush1.bf16.msra.mxu0 %v3671
      %3724 = vmatprep.subr.bf16.mxu0 0
      %3725 = vmatpush1.bf16.msra.mxu0 %v3672
      %3726 = vmatprep.subr.bf16.mxu0 0
      %3727 = vmatpush1.bf16.msra.mxu0 %v3673
      %3728 = vmatprep.subr.bf16.mxu0 0
      %3729 = vmatpush1.bf16.msra.mxu0 %v3674
      %3730 = vmatprep.subr.bf16.mxu0 0
      %3731 = vmatpush1.bf16.msra.mxu0 %v3675
      %3732 = vmatprep.subr.bf16.mxu0 0
      %3733 = vmatpush1.bf16.msra.mxu0 %v3676
      %3734 = vmatprep.subr.bf16.mxu0 0
      %3735 = vmatpush1.bf16.msra.mxu0 %v3677
      %3736 = vmatprep.subr.bf16.mxu0 0
      %3737 = vmatpush1.bf16.msra.mxu0 %v3678
      %3738 = vmatprep.subr.bf16.mxu0 0
      %3739 = vmatpush1.bf16.msra.mxu0 %v3679
      %3740 = vmatprep.subr.bf16.mxu0 0
      %3741 = vmatpush1.bf16.msra.mxu0 %v3680
      %3742 = vmatprep.subr.bf16.mxu0 0
      %3743 = vmatpush1.bf16.msra.mxu0 %v3681
      %3744 = vmatprep.subr.bf16.mxu0 0
      %3745 = vmatpush1.bf16.msra.mxu0 %v3682
      %3746 = vmatprep.subr.bf16.mxu0 0
      %3747 = vmatpush1.bf16.msra.mxu0 %v3683
      %3748 = vmatprep.mubr.bf16.mxu0 %v1840
      %3749 = vmatmul.mubr.bf16.gmra.mrb[0].mxu0 %v1732
      %v3750 = vpop.f32.mrb[0].mxu0
      %v3751 = vadd.f32 0.0, %v3750
      %v3752 = vpop.f32.mrb[0].mxu0
      %v3753 = vpop.f32.mrb[0].mxu0
      %v3754 = vadd.f32 0.0, %v3753
      %v3755 = vpop.f32.mrb[0].mxu0
      %3756 = vmatprep.mubr.bf16.mxu0 %v1841
      %3757 = vmatmul.mubr.bf16.gmra.mrb[0].mxu0 %v1733
      %v3758 = vpop.f32.mrb[0].mxu0
      %v3759 = vadd.f32 0.0, %v3758
      %v3760 = vpop.f32.mrb[0].mxu0
      %v3761 = vpop.f32.mrb[0].mxu0
      %v3762 = vadd.f32 0.0, %v3761
      %v3763 = vpop.f32.mrb[0].mxu0
      %3764 = vmatprep.mubr.bf16.mxu0 %v1842
      %3765 = vmatmul.mubr.bf16.gmra.mrb[0].mxu0 %v1734
      %v3766 = vpop.f32.mrb[0].mxu0
      %v3767 = vadd.f32 0.0, %v3766
      %v3768 = vpop.f32.mrb[0].mxu0
      %v3769 = vpop.f32.mrb[0].mxu0
      %v3770 = vadd.f32 0.0, %v3769
      %v3771 = vpop.f32.mrb[0].mxu0
      %3772 = vmatprep.mubr.bf16.mxu0 %v1843
      %3773 = vmatmul.mubr.bf16.gmra.mrb[0].mxu0 %v1735
      %v3774 = vpop.f32.mrb[0].mxu0
      %v3775 = vadd.f32 0.0, %v3774
      %v3776 = vpop.f32.mrb[0].mxu0
      %v3777 = vpop.f32.mrb[0].mxu0
      %v3778 = vadd.f32 0.0, %v3777
      %v3779 = vpop.f32.mrb[0].mxu0
      %3780 = vmatprep.mubr.bf16.mxu0 %v1844
      %3781 = vmatmul.mubr.bf16.gmra.mrb[0].mxu0 %v1736
      %v3782 = vpop.f32.mrb[0].mxu0
      %v3783 = vadd.f32 0.0, %v3782
      %v3784 = vpop.f32.mrb[0].mxu0
      %v3785 = vpop.f32.mrb[0].mxu0
      %v3786 = vadd.f32 0.0, %v3785
      %v3787 = vpop.f32.mrb[0].mxu0
      %3788 = vmatprep.mubr.bf16.mxu0 %v1845
      %3789 = vmatmul.mubr.bf16.gmra.mrb[0].mxu0 %v1737
      %v3790 = vpop.f32.mrb[0].mxu0
      %v3791 = vadd.f32 0.0, %v3790
      %v3792 = vpop.f32.mrb[0].mxu0
      %v3793 = vpop.f32.mrb[0].mxu0
      %v3794 = vadd.f32 0.0, %v3793
      %v3795 = vpop.f32.mrb[0].mxu0
      %3796 = vmatprep.mubr.bf16.mxu0 %v1846
      %3797 = vmatmul.mubr.bf16.gmra.mrb[0].mxu0 %v1738
      %v3798 = vpop.f32.mrb[0].mxu0
      %v3799 = vadd.f32 0.0, %v3798
      %v3800 = vpop.f32.mrb[0].mxu0
      %v3801 = vpop.f32.mrb[0].mxu0
      %v3802 = vadd.f32 0.0, %v3801
      %v3803 = vpop.f32.mrb[0].mxu0
      %3804 = vmatprep.mubr.bf16.mxu0 %v1847
      %3805 = vmatmul.mubr.bf16.gmra.mrb[0].mxu0 %v1739
      %v3806 = vpop.f32.mrb[0].mxu0
      %v3807 = vadd.f32 0.0, %v3806
      %v3808 = vpop.f32.mrb[0].mxu0
      %v3809 = vpop.f32.mrb[0].mxu0
      %v3810 = vadd.f32 0.0, %v3809
      %v3811 = vpop.f32.mrb[0].mxu0
      %3812 = vmatprep.mubr.bf16.mxu0 %v1848
      %3813 = vmatmul.mubr.bf16.gmra.mrb[0].mxu0 %v1740
      %v3814 = vpop.f32.mrb[0].mxu0
      %v3815 = vadd.f32 0.0, %v3814
      %v3816 = vpop.f32.mrb[0].mxu0
      %v3817 = vpop.f32.mrb[0].mxu0
      %v3818 = vadd.f32 0.0, %v3817
      %v3819 = vpop.f32.mrb[0].mxu0
      %3820 = vmatprep.mubr.bf16.mxu0 %v1849
      %3821 = vmatmul.mubr.bf16.gmra.mrb[0].mxu0 %v1741
      %v3822 = vpop.f32.mrb[0].mxu0
      %v3823 = vadd.f32 0.0, %v3822
      %v3824 = vpop.f32.mrb[0].mxu0
      %v3825 = vpop.f32.mrb[0].mxu0
      %v3826 = vadd.f32 0.0, %v3825
      %v3827 = vpop.f32.mrb[0].mxu0
      %3828 = vmatprep.mubr.bf16.mxu0 %v1850
      %3829 = vmatmul.mubr.bf16.gmra.mrb[0].mxu0 %v1742
      %v3830 = vpop.f32.mrb[0].mxu0
      %v3831 = vadd.f32 0.0, %v3830
      %v3832 = vpop.f32.mrb[0].mxu0
      %v3833 = vpop.f32.mrb[0].mxu0
      %v3834 = vadd.f32 0.0, %v3833
      %v3835 = vpop.f32.mrb[0].mxu0
      %3836 = vmatprep.mubr.bf16.mxu0 %v1851
      %3837 = vmatmul.mubr.bf16.gmra.mrb[0].mxu0 %v1743
      %v3838 = vpop.f32.mrb[0].mxu0
      %v3839 = vadd.f32 0.0, %v3838
      %v3840 = vpop.f32.mrb[0].mxu0
      %v3841 = vpop.f32.mrb[0].mxu0
      %v3842 = vadd.f32 0.0, %v3841
      %v3843 = vpop.f32.mrb[0].mxu0
      %3844 = vmatprep.mubr.bf16.mxu0 %v1852
      %3845 = vmatmul.mubr.bf16.gmra.mrb[0].mxu0 %v1744
      %v3846 = vpop.f32.mrb[0].mxu0
      %v3847 = vadd.f32 0.0, %v3846
      %v3848 = vpop.f32.mrb[0].mxu0
      %v3849 = vpop.f32.mrb[0].mxu0
      %v3850 = vadd.f32 0.0, %v3849
      %v3851 = vpop.f32.mrb[0].mxu0
      %3852 = vmatprep.mubr.bf16.mxu0 %v1853
      %3853 = vmatmul.mubr.bf16.gmra.mrb[0].mxu0 %v1745
      %v3854 = vpop.f32.mrb[0].mxu0
      %v3855 = vadd.f32 0.0, %v3854
      %v3856 = vpop.f32.mrb[0].mxu0
      %v3857 = vpop.f32.mrb[0].mxu0
      %v3858 = vadd.f32 0.0, %v3857
      %v3859 = vpop.f32.mrb[0].mxu0
      %3860 = vmatprep.mubr.bf16.mxu0 %v1854
      %3861 = vmatmul.mubr.bf16.gmra.mrb[0].mxu0 %v1746
      %v3862 = vpop.f32.mrb[0].mxu0
      %v3863 = vadd.f32 0.0, %v3862
      %v3864 = vpop.f32.mrb[0].mxu0
      %v3865 = vpop.f32.mrb[0].mxu0
      %v3866 = vadd.f32 0.0, %v3865
      %v3867 = vpop.f32.mrb[0].mxu0
      %3868 = vmatprep.mubr.bf16.mxu0 %v1855
      %3869 = vmatmul.mubr.bf16.gmra.mrb[0].mxu0 %v1747
      %v3870 = vpop.f32.mrb[0].mxu0
      %v3871 = vadd.f32 0.0, %v3870
      %v3872 = vpop.f32.mrb[0].mxu0
      %v3873 = vpop.f32.mrb[0].mxu0
      %v3874 = vadd.f32 0.0, %v3873
      %v3875 = vpop.f32.mrb[0].mxu0
      %3876 = vmatprep.mubr.bf16.mxu0 %v1858
      %3877 = vmatmul.mubr.bf16.gmra.mrb[0].mxu0 %v1750
      %v3878 = vpop.f32.mrb[0].mxu0
      %v3879 = vadd.f32 0.0, %v3878
      %v3880 = vpop.f32.mrb[0].mxu0
      %v3881 = vpop.f32.mrb[0].mxu0
      %v3882 = vadd.f32 0.0, %v3881
      %v3883 = vpop.f32.mrb[0].mxu0
      %3884 = vmatprep.mubr.bf16.mxu0 %v1859
      %3885 = vmatmul.mubr.bf16.gmra.mrb[0].mxu0 %v1751
      %v3886 = vpop.f32.mrb[0].mxu0
      %v3887 = vadd.f32 0.0, %v3886
      %v3888 = vpop.f32.mrb[0].mxu0
      %v3889 = vpop.f32.mrb[0].mxu0
      %v3890 = vadd.f32 0.0, %v3889
      %v3891 = vpop.f32.mrb[0].mxu0
      %3892 = vmatprep.mubr.bf16.mxu0 %v1860
      %3893 = vmatmul.mubr.bf16.gmra.mrb[0].mxu0 %v1752
      %v3894 = vpop.f32.mrb[0].mxu0
      %v3895 = vadd.f32 0.0, %v3894
      %v3896 = vpop.f32.mrb[0].mxu0
      %v3897 = vpop.f32.mrb[0].mxu0
      %v3898 = vadd.f32 0.0, %v3897
      %v3899 = vpop.f32.mrb[0].mxu0
      %3900 = vmatprep.mubr.bf16.mxu0 %v1861
      %3901 = vmatmul.mubr.bf16.gmra.mrb[0].mxu0 %v1753
      %v3902 = vpop.f32.mrb[0].mxu0
      %v3903 = vadd.f32 0.0, %v3902
      %v3904 = vpop.f32.mrb[0].mxu0
      %v3905 = vpop.f32.mrb[0].mxu0
      %v3906 = vadd.f32 0.0, %v3905
      %v3907 = vpop.f32.mrb[0].mxu0
      %3908 = vmatprep.mubr.bf16.mxu0 %v1862
      %3909 = vmatmul.mubr.bf16.gmra.mrb[0].mxu0 %v1754
      %v3910 = vpop.f32.mrb[0].mxu0
      %v3911 = vadd.f32 0.0, %v3910
      %v3912 = vpop.f32.mrb[0].mxu0
      %v3913 = vpop.f32.mrb[0].mxu0
      %v3914 = vadd.f32 0.0, %v3913
      %v3915 = vpop.f32.mrb[0].mxu0
      %3916 = vmatprep.mubr.bf16.mxu0 %v1863
      %3917 = vmatmul.mubr.bf16.gmra.mrb[0].mxu0 %v1755
      %v3918 = vpop.f32.mrb[0].mxu0
      %v3919 = vadd.f32 0.0, %v3918
      %v3920 = vpop.f32.mrb[0].mxu0
      %v3921 = vpop.f32.mrb[0].mxu0
      %v3922 = vadd.f32 0.0, %v3921
      %v3923 = vpop.f32.mrb[0].mxu0
      %3924 = vmatprep.mubr.bf16.mxu0 %v1864
      %3925 = vmatmul.mubr.bf16.gmra.mrb[0].mxu0 %v1756
      %v3926 = vpop.f32.mrb[0].mxu0
      %v3927 = vadd.f32 0.0, %v3926
      %v3928 = vpop.f32.mrb[0].mxu0
      %v3929 = vpop.f32.mrb[0].mxu0
      %v3930 = vadd.f32 0.0, %v3929
      %v3931 = vpop.f32.mrb[0].mxu0
      %3932 = vmatprep.mubr.bf16.mxu0 %v1865
      %3933 = vmatmul.mubr.bf16.gmra.mrb[0].mxu0 %v1757
      %v3934 = vpop.f32.mrb[0].mxu0
      %v3935 = vadd.f32 0.0, %v3934
      %v3936 = vpop.f32.mrb[0].mxu0
      %v3937 = vpop.f32.mrb[0].mxu0
      %v3938 = vadd.f32 0.0, %v3937
      %v3939 = vpop.f32.mrb[0].mxu0
      %3940 = vmatprep.mubr.bf16.mxu0 %v1866
      %3941 = vmatmul.mubr.bf16.gmra.mrb[0].mxu0 %v1758
      %v3942 = vpop.f32.mrb[0].mxu0
      %v3943 = vadd.f32 0.0, %v3942
      %v3944 = vpop.f32.mrb[0].mxu0
      %v3945 = vpop.f32.mrb[0].mxu0
      %v3946 = vadd.f32 0.0, %v3945
      %v3947 = vpop.f32.mrb[0].mxu0
      %3948 = vmatprep.mubr.bf16.mxu0 %v1867
      %3949 = vmatmul.mubr.bf16.gmra.mrb[0].mxu0 %v1759
      %v3950 = vpop.f32.mrb[0].mxu0
      %v3951 = vadd.f32 0.0, %v3950
      %v3952 = vpop.f32.mrb[0].mxu0
      %v3953 = vpop.f32.mrb[0].mxu0
      %v3954 = vadd.f32 0.0, %v3953
      %v3955 = vpop.f32.mrb[0].mxu0
      %3956 = vmatprep.mubr.bf16.mxu0 %v1868
      %3957 = vmatmul.mubr.bf16.gmra.mrb[0].mxu0 %v1760
      %v3958 = vpop.f32.mrb[0].mxu0
      %v3959 = vadd.f32 0.0, %v3958
      %v3960 = vpop.f32.mrb[0].mxu0
      %v3961 = vpop.f32.mrb[0].mxu0
      %v3962 = vadd.f32 0.0, %v3961
      %v3963 = vpop.f32.mrb[0].mxu0
      %3964 = vmatprep.mubr.bf16.mxu0 %v1869
      %3965 = vmatmul.mubr.bf16.gmra.mrb[0].mxu0 %v1761
      %v3966 = vpop.f32.mrb[0].mxu0
      %v3967 = vadd.f32 0.0, %v3966
      %v3968 = vpop.f32.mrb[0].mxu0
      %v3969 = vpop.f32.mrb[0].mxu0
      %v3970 = vadd.f32 0.0, %v3969
      %v3971 = vpop.f32.mrb[0].mxu0
      %3972 = vmatprep.mubr.bf16.mxu0 %v1870
      %3973 = vmatmul.mubr.bf16.gmra.mrb[0].mxu0 %v1762
      %v3974 = vpop.f32.mrb[0].mxu0
      %v3975 = vadd.f32 0.0, %v3974
      %v3976 = vpop.f32.mrb[0].mxu0
      %v3977 = vpop.f32.mrb[0].mxu0
      %v3978 = vadd.f32 0.0, %v3977
      %v3979 = vpop.f32.mrb[0].mxu0
      %3980 = vmatprep.mubr.bf16.mxu0 %v1871
      %3981 = vmatmul.mubr.bf16.gmra.mrb[0].mxu0 %v1763
      %v3982 = vpop.f32.mrb[0].mxu0
      %v3983 = vadd.f32 0.0, %v3982
      %v3984 = vpop.f32.mrb[0].mxu0
      %v3985 = vpop.f32.mrb[0].mxu0
      %v3986 = vadd.f32 0.0, %v3985
      %v3987 = vpop.f32.mrb[0].mxu0
      %3988 = vmatprep.mubr.bf16.mxu0 %v1872
      %3989 = vmatmul.mubr.bf16.gmra.mrb[0].mxu0 %v1764
      %v3990 = vpop.f32.mrb[0].mxu0
      %v3991 = vadd.f32 0.0, %v3990
      %v3992 = vpop.f32.mrb[0].mxu0
      %v3993 = vpop.f32.mrb[0].mxu0
      %v3994 = vadd.f32 0.0, %v3993
      %v3995 = vpop.f32.mrb[0].mxu0
      %3996 = vmatprep.mubr.bf16.mxu0 %v1873
      %3997 = vmatmul.mubr.bf16.gmra.mrb[0].mxu0 %v1765
      %v3998 = vpop.f32.mrb[0].mxu0
      %v3999 = vadd.f32 0.0, %v3998
      %v4000 = vpop.f32.mrb[0].mxu0
      %v4001 = vpop.f32.mrb[0].mxu0
      %v4002 = vadd.f32 0.0, %v4001
      %v4003 = vpop.f32.mrb[0].mxu0
      %4004 = vdwg.mxu0
      %4005 = vmatprep.subr.bf16.mxu0 0
      %4006 = vmatpush1.bf16.msra.mxu0 %v3684
      %4007 = vmatprep.subr.bf16.mxu0 0
      %4008 = vmatpush1.bf16.msra.mxu0 %v3685
      %4009 = vmatprep.subr.bf16.mxu0 0
      %4010 = vmatpush1.bf16.msra.mxu0 %v3686
      %4011 = vmatprep.subr.bf16.mxu0 0
      %4012 = vmatpush1.bf16.msra.mxu0 %v3687
      %4013 = vmatprep.subr.bf16.mxu0 0
      %4014 = vmatpush1.bf16.msra.mxu0 %v3688
      %4015 = vmatprep.subr.bf16.mxu0 0
      %4016 = vmatpush1.bf16.msra.mxu0 %v3689
      %4017 = vmatprep.subr.bf16.mxu0 0
      %4018 = vmatpush1.bf16.msra.mxu0 %v3690
      %4019 = vmatprep.subr.bf16.mxu0 0
      %4020 = vmatpush1.bf16.msra.mxu0 %v3691
      %4021 = vmatprep.subr.bf16.mxu0 0
      %4022 = vmatpush1.bf16.msra.mxu0 0
      %4023 = vmatprep.subr.bf16.mxu0 0
      %4024 = vmatpush1.bf16.msra.mxu0 0
      %4025 = vmatprep.subr.bf16.mxu0 0
      %4026 = vmatpush1.bf16.msra.mxu0 0
      %4027 = vmatprep.subr.bf16.mxu0 0
      %4028 = vmatpush1.bf16.msra.mxu0 0
      %4029 = vmatprep.subr.bf16.mxu0 0
      %4030 = vmatpush1.bf16.msra.mxu0 0
      %4031 = vmatprep.subr.bf16.mxu0 0
      %4032 = vmatpush1.bf16.msra.mxu0 0
      %4033 = vmatprep.subr.bf16.mxu0 0
      %4034 = vmatpush1.bf16.msra.mxu0 0
      %4035 = vmatprep.subr.bf16.mxu0 0
      %4036 = vmatpush1.bf16.msra.mxu0 0
      %4037 = vmatprep.mubr.bf16.mxu0 0
      %4038 = vmatmul.mubr.bf16.gmra.mrb[0].mxu0 %v1948
      %v4039 = vpop.f32.mrb[0].mxu0
      %v4040 = vadd.f32 %v3751, %v4039
      %v4041 = vpop.f32.mrb[0].mxu0
      %v4042 = vpop.f32.mrb[0].mxu0
      %v4043 = vadd.f32 %v3754, %v4042
      %v4044 = vpop.f32.mrb[0].mxu0
      %4045 = vmatprep.mubr.bf16.mxu0 0
      %4046 = vmatmul.mubr.bf16.gmra.mrb[0].mxu0 %v1949
      %v4047 = vpop.f32.mrb[0].mxu0
      %v4048 = vadd.f32 %v3759, %v4047
      %v4049 = vpop.f32.mrb[0].mxu0
      %v4050 = vpop.f32.mrb[0].mxu0
      %v4051 = vadd.f32 %v3762, %v4050
      %v4052 = vpop.f32.mrb[0].mxu0
      %4053 = vmatprep.mubr.bf16.mxu0 0
      %4054 = vmatmul.mubr.bf16.gmra.mrb[0].mxu0 %v1950
      %v4055 = vpop.f32.mrb[0].mxu0
      %v4056 = vadd.f32 %v3767, %v4055
      %v4057 = vpop.f32.mrb[0].mxu0
      %v4058 = vpop.f32.mrb[0].mxu0
      %v4059 = vadd.f32 %v3770, %v4058
      %v4060 = vpop.f32.mrb[0].mxu0
      %4061 = vmatprep.mubr.bf16.mxu0 0
      %4062 = vmatmul.mubr.bf16.gmra.mrb[0].mxu0 %v1951
      %v4063 = vpop.f32.mrb[0].mxu0
      %v4064 = vadd.f32 %v3775, %v4063
      %v4065 = vpop.f32.mrb[0].mxu0
      %v4066 = vpop.f32.mrb[0].mxu0
      %v4067 = vadd.f32 %v3778, %v4066
      %v4068 = vpop.f32.mrb[0].mxu0
      %4069 = vmatprep.mubr.bf16.mxu0 0
      %4070 = vmatmul.mubr.bf16.gmra.mrb[0].mxu0 %v1952
      %v4071 = vpop.f32.mrb[0].mxu0
      %v4072 = vadd.f32 %v3783, %v4071
      %v4073 = vpop.f32.mrb[0].mxu0
      %v4074 = vpop.f32.mrb[0].mxu0
      %v4075 = vadd.f32 %v3786, %v4074
      %v4076 = vpop.f32.mrb[0].mxu0
      %4077 = vmatprep.mubr.bf16.mxu0 0
      %4078 = vmatmul.mubr.bf16.gmra.mrb[0].mxu0 %v1953
      %v4079 = vpop.f32.mrb[0].mxu0
      %v4080 = vadd.f32 %v3791, %v4079
      %v4081 = vpop.f32.mrb[0].mxu0
      %v4082 = vpop.f32.mrb[0].mxu0
      %v4083 = vadd.f32 %v3794, %v4082
      %v4084 = vpop.f32.mrb[0].mxu0
      %4085 = vmatprep.mubr.bf16.mxu0 0
      %4086 = vmatmul.mubr.bf16.gmra.mrb[0].mxu0 %v1954
      %v4087 = vpop.f32.mrb[0].mxu0
      %v4088 = vadd.f32 %v3799, %v4087
      %v4089 = vpop.f32.mrb[0].mxu0
      %v4090 = vpop.f32.mrb[0].mxu0
      %v4091 = vadd.f32 %v3802, %v4090
      %v4092 = vpop.f32.mrb[0].mxu0
      %4093 = vmatprep.mubr.bf16.mxu0 0
      %4094 = vmatmul.mubr.bf16.gmra.mrb[0].mxu0 %v1955
      %v4095 = vpop.f32.mrb[0].mxu0
      %v4096 = vadd.f32 %v3807, %v4095
      %v4097 = vpop.f32.mrb[0].mxu0
      %v4098 = vpop.f32.mrb[0].mxu0
      %v4099 = vadd.f32 %v3810, %v4098
      %v4100 = vpop.f32.mrb[0].mxu0
      %4101 = vmatprep.mubr.bf16.mxu0 0
      %4102 = vmatmul.mubr.bf16.gmra.mrb[0].mxu0 %v1956
      %v4103 = vpop.f32.mrb[0].mxu0
      %v4104 = vadd.f32 %v3815, %v4103
      %v4105 = vpop.f32.mrb[0].mxu0
      %v4106 = vpop.f32.mrb[0].mxu0
      %v4107 = vadd.f32 %v3818, %v4106
      %v4108 = vpop.f32.mrb[0].mxu0
      %4109 = vmatprep.mubr.bf16.mxu0 0
      %4110 = vmatmul.mubr.bf16.gmra.mrb[0].mxu0 %v1957
      %v4111 = vpop.f32.mrb[0].mxu0
      %v4112 = vadd.f32 %v3823, %v4111
      %v4113 = vpop.f32.mrb[0].mxu0
      %v4114 = vpop.f32.mrb[0].mxu0
      %v4115 = vadd.f32 %v3826, %v4114
      %v4116 = vpop.f32.mrb[0].mxu0
      %4117 = vmatprep.mubr.bf16.mxu0 0
      %4118 = vmatmul.mubr.bf16.gmra.mrb[0].mxu0 %v1958
      %v4119 = vpop.f32.mrb[0].mxu0
      %v4120 = vadd.f32 %v3831, %v4119
      %v4121 = vpop.f32.mrb[0].mxu0
      %v4122 = vpop.f32.mrb[0].mxu0
      %v4123 = vadd.f32 %v3834, %v4122
      %v4124 = vpop.f32.mrb[0].mxu0
      %4125 = vmatprep.mubr.bf16.mxu0 0
      %4126 = vmatmul.mubr.bf16.gmra.mrb[0].mxu0 %v1959
      %v4127 = vpop.f32.mrb[0].mxu0
      %v4128 = vadd.f32 %v3839, %v4127
      %v4129 = vpop.f32.mrb[0].mxu0
      %v4130 = vpop.f32.mrb[0].mxu0
      %v4131 = vadd.f32 %v3842, %v4130
      %v4132 = vpop.f32.mrb[0].mxu0
      %4133 = vmatprep.mubr.bf16.mxu0 0
      %4134 = vmatmul.mubr.bf16.gmra.mrb[0].mxu0 %v1960
      %v4135 = vpop.f32.mrb[0].mxu0
      %v4136 = vadd.f32 %v3847, %v4135
      %v4137 = vpop.f32.mrb[0].mxu0
      %v4138 = vpop.f32.mrb[0].mxu0
      %v4139 = vadd.f32 %v3850, %v4138
      %v4140 = vpop.f32.mrb[0].mxu0
      %4141 = vmatprep.mubr.bf16.mxu0 0
      %4142 = vmatmul.mubr.bf16.gmra.mrb[0].mxu0 %v1961
      %v4143 = vpop.f32.mrb[0].mxu0
      %v4144 = vadd.f32 %v3855, %v4143
      %v4145 = vpop.f32.mrb[0].mxu0
      %v4146 = vpop.f32.mrb[0].mxu0
      %v4147 = vadd.f32 %v3858, %v4146
      %v4148 = vpop.f32.mrb[0].mxu0
      %4149 = vmatprep.mubr.bf16.mxu0 0
      %4150 = vmatmul.mubr.bf16.gmra.mrb[0].mxu0 %v1962
      %v4151 = vpop.f32.mrb[0].mxu0
      %v4152 = vadd.f32 %v3863, %v4151
      %v4153 = vpop.f32.mrb[0].mxu0
      %v4154 = vpop.f32.mrb[0].mxu0
      %v4155 = vadd.f32 %v3866, %v4154
      %v4156 = vpop.f32.mrb[0].mxu0
      %4157 = vmatprep.mubr.bf16.mxu0 0
      %4158 = vmatmul.mubr.bf16.gmra.mrb[0].mxu0 %v1963
      %v4159 = vpop.f32.mrb[0].mxu0
      %v4160 = vadd.f32 %v3871, %v4159
      %v4161 = vpop.f32.mrb[0].mxu0
      %v4162 = vpop.f32.mrb[0].mxu0
      %v4163 = vadd.f32 %v3874, %v4162
      %v4164 = vpop.f32.mrb[0].mxu0
      %4165 = vmatprep.mubr.bf16.mxu0 0
      %4166 = vmatmul.mubr.bf16.gmra.mrb[0].mxu0 %v1966
      %v4167 = vpop.f32.mrb[0].mxu0
      %v4168 = vadd.f32 %v3879, %v4167
      %v4169 = vpop.f32.mrb[0].mxu0
      %v4170 = vpop.f32.mrb[0].mxu0
      %v4171 = vadd.f32 %v3882, %v4170
      %v4172 = vpop.f32.mrb[0].mxu0
      %4173 = vmatprep.mubr.bf16.mxu0 0
      %4174 = vmatmul.mubr.bf16.gmra.mrb[0].mxu0 %v1967
      %v4175 = vpop.f32.mrb[0].mxu0
      %v4176 = vadd.f32 %v3887, %v4175
      %v4177 = vpop.f32.mrb[0].mxu0
      %v4178 = vpop.f32.mrb[0].mxu0
      %v4179 = vadd.f32 %v3890, %v4178
      %v4180 = vpop.f32.mrb[0].mxu0
      %4181 = vmatprep.mubr.bf16.mxu0 0
      %4182 = vmatmul.mubr.bf16.gmra.mrb[0].mxu0 %v1968
      %v4183 = vpop.f32.mrb[0].mxu0
      %v4184 = vadd.f32 %v3895, %v4183
      %v4185 = vpop.f32.mrb[0].mxu0
      %v4186 = vpop.f32.mrb[0].mxu0
      %v4187 = vadd.f32 %v3898, %v4186
      %v4188 = vpop.f32.mrb[0].mxu0
      %4189 = vmatprep.mubr.bf16.mxu0 0
      %4190 = vmatmul.mubr.bf16.gmra.mrb[0].mxu0 %v1969
      %v4191 = vpop.f32.mrb[0].mxu0
      %v4192 = vadd.f32 %v3903, %v4191
      %v4193 = vpop.f32.mrb[0].mxu0
      %v4194 = vpop.f32.mrb[0].mxu0
      %v4195 = vadd.f32 %v3906, %v4194
      %v4196 = vpop.f32.mrb[0].mxu0
      %4197 = vmatprep.mubr.bf16.mxu0 0
      %4198 = vmatmul.mubr.bf16.gmra.mrb[0].mxu0 %v1970
      %v4199 = vpop.f32.mrb[0].mxu0
      %v4200 = vadd.f32 %v3911, %v4199
      %v4201 = vpop.f32.mrb[0].mxu0
      %v4202 = vpop.f32.mrb[0].mxu0
      %v4203 = vadd.f32 %v3914, %v4202
      %v4204 = vpop.f32.mrb[0].mxu0
      %4205 = vmatprep.mubr.bf16.mxu0 0
      %4206 = vmatmul.mubr.bf16.gmra.mrb[0].mxu0 %v1971
      %v4207 = vpop.f32.mrb[0].mxu0
      %v4208 = vadd.f32 %v3919, %v4207
      %v4209 = vpop.f32.mrb[0].mxu0
      %v4210 = vpop.f32.mrb[0].mxu0
      %v4211 = vadd.f32 %v3922, %v4210
      %v4212 = vpop.f32.mrb[0].mxu0
      %4213 = vmatprep.mubr.bf16.mxu0 0
      %4214 = vmatmul.mubr.bf16.gmra.mrb[0].mxu0 %v1972
      %v4215 = vpop.f32.mrb[0].mxu0
      %v4216 = vadd.f32 %v3927, %v4215
      %v4217 = vpop.f32.mrb[0].mxu0
      %v4218 = vpop.f32.mrb[0].mxu0
      %v4219 = vadd.f32 %v3930, %v4218
      %v4220 = vpop.f32.mrb[0].mxu0
      %4221 = vmatprep.mubr.bf16.mxu0 0
      %4222 = vmatmul.mubr.bf16.gmra.mrb[0].mxu0 %v1973
      %v4223 = vpop.f32.mrb[0].mxu0
      %v4224 = vadd.f32 %v3935, %v4223
      %v4225 = vpop.f32.mrb[0].mxu0
      %v4226 = vpop.f32.mrb[0].mxu0
      %v4227 = vadd.f32 %v3938, %v4226
      %v4228 = vpop.f32.mrb[0].mxu0
      %4229 = vmatprep.mubr.bf16.mxu0 0
      %4230 = vmatmul.mubr.bf16.gmra.mrb[0].mxu0 %v1974
      %v4231 = vpop.f32.mrb[0].mxu0
      %v4232 = vadd.f32 %v3943, %v4231
      %v4233 = vpop.f32.mrb[0].mxu0
      %v4234 = vpop.f32.mrb[0].mxu0
      %v4235 = vadd.f32 %v3946, %v4234
      %v4236 = vpop.f32.mrb[0].mxu0
      %4237 = vmatprep.mubr.bf16.mxu0 0
      %4238 = vmatmul.mubr.bf16.gmra.mrb[0].mxu0 %v1975
      %v4239 = vpop.f32.mrb[0].mxu0
      %v4240 = vadd.f32 %v3951, %v4239
      %v4241 = vpop.f32.mrb[0].mxu0
      %v4242 = vpop.f32.mrb[0].mxu0
      %v4243 = vadd.f32 %v3954, %v4242
      %v4244 = vpop.f32.mrb[0].mxu0
      %4245 = vmatprep.mubr.bf16.mxu0 0
      %4246 = vmatmul.mubr.bf16.gmra.mrb[0].mxu0 %v1976
      %v4247 = vpop.f32.mrb[0].mxu0
      %v4248 = vadd.f32 %v3959, %v4247
      %v4249 = vpop.f32.mrb[0].mxu0
      %v4250 = vpop.f32.mrb[0].mxu0
      %v4251 = vadd.f32 %v3962, %v4250
      %v4252 = vpop.f32.mrb[0].mxu0
      %4253 = vmatprep.mubr.bf16.mxu0 0
      %4254 = vmatmul.mubr.bf16.gmra.mrb[0].mxu0 %v1977
      %v4255 = vpop.f32.mrb[0].mxu0
      %v4256 = vadd.f32 %v3967, %v4255
      %v4257 = vpop.f32.mrb[0].mxu0
      %v4258 = vpop.f32.mrb[0].mxu0
      %v4259 = vadd.f32 %v3970, %v4258
      %v4260 = vpop.f32.mrb[0].mxu0
      %4261 = vmatprep.mubr.bf16.mxu0 0
      %4262 = vmatmul.mubr.bf16.gmra.mrb[0].mxu0 %v1978
      %v4263 = vpop.f32.mrb[0].mxu0
      %v4264 = vadd.f32 %v3975, %v4263
      %v4265 = vpop.f32.mrb[0].mxu0
      %v4266 = vpop.f32.mrb[0].mxu0
      %v4267 = vadd.f32 %v3978, %v4266
      %v4268 = vpop.f32.mrb[0].mxu0
      %4269 = vmatprep.mubr.bf16.mxu0 0
      %4270 = vmatmul.mubr.bf16.gmra.mrb[0].mxu0 %v1979
      %v4271 = vpop.f32.mrb[0].mxu0
      %v4272 = vadd.f32 %v3983, %v4271
      %v4273 = vpop.f32.mrb[0].mxu0
      %v4274 = vpop.f32.mrb[0].mxu0
      %v4275 = vadd.f32 %v3986, %v4274
      %v4276 = vpop.f32.mrb[0].mxu0
      %4277 = vmatprep.mubr.bf16.mxu0 0
      %4278 = vmatmul.mubr.bf16.gmra.mrb[0].mxu0 %v1980
      %v4279 = vpop.f32.mrb[0].mxu0
      %v4280 = vadd.f32 %v3991, %v4279
      %v4281 = vpop.f32.mrb[0].mxu0
      %v4282 = vpop.f32.mrb[0].mxu0
      %v4283 = vadd.f32 %v3994, %v4282
      %v4284 = vpop.f32.mrb[0].mxu0
      %4285 = vmatprep.mubr.bf16.mxu0 0
      %4286 = vmatmul.mubr.bf16.gmra.mrb[0].mxu0 %v1981
      %v4287 = vpop.f32.mrb[0].mxu0
      %v4288 = vadd.f32 %v3999, %v4287
      %v4289 = vpop.f32.mrb[0].mxu0
      %v4290 = vpop.f32.mrb[0].mxu0
      %v4291 = vadd.f32 %v4002, %v4290
      %v4292 = vpop.f32.mrb[0].mxu0
      %4293 = vdwg.mxu0
      %v4294 = vadd.f32 %v3269, %v4040
      %v4295 = vadd.f32 %v3272, %v4043
      %v4296 = vadd.f32 %v3277, %v4048
      %v4297 = vadd.f32 %v3280, %v4051
      %v4298 = vadd.f32 %v3285, %v4056
      %v4299 = vadd.f32 %v3288, %v4059
      %v4300 = vadd.f32 %v3293, %v4064
      %v4301 = vadd.f32 %v3296, %v4067
      %v4302 = vadd.f32 %v3301, %v4072
      %v4303 = vadd.f32 %v3304, %v4075
      %v4304 = vadd.f32 %v3309, %v4080
      %v4305 = vadd.f32 %v3312, %v4083
      %v4306 = vadd.f32 %v3317, %v4088
      %v4307 = vadd.f32 %v3320, %v4091
      %v4308 = vadd.f32 %v3325, %v4096
      %v4309 = vadd.f32 %v3328, %v4099
      %v4310 = vadd.f32 %v3333, %v4104
      %v4311 = vadd.f32 %v3336, %v4107
      %v4312 = vadd.f32 %v3341, %v4112
      %v4313 = vadd.f32 %v3344, %v4115
      %v4314 = vadd.f32 %v3349, %v4120
      %v4315 = vadd.f32 %v3352, %v4123
      %v4316 = vadd.f32 %v3357, %v4128
      %v4317 = vadd.f32 %v3360, %v4131
      %v4318 = vadd.f32 %v3365, %v4136
      %v4319 = vadd.f32 %v3368, %v4139
      %v4320 = vadd.f32 %v3373, %v4144
      %v4321 = vadd.f32 %v3376, %v4147
      %v4322 = vadd.f32 %v3381, %v4152
      %v4323 = vadd.f32 %v3384, %v4155
      %v4324 = vadd.f32 %v3389, %v4160
      %v4325 = vadd.f32 %v3392, %v4163
      %v4326 = vadd.f32 %v3397, %v4168
      %v4327 = vadd.f32 %v3400, %v4171
      %v4328 = vadd.f32 %v3405, %v4176
      %v4329 = vadd.f32 %v3408, %v4179
      %v4330 = vadd.f32 %v3413, %v4184
      %v4331 = vadd.f32 %v3416, %v4187
      %v4332 = vadd.f32 %v3421, %v4192
      %v4333 = vadd.f32 %v3424, %v4195
      %v4334 = vadd.f32 %v3429, %v4200
      %v4335 = vadd.f32 %v3432, %v4203
      %v4336 = vadd.f32 %v3437, %v4208
      %v4337 = vadd.f32 %v3440, %v4211
      %v4338 = vadd.f32 %v3445, %v4216
      %v4339 = vadd.f32 %v3448, %v4219
      %v4340 = vadd.f32 %v3453, %v4224
      %v4341 = vadd.f32 %v3456, %v4227
      %v4342 = vadd.f32 %v3461, %v4232
      %v4343 = vadd.f32 %v3464, %v4235
      %v4344 = vadd.f32 %v3469, %v4240
      %v4345 = vadd.f32 %v3472, %v4243
      %v4346 = vadd.f32 %v3477, %v4248
      %v4347 = vadd.f32 %v3480, %v4251
      %v4348 = vadd.f32 %v3485, %v4256
      %v4349 = vadd.f32 %v3488, %v4259
      %v4350 = vadd.f32 %v3493, %v4264
      %v4351 = vadd.f32 %v3496, %v4267
      %v4352 = vadd.f32 %v3501, %v4272
      %v4353 = vadd.f32 %v3504, %v4275
      %v4354 = vadd.f32 %v3509, %v4280
      %v4355 = vadd.f32 %v3512, %v4283
      %v4356 = vadd.f32 %v3517, %v4288
      %v4357 = vadd.f32 %v3520, %v4291
      %v4358 = vld [vmem:[%s310] sm:$0x1]
      %v4359 = vld [vmem:[%s313] sm:$0x1]
      %v4360 = vadd.f32 %v4294, %v4295
      %v4361 = vadd.f32 %v4360, %v4296
      %v4362 = vadd.f32 %v4361, %v4297
      %v4363 = vadd.f32 %v4362, %v4298
      %v4364 = vadd.f32 %v4363, %v4299
      %v4365 = vadd.f32 %v4364, %v4300
      %v4366 = vadd.f32 %v4365, %v4301
      %v4367 = vadd.f32 %v4366, %v4302
      %v4368 = vadd.f32 %v4367, %v4303
      %v4369 = vadd.f32 %v4368, %v4304
      %v4370 = vadd.f32 %v4369, %v4305
      %v4371 = vadd.f32 %v4370, %v4306
      %v4372 = vadd.f32 %v4371, %v4307
      %v4373 = vadd.f32 %v4372, %v4308
      %v4374 = vadd.f32 %v4373, %v4309
      %v4375 = vadd.f32 %v4374, %v4310
      %v4376 = vadd.f32 %v4375, %v4311
      %v4377 = vadd.f32 %v4376, %v4312
      %v4378 = vadd.f32 %v4377, %v4313
      %v4379 = vadd.f32 %v4378, %v4314
      %v4380 = vadd.f32 %v4379, %v4315
      %v4381 = vadd.f32 %v4380, %v4316
      %v4382 = vadd.f32 %v4381, %v4317
      %v4383 = vadd.f32 %v4382, %v4318
      %v4384 = vadd.f32 %v4383, %v4319
      %v4385 = vadd.f32 %v4384, %v4320
      %v4386 = vadd.f32 %v4385, %v4321
      %v4387 = vadd.f32 %v4386, %v4322
      %v4388 = vadd.f32 %v4387, %v4323
      %v4389 = vadd.f32 %v4388, %v4324
      %v4390 = vadd.f32 %v4389, %v4325
      %v4391 = vadd.f32 %v4390, %v4326
      %v4392 = vadd.f32 %v4391, %v4327
      %v4393 = vadd.f32 %v4392, %v4328
      %v4394 = vadd.f32 %v4393, %v4329
      %v4395 = vadd.f32 %v4394, %v4330
      %v4396 = vadd.f32 %v4395, %v4331
      %v4397 = vadd.f32 %v4396, %v4332
      %v4398 = vadd.f32 %v4397, %v4333
      %v4399 = vadd.f32 %v4398, %v4334
      %v4400 = vadd.f32 %v4399, %v4335
      %v4401 = vadd.f32 %v4400, %v4336
      %v4402 = vadd.f32 %v4401, %v4337
      %v4403 = vadd.f32 %v4402, %v4338
      %v4404 = vadd.f32 %v4403, %v4339
      %v4405 = vadd.f32 %v4404, %v4340
      %v4406 = vadd.f32 %v4405, %v4341
      %v4407 = vadd.f32 %v4406, %v4342
      %v4408 = vadd.f32 %v4407, %v4343
      %v4409 = vadd.f32 %v4408, %v4344
      %v4410 = vadd.f32 %v4409, %v4345
      %v4411 = vadd.f32 %v4410, %v4346
      %v4412 = vadd.f32 %v4411, %v4347
      %v4413 = vadd.f32 %v4412, %v4348
      %v4414 = vadd.f32 %v4413, %v4349
      %v4415 = vadd.f32 %v4414, %v4350
      %v4416 = vadd.f32 %v4415, %v4351
      %v4417 = vadd.f32 %v4416, %v4352
      %v4418 = vadd.f32 %v4417, %v4353
      %v4419 = vadd.f32 %v4418, %v4354
      %v4420 = vadd.f32 %v4419, %v4355
      %v4421 = vadd.f32 %v4420, %v4356
      %v4422 = vadd.f32 %v4421, %v4357
      %v4423 = vrot.slane %v4422, 4
      %v4424 = vadd.f32 %v4422, %v4423
      %v4425 = vrot.slane %v4424, 2
      %v4426 = vadd.f32 %v4424, %v4425
      %v4427 = vrot.slane %v4426, 1
      %v4428 = vadd.f32 %v4426, %v4427
      %v4429 = vmul.f32 %v4428, 0.001953125
      %v4430 = vmul.f32 %v4294, %v4294
      %v4431 = vmul.f32 %v4295, %v4295
      %v4432 = vmul.f32 %v4296, %v4296
      %v4433 = vmul.f32 %v4297, %v4297
      %v4434 = vmul.f32 %v4298, %v4298
      %v4435 = vmul.f32 %v4299, %v4299
      %v4436 = vmul.f32 %v4300, %v4300
      %v4437 = vmul.f32 %v4301, %v4301
      %v4438 = vmul.f32 %v4302, %v4302
      %v4439 = vmul.f32 %v4303, %v4303
      %v4440 = vmul.f32 %v4304, %v4304
      %v4441 = vmul.f32 %v4305, %v4305
      %v4442 = vmul.f32 %v4306, %v4306
      %v4443 = vmul.f32 %v4307, %v4307
      %v4444 = vmul.f32 %v4308, %v4308
      %v4445 = vmul.f32 %v4309, %v4309
      %v4446 = vmul.f32 %v4310, %v4310
      %v4447 = vmul.f32 %v4311, %v4311
      %v4448 = vmul.f32 %v4312, %v4312
      %v4449 = vmul.f32 %v4313, %v4313
      %v4450 = vmul.f32 %v4314, %v4314
      %v4451 = vmul.f32 %v4315, %v4315
      %v4452 = vmul.f32 %v4316, %v4316
      %v4453 = vmul.f32 %v4317, %v4317
      %v4454 = vmul.f32 %v4318, %v4318
      %v4455 = vmul.f32 %v4319, %v4319
      %v4456 = vmul.f32 %v4320, %v4320
      %v4457 = vmul.f32 %v4321, %v4321
      %v4458 = vmul.f32 %v4322, %v4322
      %v4459 = vmul.f32 %v4323, %v4323
      %v4460 = vmul.f32 %v4324, %v4324
      %v4461 = vmul.f32 %v4325, %v4325
      %v4462 = vmul.f32 %v4326, %v4326
      %v4463 = vmul.f32 %v4327, %v4327
      %v4464 = vmul.f32 %v4328, %v4328
      %v4465 = vmul.f32 %v4329, %v4329
      %v4466 = vmul.f32 %v4330, %v4330
      %v4467 = vmul.f32 %v4331, %v4331
      %v4468 = vmul.f32 %v4332, %v4332
      %v4469 = vmul.f32 %v4333, %v4333
      %v4470 = vmul.f32 %v4334, %v4334
      %v4471 = vmul.f32 %v4335, %v4335
      %v4472 = vmul.f32 %v4336, %v4336
      %v4473 = vmul.f32 %v4337, %v4337
      %v4474 = vmul.f32 %v4338, %v4338
      %v4475 = vmul.f32 %v4339, %v4339
      %v4476 = vmul.f32 %v4340, %v4340
      %v4477 = vmul.f32 %v4341, %v4341
      %v4478 = vmul.f32 %v4342, %v4342
      %v4479 = vmul.f32 %v4343, %v4343
      %v4480 = vmul.f32 %v4344, %v4344
      %v4481 = vmul.f32 %v4345, %v4345
      %v4482 = vmul.f32 %v4346, %v4346
      %v4483 = vmul.f32 %v4347, %v4347
      %v4484 = vmul.f32 %v4348, %v4348
      %v4485 = vmul.f32 %v4349, %v4349
      %v4486 = vmul.f32 %v4350, %v4350
      %v4487 = vmul.f32 %v4351, %v4351
      %v4488 = vmul.f32 %v4352, %v4352
      %v4489 = vmul.f32 %v4353, %v4353
      %v4490 = vmul.f32 %v4354, %v4354
      %v4491 = vmul.f32 %v4355, %v4355
      %v4492 = vmul.f32 %v4356, %v4356
      %v4493 = vmul.f32 %v4357, %v4357
      %v4494 = vadd.f32 %v4430, %v4431
      %v4495 = vadd.f32 %v4494, %v4432
      %v4496 = vadd.f32 %v4495, %v4433
      %v4497 = vadd.f32 %v4496, %v4434
      %v4498 = vadd.f32 %v4497, %v4435
      %v4499 = vadd.f32 %v4498, %v4436
      %v4500 = vadd.f32 %v4499, %v4437
      %v4501 = vadd.f32 %v4500, %v4438
      %v4502 = vadd.f32 %v4501, %v4439
      %v4503 = vadd.f32 %v4502, %v4440
      %v4504 = vadd.f32 %v4503, %v4441
      %v4505 = vadd.f32 %v4504, %v4442
      %v4506 = vadd.f32 %v4505, %v4443
      %v4507 = vadd.f32 %v4506, %v4444
      %v4508 = vadd.f32 %v4507, %v4445
      %v4509 = vadd.f32 %v4508, %v4446
      %v4510 = vadd.f32 %v4509, %v4447
      %v4511 = vadd.f32 %v4510, %v4448
      %v4512 = vadd.f32 %v4511, %v4449
      %v4513 = vadd.f32 %v4512, %v4450
      %v4514 = vadd.f32 %v4513, %v4451
      %v4515 = vadd.f32 %v4514, %v4452
      %v4516 = vadd.f32 %v4515, %v4453
      %v4517 = vadd.f32 %v4516, %v4454
      %v4518 = vadd.f32 %v4517, %v4455
      %v4519 = vadd.f32 %v4518, %v4456
      %v4520 = vadd.f32 %v4519, %v4457
      %v4521 = vadd.f32 %v4520, %v4458
      %v4522 = vadd.f32 %v4521, %v4459
      %v4523 = vadd.f32 %v4522, %v4460
      %v4524 = vadd.f32 %v4523, %v4461
      %v4525 = vadd.f32 %v4524, %v4462
      %v4526 = vadd.f32 %v4525, %v4463
      %v4527 = vadd.f32 %v4526, %v4464
      %v4528 = vadd.f32 %v4527, %v4465
      %v4529 = vadd.f32 %v4528, %v4466
      %v4530 = vadd.f32 %v4529, %v4467
      %v4531 = vadd.f32 %v4530, %v4468
      %v4532 = vadd.f32 %v4531, %v4469
      %v4533 = vadd.f32 %v4532, %v4470
      %v4534 = vadd.f32 %v4533, %v4471
      %v4535 = vadd.f32 %v4534, %v4472
      %v4536 = vadd.f32 %v4535, %v4473
      %v4537 = vadd.f32 %v4536, %v4474
      %v4538 = vadd.f32 %v4537, %v4475
      %v4539 = vadd.f32 %v4538, %v4476
      %v4540 = vadd.f32 %v4539, %v4477
      %v4541 = vadd.f32 %v4540, %v4478
      %v4542 = vadd.f32 %v4541, %v4479
      %v4543 = vadd.f32 %v4542, %v4480
      %v4544 = vadd.f32 %v4543, %v4481
      %v4545 = vadd.f32 %v4544, %v4482
      %v4546 = vadd.f32 %v4545, %v4483
      %v4547 = vadd.f32 %v4546, %v4484
      %v4548 = vadd.f32 %v4547, %v4485
      %v4549 = vadd.f32 %v4548, %v4486
      %v4550 = vadd.f32 %v4549, %v4487
      %v4551 = vadd.f32 %v4550, %v4488
      %v4552 = vadd.f32 %v4551, %v4489
      %v4553 = vadd.f32 %v4552, %v4490
      %v4554 = vadd.f32 %v4553, %v4491
      %v4555 = vadd.f32 %v4554, %v4492
      %v4556 = vadd.f32 %v4555, %v4493
      %v4557 = vrot.slane %v4556, 4
      %v4558 = vadd.f32 %v4556, %v4557
      %v4559 = vrot.slane %v4558, 2
      %v4560 = vadd.f32 %v4558, %v4559
      %v4561 = vrot.slane %v4560, 1
      %v4562 = vadd.f32 %v4560, %v4561
      %v4563 = vmul.f32 %v4562, 0.001953125
      %v4564 = vmul.f32 %v4429, %v4429
      %v4565 = vsub.f32 %v4563, %v4564
      %v4566 = vmax.f32 %v4565, 0.0
      %v4567 = vadd.f32 %v4566, 1e-05
      %v4568 = vrsqrt.pop %v4567
      %v4569 = vmul.f32 %v4568, %v4358
      %v4570 = vlaneseq
      %v4571 = vshrl.u32 %v4570, 7
      %v4572 = vsub.s32 0, %v4571
      %v4573 = vrot.slane %v4569, %v4572
      %v4574 = vmul.f32 %v4294, %v4573
      %v4575 = vmul.f32 %v4295, %v4573
      %v4576 = vmul.f32 %v4296, %v4573
      %v4577 = vmul.f32 %v4297, %v4573
      %v4578 = vmul.f32 %v4298, %v4573
      %v4579 = vmul.f32 %v4299, %v4573
      %v4580 = vmul.f32 %v4300, %v4573
      %v4581 = vmul.f32 %v4301, %v4573
      %v4582 = vmul.f32 %v4302, %v4573
      %v4583 = vmul.f32 %v4303, %v4573
      %v4584 = vmul.f32 %v4304, %v4573
      %v4585 = vmul.f32 %v4305, %v4573
      %v4586 = vmul.f32 %v4306, %v4573
      %v4587 = vmul.f32 %v4307, %v4573
      %v4588 = vmul.f32 %v4308, %v4573
      %v4589 = vmul.f32 %v4309, %v4573
      %v4590 = vmul.f32 %v4310, %v4573
      %v4591 = vmul.f32 %v4311, %v4573
      %v4592 = vmul.f32 %v4312, %v4573
      %v4593 = vmul.f32 %v4313, %v4573
      %v4594 = vmul.f32 %v4314, %v4573
      %v4595 = vmul.f32 %v4315, %v4573
      %v4596 = vmul.f32 %v4316, %v4573
      %v4597 = vmul.f32 %v4317, %v4573
      %v4598 = vmul.f32 %v4318, %v4573
      %v4599 = vmul.f32 %v4319, %v4573
      %v4600 = vmul.f32 %v4320, %v4573
      %v4601 = vmul.f32 %v4321, %v4573
      %v4602 = vmul.f32 %v4322, %v4573
      %v4603 = vmul.f32 %v4323, %v4573
      %v4604 = vmul.f32 %v4324, %v4573
      %v4605 = vmul.f32 %v4325, %v4573
      %v4606 = vmul.f32 %v4326, %v4573
      %v4607 = vmul.f32 %v4327, %v4573
      %v4608 = vmul.f32 %v4328, %v4573
      %v4609 = vmul.f32 %v4329, %v4573
      %v4610 = vmul.f32 %v4330, %v4573
      %v4611 = vmul.f32 %v4331, %v4573
      %v4612 = vmul.f32 %v4332, %v4573
      %v4613 = vmul.f32 %v4333, %v4573
      %v4614 = vmul.f32 %v4334, %v4573
      %v4615 = vmul.f32 %v4335, %v4573
      %v4616 = vmul.f32 %v4336, %v4573
      %v4617 = vmul.f32 %v4337, %v4573
      %v4618 = vmul.f32 %v4338, %v4573
      %v4619 = vmul.f32 %v4339, %v4573
      %v4620 = vmul.f32 %v4340, %v4573
      %v4621 = vmul.f32 %v4341, %v4573
      %v4622 = vmul.f32 %v4342, %v4573
      %v4623 = vmul.f32 %v4343, %v4573
      %v4624 = vmul.f32 %v4344, %v4573
      %v4625 = vmul.f32 %v4345, %v4573
      %v4626 = vmul.f32 %v4346, %v4573
      %v4627 = vmul.f32 %v4347, %v4573
      %v4628 = vmul.f32 %v4348, %v4573
      %v4629 = vmul.f32 %v4349, %v4573
      %v4630 = vmul.f32 %v4350, %v4573
      %v4631 = vmul.f32 %v4351, %v4573
      %v4632 = vmul.f32 %v4352, %v4573
      %v4633 = vmul.f32 %v4353, %v4573
      %v4634 = vmul.f32 %v4354, %v4573
      %v4635 = vmul.f32 %v4355, %v4573
      %v4636 = vmul.f32 %v4356, %v4573
      %v4637 = vmul.f32 %v4357, %v4573
      %v4638 = vmul.f32 %v4429, %v4569
      %v4639 = vsub.f32 %v4359, %v4638
      %v4641 = vlaneseq
      %v4642 = vshrl.u32 %v4641, 7
      %v4643 = vsub.s32 0, %v4642
      %v4644 = vrot.slane %v4639, %v4643
      %v4646 = vadd.f32 %v4574, %v4644
      %v4647 = vadd.f32 %v4575, %v4644
      %v4648 = vadd.f32 %v4576, %v4644
      %v4649 = vadd.f32 %v4577, %v4644
      %v4650 = vadd.f32 %v4578, %v4644
      %v4651 = vadd.f32 %v4579, %v4644
      %v4652 = vadd.f32 %v4580, %v4644
      %v4653 = vadd.f32 %v4581, %v4644
      %v4654 = vadd.f32 %v4582, %v4644
      %v4655 = vadd.f32 %v4583, %v4644
      %v4656 = vadd.f32 %v4584, %v4644
      %v4657 = vadd.f32 %v4585, %v4644
      %v4658 = vadd.f32 %v4586, %v4644
      %v4659 = vadd.f32 %v4587, %v4644
      %v4660 = vadd.f32 %v4588, %v4644
      %v4661 = vadd.f32 %v4589, %v4644
      %v4662 = vadd.f32 %v4590, %v4644
      %v4663 = vadd.f32 %v4591, %v4644
      %v4664 = vadd.f32 %v4592, %v4644
      %v4665 = vadd.f32 %v4593, %v4644
      %v4666 = vadd.f32 %v4594, %v4644
      %v4667 = vadd.f32 %v4595, %v4644
      %v4668 = vadd.f32 %v4596, %v4644
      %v4669 = vadd.f32 %v4597, %v4644
      %v4670 = vadd.f32 %v4598, %v4644
      %v4671 = vadd.f32 %v4599, %v4644
      %v4672 = vadd.f32 %v4600, %v4644
      %v4673 = vadd.f32 %v4601, %v4644
      %v4674 = vadd.f32 %v4602, %v4644
      %v4675 = vadd.f32 %v4603, %v4644
      %v4676 = vadd.f32 %v4604, %v4644
      %v4677 = vadd.f32 %v4605, %v4644
      %v4678 = vadd.f32 %v4606, %v4644
      %v4679 = vadd.f32 %v4607, %v4644
      %v4680 = vadd.f32 %v4608, %v4644
      %v4681 = vadd.f32 %v4609, %v4644
      %v4682 = vadd.f32 %v4610, %v4644
      %v4683 = vadd.f32 %v4611, %v4644
      %v4684 = vadd.f32 %v4612, %v4644
      %v4685 = vadd.f32 %v4613, %v4644
      %v4686 = vadd.f32 %v4614, %v4644
      %v4687 = vadd.f32 %v4615, %v4644
      %v4688 = vadd.f32 %v4616, %v4644
      %v4689 = vadd.f32 %v4617, %v4644
      %v4690 = vadd.f32 %v4618, %v4644
      %v4691 = vadd.f32 %v4619, %v4644
      %v4692 = vadd.f32 %v4620, %v4644
      %v4693 = vadd.f32 %v4621, %v4644
      %v4694 = vadd.f32 %v4622, %v4644
      %v4695 = vadd.f32 %v4623, %v4644
      %v4696 = vadd.f32 %v4624, %v4644
      %v4697 = vadd.f32 %v4625, %v4644
      %v4698 = vadd.f32 %v4626, %v4644
      %v4699 = vadd.f32 %v4627, %v4644
      %v4700 = vadd.f32 %v4628, %v4644
      %v4701 = vadd.f32 %v4629, %v4644
      %v4702 = vadd.f32 %v4630, %v4644
      %v4703 = vadd.f32 %v4631, %v4644
      %v4704 = vadd.f32 %v4632, %v4644
      %v4705 = vadd.f32 %v4633, %v4644
      %v4706 = vadd.f32 %v4634, %v4644
      %v4707 = vadd.f32 %v4635, %v4644
      %v4708 = vadd.f32 %v4636, %v4644
      %v4709 = vadd.f32 %v4637, %v4644
      %vm4710 = vcmp.ge.f32.partialorder %v4646, 0.0
      %vm4711 = vcmp.ge.f32.partialorder %v4647, 0.0
      %vm4712 = vcmp.ge.f32.partialorder %v4648, 0.0
      %vm4713 = vcmp.ge.f32.partialorder %v4649, 0.0
      %vm4714 = vcmp.ge.f32.partialorder %v4650, 0.0
      %vm4715 = vcmp.ge.f32.partialorder %v4651, 0.0
      %vm4716 = vcmp.ge.f32.partialorder %v4652, 0.0
      %vm4717 = vcmp.ge.f32.partialorder %v4653, 0.0
      %vm4718 = vcmp.ge.f32.partialorder %v4654, 0.0
      %vm4719 = vcmp.ge.f32.partialorder %v4655, 0.0
      %vm4720 = vcmp.ge.f32.partialorder %v4656, 0.0
      %vm4721 = vcmp.ge.f32.partialorder %v4657, 0.0
      %vm4722 = vcmp.ge.f32.partialorder %v4658, 0.0
      %vm4723 = vcmp.ge.f32.partialorder %v4659, 0.0
      %vm4724 = vcmp.ge.f32.partialorder %v4660, 0.0
      %vm4725 = vcmp.ge.f32.partialorder %v4661, 0.0
      %vm4726 = vcmp.ge.f32.partialorder %v4662, 0.0
      %vm4727 = vcmp.ge.f32.partialorder %v4663, 0.0
      %vm4728 = vcmp.ge.f32.partialorder %v4664, 0.0
      %vm4729 = vcmp.ge.f32.partialorder %v4665, 0.0
      %vm4730 = vcmp.ge.f32.partialorder %v4666, 0.0
      %vm4731 = vcmp.ge.f32.partialorder %v4667, 0.0
      %vm4732 = vcmp.ge.f32.partialorder %v4668, 0.0
      %vm4733 = vcmp.ge.f32.partialorder %v4669, 0.0
      %vm4734 = vcmp.ge.f32.partialorder %v4670, 0.0
      %vm4735 = vcmp.ge.f32.partialorder %v4671, 0.0
      %vm4736 = vcmp.ge.f32.partialorder %v4672, 0.0
      %vm4737 = vcmp.ge.f32.partialorder %v4673, 0.0
      %vm4738 = vcmp.ge.f32.partialorder %v4674, 0.0
      %vm4739 = vcmp.ge.f32.partialorder %v4675, 0.0
      %vm4740 = vcmp.ge.f32.partialorder %v4676, 0.0
      %vm4741 = vcmp.ge.f32.partialorder %v4677, 0.0
      %vm4742 = vcmp.ge.f32.partialorder %v4678, 0.0
      %vm4743 = vcmp.ge.f32.partialorder %v4679, 0.0
      %vm4744 = vcmp.ge.f32.partialorder %v4680, 0.0
      %vm4745 = vcmp.ge.f32.partialorder %v4681, 0.0
      %vm4746 = vcmp.ge.f32.partialorder %v4682, 0.0
      %vm4747 = vcmp.ge.f32.partialorder %v4683, 0.0
      %vm4748 = vcmp.ge.f32.partialorder %v4684, 0.0
      %vm4749 = vcmp.ge.f32.partialorder %v4685, 0.0
      %vm4750 = vcmp.ge.f32.partialorder %v4686, 0.0
      %vm4751 = vcmp.ge.f32.partialorder %v4687, 0.0
      %vm4752 = vcmp.ge.f32.partialorder %v4688, 0.0
      %vm4753 = vcmp.ge.f32.partialorder %v4689, 0.0
      %vm4754 = vcmp.ge.f32.partialorder %v4690, 0.0
      %vm4755 = vcmp.ge.f32.partialorder %v4691, 0.0
      %vm4756 = vcmp.ge.f32.partialorder %v4692, 0.0
      %vm4757 = vcmp.ge.f32.partialorder %v4693, 0.0
      %vm4758 = vcmp.ge.f32.partialorder %v4694, 0.0
      %vm4759 = vcmp.ge.f32.partialorder %v4695, 0.0
      %vm4760 = vcmp.ge.f32.partialorder %v4696, 0.0
      %vm4761 = vcmp.ge.f32.partialorder %v4697, 0.0
      %vm4762 = vcmp.ge.f32.partialorder %v4698, 0.0
      %vm4763 = vcmp.ge.f32.partialorder %v4699, 0.0
      %vm4764 = vcmp.ge.f32.partialorder %v4700, 0.0
      %vm4765 = vcmp.ge.f32.partialorder %v4701, 0.0
      %vm4766 = vcmp.ge.f32.partialorder %v4702, 0.0
      %vm4767 = vcmp.ge.f32.partialorder %v4703, 0.0
      %vm4768 = vcmp.ge.f32.partialorder %v4704, 0.0
      %vm4769 = vcmp.ge.f32.partialorder %v4705, 0.0
      %vm4770 = vcmp.ge.f32.partialorder %v4706, 0.0
      %vm4771 = vcmp.ge.f32.partialorder %v4707, 0.0
      %vm4772 = vcmp.ge.f32.partialorder %v4708, 0.0
      %vm4773 = vcmp.ge.f32.partialorder %v4709, 0.0
      %v4774 = vmul.f32 %v4646, 0.1
      %v4775 = vmul.f32 %v4647, 0.1
      %v4776 = vmul.f32 %v4648, 0.1
      %v4777 = vmul.f32 %v4649, 0.1
      %v4778 = vmul.f32 %v4650, 0.1
      %v4779 = vmul.f32 %v4651, 0.1
      %v4780 = vmul.f32 %v4652, 0.1
      %v4781 = vmul.f32 %v4653, 0.1
      %v4782 = vmul.f32 %v4654, 0.1
      %v4783 = vmul.f32 %v4655, 0.1
      %v4784 = vmul.f32 %v4656, 0.1
      %v4785 = vmul.f32 %v4657, 0.1
      %v4786 = vmul.f32 %v4658, 0.1
      %v4787 = vmul.f32 %v4659, 0.1
      %v4788 = vmul.f32 %v4660, 0.1
      %v4789 = vmul.f32 %v4661, 0.1
      %v4790 = vmul.f32 %v4662, 0.1
      %v4791 = vmul.f32 %v4663, 0.1
      %v4792 = vmul.f32 %v4664, 0.1
      %v4793 = vmul.f32 %v4665, 0.1
      %v4794 = vmul.f32 %v4666, 0.1
      %v4795 = vmul.f32 %v4667, 0.1
      %v4796 = vmul.f32 %v4668, 0.1
      %v4797 = vmul.f32 %v4669, 0.1
      %v4798 = vmul.f32 %v4670, 0.1
      %v4799 = vmul.f32 %v4671, 0.1
      %v4800 = vmul.f32 %v4672, 0.1
      %v4801 = vmul.f32 %v4673, 0.1
      %v4802 = vmul.f32 %v4674, 0.1
      %v4803 = vmul.f32 %v4675, 0.1
      %v4804 = vmul.f32 %v4676, 0.1
      %v4805 = vmul.f32 %v4677, 0.1
      %v4806 = vmul.f32 %v4678, 0.1
      %v4807 = vmul.f32 %v4679, 0.1
      %v4808 = vmul.f32 %v4680, 0.1
      %v4809 = vmul.f32 %v4681, 0.1
      %v4810 = vmul.f32 %v4682, 0.1
      %v4811 = vmul.f32 %v4683, 0.1
      %v4812 = vmul.f32 %v4684, 0.1
      %v4813 = vmul.f32 %v4685, 0.1
      %v4814 = vmul.f32 %v4686, 0.1
      %v4815 = vmul.f32 %v4687, 0.1
      %v4816 = vmul.f32 %v4688, 0.1
      %v4817 = vmul.f32 %v4689, 0.1
      %v4818 = vmul.f32 %v4690, 0.1
      %v4819 = vmul.f32 %v4691, 0.1
      %v4820 = vmul.f32 %v4692, 0.1
      %v4821 = vmul.f32 %v4693, 0.1
      %v4822 = vmul.f32 %v4694, 0.1
      %v4823 = vmul.f32 %v4695, 0.1
      %v4824 = vmul.f32 %v4696, 0.1
      %v4825 = vmul.f32 %v4697, 0.1
      %v4826 = vmul.f32 %v4698, 0.1
      %v4827 = vmul.f32 %v4699, 0.1
      %v4828 = vmul.f32 %v4700, 0.1
      %v4829 = vmul.f32 %v4701, 0.1
      %v4830 = vmul.f32 %v4702, 0.1
      %v4831 = vmul.f32 %v4703, 0.1
      %v4832 = vmul.f32 %v4704, 0.1
      %v4833 = vmul.f32 %v4705, 0.1
      %v4834 = vmul.f32 %v4706, 0.1
      %v4835 = vmul.f32 %v4707, 0.1
      %v4836 = vmul.f32 %v4708, 0.1
      %v4837 = vmul.f32 %v4709, 0.1
      %v4838 = vsel %vm4710, %v4646, %v4774
      %v4839 = vsel %vm4711, %v4647, %v4775
      %v4840 = vsel %vm4712, %v4648, %v4776
      %v4841 = vsel %vm4713, %v4649, %v4777
      %v4842 = vsel %vm4714, %v4650, %v4778
      %v4843 = vsel %vm4715, %v4651, %v4779
      %v4844 = vsel %vm4716, %v4652, %v4780
      %v4845 = vsel %vm4717, %v4653, %v4781
      %v4846 = vsel %vm4718, %v4654, %v4782
      %v4847 = vsel %vm4719, %v4655, %v4783
      %v4848 = vsel %vm4720, %v4656, %v4784
      %v4849 = vsel %vm4721, %v4657, %v4785
      %v4850 = vsel %vm4722, %v4658, %v4786
      %v4851 = vsel %vm4723, %v4659, %v4787
      %v4852 = vsel %vm4724, %v4660, %v4788
      %v4853 = vsel %vm4725, %v4661, %v4789
      %v4854 = vsel %vm4726, %v4662, %v4790
      %v4855 = vsel %vm4727, %v4663, %v4791
      %v4856 = vsel %vm4728, %v4664, %v4792
      %v4857 = vsel %vm4729, %v4665, %v4793
      %v4858 = vsel %vm4730, %v4666, %v4794
      %v4859 = vsel %vm4731, %v4667, %v4795
      %v4860 = vsel %vm4732, %v4668, %v4796
      %v4861 = vsel %vm4733, %v4669, %v4797
      %v4862 = vsel %vm4734, %v4670, %v4798
      %v4863 = vsel %vm4735, %v4671, %v4799
      %v4864 = vsel %vm4736, %v4672, %v4800
      %v4865 = vsel %vm4737, %v4673, %v4801
      %v4866 = vsel %vm4738, %v4674, %v4802
      %v4867 = vsel %vm4739, %v4675, %v4803
      %v4868 = vsel %vm4740, %v4676, %v4804
      %v4869 = vsel %vm4741, %v4677, %v4805
      %v4870 = vsel %vm4742, %v4678, %v4806
      %v4871 = vsel %vm4743, %v4679, %v4807
      %v4872 = vsel %vm4744, %v4680, %v4808
      %v4873 = vsel %vm4745, %v4681, %v4809
      %v4874 = vsel %vm4746, %v4682, %v4810
      %v4875 = vsel %vm4747, %v4683, %v4811
      %v4876 = vsel %vm4748, %v4684, %v4812
      %v4877 = vsel %vm4749, %v4685, %v4813
      %v4878 = vsel %vm4750, %v4686, %v4814
      %v4879 = vsel %vm4751, %v4687, %v4815
      %v4880 = vsel %vm4752, %v4688, %v4816
      %v4881 = vsel %vm4753, %v4689, %v4817
      %v4882 = vsel %vm4754, %v4690, %v4818
      %v4883 = vsel %vm4755, %v4691, %v4819
      %v4884 = vsel %vm4756, %v4692, %v4820
      %v4885 = vsel %vm4757, %v4693, %v4821
      %v4886 = vsel %vm4758, %v4694, %v4822
      %v4887 = vsel %vm4759, %v4695, %v4823
      %v4888 = vsel %vm4760, %v4696, %v4824
      %v4889 = vsel %vm4761, %v4697, %v4825
      %v4890 = vsel %vm4762, %v4698, %v4826
      %v4891 = vsel %vm4763, %v4699, %v4827
      %v4892 = vsel %vm4764, %v4700, %v4828
      %v4893 = vsel %vm4765, %v4701, %v4829
      %v4894 = vsel %vm4766, %v4702, %v4830
      %v4895 = vsel %vm4767, %v4703, %v4831
      %v4896 = vsel %vm4768, %v4704, %v4832
      %v4897 = vsel %vm4769, %v4705, %v4833
      %v4898 = vsel %vm4770, %v4706, %v4834
      %v4899 = vsel %vm4771, %v4707, %v4835
      %v4900 = vsel %vm4772, %v4708, %v4836
      %v4901 = vsel %vm4773, %v4709, %v4837
      %v4902 = vld [vmem:[%s7] sm:$0xff]
      %v4903 = vld [vmem:[%s7 + $0x8] sm:$0xff]
      %v4904 = vld [vmem:[%s7 + $0x10] sm:$0xff]
      %v4905 = vld [vmem:[%s7 + $0x18] sm:$0xff]
      %v4906 = vld [vmem:[%s7 + $0x20] sm:$0xff]
      %v4907 = vld [vmem:[%s7 + $0x28] sm:$0xff]
      %v4908 = vld [vmem:[%s7 + $0x30] sm:$0xff]
      %v4909 = vld [vmem:[%s7 + $0x38] sm:$0xff]
      %v4910 = vld [vmem:[%s7 + $0x40] sm:$0xff]
      %v4911 = vld [vmem:[%s7 + $0x48] sm:$0xff]
      %v4912 = vld [vmem:[%s7 + $0x50] sm:$0xff]
      %v4913 = vld [vmem:[%s7 + $0x58] sm:$0xff]
      %v4914 = vld [vmem:[%s7 + $0x60] sm:$0xff]
      %v4915 = vld [vmem:[%s7 + $0x68] sm:$0xff]
      %v4916 = vld [vmem:[%s7 + $0x70] sm:$0xff]
      %v4917 = vld [vmem:[%s7 + $0x78] sm:$0xff]
      %v4918 = vld [vmem:[%s7 + $0x80] sm:$0xff]
      %v4919 = vld [vmem:[%s7 + $0x88] sm:$0xff]
      %v4920 = vld [vmem:[%s7 + $0x90] sm:$0xff]
      %v4921 = vld [vmem:[%s7 + $0x98] sm:$0xff]
      %v4922 = vld [vmem:[%s7 + $0xa0] sm:$0xff]
      %v4923 = vld [vmem:[%s7 + $0xa8] sm:$0xff]
      %v4924 = vld [vmem:[%s7 + $0xb0] sm:$0xff]
      %v4925 = vld [vmem:[%s7 + $0xb8] sm:$0xff]
      %v4926 = vld [vmem:[%s7 + $0xc0] sm:$0xff]
      %v4927 = vld [vmem:[%s7 + $0xc8] sm:$0xff]
      %v4928 = vld [vmem:[%s7 + $0xd0] sm:$0xff]
      %v4929 = vld [vmem:[%s7 + $0xd8] sm:$0xff]
      %v4930 = vld [vmem:[%s7 + $0xe0] sm:$0xff]
      %v4931 = vld [vmem:[%s7 + $0xe8] sm:$0xff]
      %v4932 = vld [vmem:[%s7 + $0xf0] sm:$0xff]
      %v4933 = vld [vmem:[%s7 + $0xf8] sm:$0xff]
      %v4934 = vld [vmem:[%s7 + $0x100] sm:$0xff]
      %v4935 = vld [vmem:[%s7 + $0x108] sm:$0xff]
      %v4936 = vld [vmem:[%s7 + $0x110] sm:$0xff]
      %v4937 = vld [vmem:[%s7 + $0x118] sm:$0xff]
      %v4938 = vld [vmem:[%s7 + $0x120] sm:$0xff]
      %v4939 = vld [vmem:[%s7 + $0x128] sm:$0xff]
      %v4940 = vld [vmem:[%s7 + $0x130] sm:$0xff]
      %v4941 = vld [vmem:[%s7 + $0x138] sm:$0xff]
      %v4942 = vld [vmem:[%s7 + $0x140] sm:$0xff]
      %v4943 = vld [vmem:[%s7 + $0x148] sm:$0xff]
      %v4944 = vld [vmem:[%s7 + $0x150] sm:$0xff]
      %v4945 = vld [vmem:[%s7 + $0x158] sm:$0xff]
      %v4946 = vld [vmem:[%s7 + $0x160] sm:$0xff]
      %v4947 = vld [vmem:[%s7 + $0x168] sm:$0xff]
      %v4948 = vld [vmem:[%s7 + $0x170] sm:$0xff]
      %v4949 = vld [vmem:[%s7 + $0x178] sm:$0xff]
      %v4950 = vld [vmem:[%s7 + $0x180] sm:$0xff]
      %v4951 = vld [vmem:[%s7 + $0x188] sm:$0xff]
      %v4952 = vld [vmem:[%s7 + $0x190] sm:$0xff]
      %v4953 = vld [vmem:[%s7 + $0x198] sm:$0xff]
      %v4954 = vld [vmem:[%s7 + $0x1a0] sm:$0xff]
      %v4955 = vld [vmem:[%s7 + $0x1a8] sm:$0xff]
      %v4956 = vld [vmem:[%s7 + $0x1b0] sm:$0xff]
      %v4957 = vld [vmem:[%s7 + $0x1b8] sm:$0xff]
      %v4958 = vld [vmem:[%s7 + $0x1c0] sm:$0xff]
      %v4959 = vld [vmem:[%s7 + $0x1c8] sm:$0xff]
      %v4960 = vld [vmem:[%s7 + $0x1d0] sm:$0xff]
      %v4961 = vld [vmem:[%s7 + $0x1d8] sm:$0xff]
      %v4962 = vld [vmem:[%s7 + $0x1e0] sm:$0xff]
      %v4963 = vld [vmem:[%s7 + $0x1e8] sm:$0xff]
      %v4964 = vld [vmem:[%s7 + $0x1f0] sm:$0xff]
      %v4965 = vld [vmem:[%s7 + $0x1f8] sm:$0xff]
      %v4966 = vadd.f32 %v4902, %v4838
      %v4967 = vadd.f32 %v4903, %v4839
      %v4968 = vadd.f32 %v4904, %v4840
      %v4969 = vadd.f32 %v4905, %v4841
      %v4970 = vadd.f32 %v4906, %v4842
      %v4971 = vadd.f32 %v4907, %v4843
      %v4972 = vadd.f32 %v4908, %v4844
      %v4973 = vadd.f32 %v4909, %v4845
      %v4974 = vadd.f32 %v4910, %v4846
      %v4975 = vadd.f32 %v4911, %v4847
      %v4976 = vadd.f32 %v4912, %v4848
      %v4977 = vadd.f32 %v4913, %v4849
      %v4978 = vadd.f32 %v4914, %v4850
      %v4979 = vadd.f32 %v4915, %v4851
      %v4980 = vadd.f32 %v4916, %v4852
      %v4981 = vadd.f32 %v4917, %v4853
      %v4982 = vadd.f32 %v4918, %v4854
      %v4983 = vadd.f32 %v4919, %v4855
      %v4984 = vadd.f32 %v4920, %v4856
      %v4985 = vadd.f32 %v4921, %v4857
      %v4986 = vadd.f32 %v4922, %v4858
      %v4987 = vadd.f32 %v4923, %v4859
      %v4988 = vadd.f32 %v4924, %v4860
      %v4989 = vadd.f32 %v4925, %v4861
      %v4990 = vadd.f32 %v4926, %v4862
      %v4991 = vadd.f32 %v4927, %v4863
      %v4992 = vadd.f32 %v4928, %v4864
      %v4993 = vadd.f32 %v4929, %v4865
      %v4994 = vadd.f32 %v4930, %v4866
      %v4995 = vadd.f32 %v4931, %v4867
      %v4996 = vadd.f32 %v4932, %v4868
      %v4997 = vadd.f32 %v4933, %v4869
      %v4998 = vadd.f32 %v4934, %v4870
      %v4999 = vadd.f32 %v4935, %v4871
      %v5000 = vadd.f32 %v4936, %v4872
      %v5001 = vadd.f32 %v4937, %v4873
      %v5002 = vadd.f32 %v4938, %v4874
      %v5003 = vadd.f32 %v4939, %v4875
      %v5004 = vadd.f32 %v4940, %v4876
      %v5005 = vadd.f32 %v4941, %v4877
      %v5006 = vadd.f32 %v4942, %v4878
      %v5007 = vadd.f32 %v4943, %v4879
      %v5008 = vadd.f32 %v4944, %v4880
      %v5009 = vadd.f32 %v4945, %v4881
      %v5010 = vadd.f32 %v4946, %v4882
      %v5011 = vadd.f32 %v4947, %v4883
      %v5012 = vadd.f32 %v4948, %v4884
      %v5013 = vadd.f32 %v4949, %v4885
      %v5014 = vadd.f32 %v4950, %v4886
      %v5015 = vadd.f32 %v4951, %v4887
      %v5016 = vadd.f32 %v4952, %v4888
      %v5017 = vadd.f32 %v4953, %v4889
      %v5018 = vadd.f32 %v4954, %v4890
      %v5019 = vadd.f32 %v4955, %v4891
      %v5020 = vadd.f32 %v4956, %v4892
      %v5021 = vadd.f32 %v4957, %v4893
      %v5022 = vadd.f32 %v4958, %v4894
      %v5023 = vadd.f32 %v4959, %v4895
      %v5024 = vadd.f32 %v4960, %v4896
      %v5025 = vadd.f32 %v4961, %v4897
      %v5026 = vadd.f32 %v4962, %v4898
      %v5027 = vadd.f32 %v4963, %v4899
      %v5028 = vadd.f32 %v4964, %v4900
      %v5029 = vadd.f32 %v4965, %v4901
      %5030 = vst [vmem:[%s7] sm:$0xff] %v4966
      %5031 = vst [vmem:[%s7 + $0x8] sm:$0xff] %v4967
      %5032 = vst [vmem:[%s7 + $0x10] sm:$0xff] %v4968
      %5033 = vst [vmem:[%s7 + $0x18] sm:$0xff] %v4969
      %5034 = vst [vmem:[%s7 + $0x20] sm:$0xff] %v4970
      %5035 = vst [vmem:[%s7 + $0x28] sm:$0xff] %v4971
      %5036 = vst [vmem:[%s7 + $0x30] sm:$0xff] %v4972
      %5037 = vst [vmem:[%s7 + $0x38] sm:$0xff] %v4973
      %5038 = vst [vmem:[%s7 + $0x40] sm:$0xff] %v4974
      %5039 = vst [vmem:[%s7 + $0x48] sm:$0xff] %v4975
      %5040 = vst [vmem:[%s7 + $0x50] sm:$0xff] %v4976
      %5041 = vst [vmem:[%s7 + $0x58] sm:$0xff] %v4977
      %5042 = vst [vmem:[%s7 + $0x60] sm:$0xff] %v4978
      %5043 = vst [vmem:[%s7 + $0x68] sm:$0xff] %v4979
      %5044 = vst [vmem:[%s7 + $0x70] sm:$0xff] %v4980
      %5045 = vst [vmem:[%s7 + $0x78] sm:$0xff] %v4981
      %5046 = vst [vmem:[%s7 + $0x80] sm:$0xff] %v4982
      %5047 = vst [vmem:[%s7 + $0x88] sm:$0xff] %v4983
      %5048 = vst [vmem:[%s7 + $0x90] sm:$0xff] %v4984
      %5049 = vst [vmem:[%s7 + $0x98] sm:$0xff] %v4985
      %5050 = vst [vmem:[%s7 + $0xa0] sm:$0xff] %v4986
      %5051 = vst [vmem:[%s7 + $0xa8] sm:$0xff] %v4987
      %5052 = vst [vmem:[%s7 + $0xb0] sm:$0xff] %v4988
      %5053 = vst [vmem:[%s7 + $0xb8] sm:$0xff] %v4989
      %5054 = vst [vmem:[%s7 + $0xc0] sm:$0xff] %v4990
      %5055 = vst [vmem:[%s7 + $0xc8] sm:$0xff] %v4991
      %5056 = vst [vmem:[%s7 + $0xd0] sm:$0xff] %v4992
      %5057 = vst [vmem:[%s7 + $0xd8] sm:$0xff] %v4993
      %5058 = vst [vmem:[%s7 + $0xe0] sm:$0xff] %v4994
      %5059 = vst [vmem:[%s7 + $0xe8] sm:$0xff] %v4995
      %5060 = vst [vmem:[%s7 + $0xf0] sm:$0xff] %v4996
      %5061 = vst [vmem:[%s7 + $0xf8] sm:$0xff] %v4997
      %5062 = vst [vmem:[%s7 + $0x100] sm:$0xff] %v4998
      %5063 = vst [vmem:[%s7 + $0x108] sm:$0xff] %v4999
      %5064 = vst [vmem:[%s7 + $0x110] sm:$0xff] %v5000
      %5065 = vst [vmem:[%s7 + $0x118] sm:$0xff] %v5001
      %5066 = vst [vmem:[%s7 + $0x120] sm:$0xff] %v5002
      %5067 = vst [vmem:[%s7 + $0x128] sm:$0xff] %v5003
      %5068 = vst [vmem:[%s7 + $0x130] sm:$0xff] %v5004
      %5069 = vst [vmem:[%s7 + $0x138] sm:$0xff] %v5005
      %5070 = vst [vmem:[%s7 + $0x140] sm:$0xff] %v5006
      %5071 = vst [vmem:[%s7 + $0x148] sm:$0xff] %v5007
      %5072 = vst [vmem:[%s7 + $0x150] sm:$0xff] %v5008
      %5073 = vst [vmem:[%s7 + $0x158] sm:$0xff] %v5009
      %5074 = vst [vmem:[%s7 + $0x160] sm:$0xff] %v5010
      %5075 = vst [vmem:[%s7 + $0x168] sm:$0xff] %v5011
      %5076 = vst [vmem:[%s7 + $0x170] sm:$0xff] %v5012
      %5077 = vst [vmem:[%s7 + $0x178] sm:$0xff] %v5013
      %5078 = vst [vmem:[%s7 + $0x180] sm:$0xff] %v5014
      %5079 = vst [vmem:[%s7 + $0x188] sm:$0xff] %v5015
      %5080 = vst [vmem:[%s7 + $0x190] sm:$0xff] %v5016
      %5081 = vst [vmem:[%s7 + $0x198] sm:$0xff] %v5017
      %5082 = vst [vmem:[%s7 + $0x1a0] sm:$0xff] %v5018
      %5083 = vst [vmem:[%s7 + $0x1a8] sm:$0xff] %v5019
      %5084 = vst [vmem:[%s7 + $0x1b0] sm:$0xff] %v5020
      %5085 = vst [vmem:[%s7 + $0x1b8] sm:$0xff] %v5021
      %5086 = vst [vmem:[%s7 + $0x1c0] sm:$0xff] %v5022
      %5087 = vst [vmem:[%s7 + $0x1c8] sm:$0xff] %v5023
      %5088 = vst [vmem:[%s7 + $0x1d0] sm:$0xff] %v5024
      %5089 = vst [vmem:[%s7 + $0x1d8] sm:$0xff] %v5025
      %5090 = vst [vmem:[%s7 + $0x1e0] sm:$0xff] %v5026
      %5091 = vst [vmem:[%s7 + $0x1e8] sm:$0xff] %v5027
      %5092 = vst [vmem:[%s7 + $0x1f0] sm:$0xff] %v5028
      %5093 = vst [vmem:[%s7 + $0x1f8] sm:$0xff] %v5029
      // Predicated region
      $region84: #{residual_blocks_forward.1} parent=43 // pred_check
        %p5094 = pneg %p187
      $region85: #{residual_blocks_forward.1} parent=43 // pred_check_branch
        %5096 = sbr.rel (%p5094) target = $region87
      $region86: #{residual_blocks_forward.1} parent=43 // pred_region
        _
      $region87: #{residual_blocks_forward.1} parent=43 // pred_fallthru
        _
      // Predicated region
      $region88: #{residual_blocks_forward.1} parent=43 // pred_check
        %p5097 = pneg %p187
      $region89: #{residual_blocks_forward.1} parent=43 // pred_check_branch
        %5099 = sbr.rel (%p5097) target = $region91
      $region90: #{residual_blocks_forward.1} parent=43 // pred_region
        _
      $region91: #{residual_blocks_forward.1} parent=43 // pred_fallthru
        _
    $region44: #{residual_blocks_forward.1} parent=5 // pred_fallthru
      _
    %p5100 = scmp.le.s32.totalorder 2, %s13
    // Predicated region
    $region92: #{residual_blocks_forward.1} parent=5 // pred_check
      %p5101 = pneg %p5100
    $region93: #{residual_blocks_forward.1} parent=5 // pred_check_branch
      %5103 = sbr.rel (%p5101) target = $region95
    $region94: #{residual_blocks_forward.1} parent=5 // pred_region
      %s5104 = ssub.s32 %s13, 2
    $region95: #{residual_blocks_forward.1} parent=5 // pred_fallthru
      _
  $region6: #{residual_blocks_forward.1} parent=0 // loop_footer
    %s17 = sadd.s32 1, %s13
  $region7: #{residual_blocks_forward.1} parent=0 // loop_footer_branch
    %12 = sbr.rel target = $region3
  $region8: #{residual_blocks_forward.1} parent=0 // loop_exit
    _

</llo_original>
